<compile_context>
chip_gen: v7x
topology: tpu7x:2x2x1
jax: 0.10.0
libtpu: 0.0.40
codegen_flags: <defaults>
</compile_context>

<pallas_src>
import functools

import numpy as np

import jax
import jax.numpy as jnp
from jax.experimental import pallas as pl
from jax.experimental.pallas import tpu as pltpu


def _round_up(a: int, b: int) -> int:
    return -(-a // b) * b


# ---------------------------------------------------------------------------
# Rotary helpers (exactly mirror the PyTorch get_rotary_matrix, including the
# (i - 1) quirk in the exponent).
# ---------------------------------------------------------------------------
def get_rotary_matrix(context_window: int, embedding_dim: int) -> jnp.ndarray:
    R = np.zeros((context_window, embedding_dim, embedding_dim), np.float32)
    for position in range(context_window):
        for i in range(embedding_dim // 2):
            theta = 10000.0 ** (-2.0 * (i - 1) / embedding_dim)
            m_theta = position * theta
            R[position, 2 * i, 2 * i] = np.cos(m_theta)
            R[position, 2 * i, 2 * i + 1] = -np.sin(m_theta)
            R[position, 2 * i + 1, 2 * i] = np.sin(m_theta)
            R[position, 2 * i + 1, 2 * i + 1] = np.cos(m_theta)
    return jnp.asarray(R)


def _rope_tables(m: int, d: int):
    """Elementwise form of q @ R[p]:  q_rot = q*cos + (q @ P_swap) * sin_signed."""
    cos = np.zeros((m, d), np.float32)
    sin = np.zeros((m, d), np.float32)
    for p in range(m):
        for i in range(d // 2):
            theta = 10000.0 ** (-2.0 * (i - 1) / d)
            c, s = np.cos(p * theta), np.sin(p * theta)
            cos[p, 2 * i] = c
            cos[p, 2 * i + 1] = c
            sin[p, 2 * i] = s            # out[2i]   = q[2i]*c + q[2i+1]*s
            sin[p, 2 * i + 1] = -s       # out[2i+1] = q[2i+1]*c - q[2i]*s
    return cos, sin


# ---------------------------------------------------------------------------
# 1. Fully fused LlamaBlock kernel (small-d_model fast path)
# ---------------------------------------------------------------------------
def _llama_block_kernel(x_ref, scale_ref, wqkv_ref, wo_ref, bo_ref, cos_ref,
                        sin_ref, perm_ref, w1_ref, b1_ref, wglu_ref, bglu_ref,
                        beta_ref, o_ref, *, m, d, n_heads):
    """One batch element per grid step; all weights resident in VMEM.

    x1 = rms(x); x2 = x1 + MHA(x1); out = x2 + SwiGLU(W1 @ rms(x2) + b1)
    exactly mirroring LlamaBlock.forward (eval mode).
    """
    f32 = jnp.float32
    mp, dp = x_ref.shape[1], x_ref.shape[2]
    x = x_ref[0]                                           # (mp, dp)
    scale = scale_ref[...]
    inv_numel = f32(1.0 / (m * d))
    row_valid = jax.lax.broadcasted_iota(jnp.int32, (mp, 1), 0) < m

    def rmsnorm(t):
        # per-batch Frobenius norm over (seq, d_model); padded entries are zero
        ss = jnp.sum(t * t)
        return scale * (t * jax.lax.rsqrt(ss * inv_numel))

    x1 = rmsnorm(x)

    # ---- RoPE causal multi-head attention --------------------------------
    cos = cos_ref[...]
    sin = sin_ref[...]
    perm = perm_ref[...]
    qi = jax.lax.broadcasted_iota(jnp.int32, (mp, mp), 0)
    kj = jax.lax.broadcasted_iota(jnp.int32, (mp, mp), 1)
    causal = (kj <= qi) & (kj < m)
    inv_sqrt_d = f32(1.0 / float(np.sqrt(d)))

    def rope(t):  # t @ R[p]  ==  t*cos + swap_even_odd(t) * sin_signed
        return t * cos + jnp.dot(t, perm, preferred_element_type=f32) * sin

    attn = jnp.zeros((mp, dp), f32)
    for h in range(n_heads):                               # static unroll (small H)
        q = rope(jnp.dot(x1, wqkv_ref[0, h], preferred_element_type=f32))
        k = rope(jnp.dot(x1, wqkv_ref[1, h], preferred_element_type=f32))
        v = jnp.dot(x1, wqkv_ref[2, h], preferred_element_type=f32)
        s = jnp.dot(q, k.T, preferred_element_type=f32) * inv_sqrt_d
        s = jnp.where(causal, s, f32(-1e30))
        p = jnp.exp(s - jnp.max(s, axis=-1, keepdims=True))
        p = p / jnp.sum(p, axis=-1, keepdims=True)
        o_h = jnp.dot(p, v, preferred_element_type=f32)
        attn = attn + jnp.dot(o_h, wo_ref[h], preferred_element_type=f32)
    # TODO(synk): attention dropout_p=0.1 / nn.Dropout(0.1) are eval-mode no-ops.
    attn = jnp.where(row_valid, attn + bo_ref[...], f32(0.0))

    x2 = x1 + attn
    x3 = rmsnorm(x2)

    # ---- feedforward: entry Linear + SwiGLU (N-stacked [Wg | Wl]) ---------
    y = jnp.dot(x3, w1_ref[...], preferred_element_type=f32) + b1_ref[...]
    y = jnp.where(row_valid, y, f32(0.0))
    gh = jnp.dot(y, wglu_ref[...], preferred_element_type=f32) + bglu_ref[...]
    g = gh[:, :dp]
    h_lin = gh[:, dp:]
    beta = beta_ref[0]
    ff = (g * jax.nn.sigmoid(beta * g)) * h_lin
    o_ref[0] = x2 + jnp.where(row_valid, ff, f32(0.0))


def prepare_llama_block_params(raw, seq_len):
    """One-time (hoisted) padding / transposition / stacking of all LlamaBlock
    weights into the layouts the fused kernel consumes."""
    H, d, _ = raw["wq"].shape
    m = seq_len
    assert d % 2 == 0, "RoPE requires an even d_model"
    dp = _round_up(d, 128)
    mp = _round_up(m, 8)

    def pad2(a, rows, cols):
        out = jnp.zeros((rows, cols), jnp.float32)
        return out.at[: a.shape[0], : a.shape[1]].set(a.astype(jnp.float32))

    wqkv = jnp.zeros((3, H, dp, dp), jnp.float32)
    for s, name in enumerate(("wq", "wk", "wv")):
        for h in range(H):
            wqkv = wqkv.at[s, h, :d, :d].set(raw[name][h].T)     # (in, out) layout
    wo = jnp.zeros((H, dp, dp), jnp.float32)
    for h in range(H):
        wo = wo.at[h, :d, :d].set(raw["wo"][:, h * d:(h + 1) * d].T)
    bo = jnp.zeros((1, dp), jnp.float32).at[0, :d].set(raw["bo"])

    scale = pad2(raw["rms_scale"][:m], mp, dp)

    cos_np, sin_np = _rope_tables(m, d)
    cos = pad2(jnp.asarray(cos_np), mp, dp)
    sin = pad2(jnp.asarray(sin_np), mp, dp)

    perm_np = np.zeros((dp, dp), np.float32)
    for i in range(d // 2):
        perm_np[2 * i + 1, 2 * i] = 1.0     # (q @ perm)[:, 2i]   = q[:, 2i+1]
        perm_np[2 * i, 2 * i + 1] = 1.0     # (q @ perm)[:, 2i+1] = q[:, 2i]
    perm = jnp.asarray(perm_np)

    w1 = pad2(raw["w1"].T, dp, dp)
    b1 = jnp.zeros((1, dp), jnp.float32).at[0, :d].set(raw["b1"])
    wglu = (jnp.zeros((dp, 2 * dp), jnp.float32)
            .at[:d, :d].set(raw["wg"].T)
            .at[:d, dp:dp + d].set(raw["wl"].T))
    bglu = (jnp.zeros((1, 2 * dp), jnp.float32)
            .at[0, :d].set(raw["bg"])
            .at[0, dp:dp + d].set(raw["bl"]))

    return dict(m=m, d=d, mp=mp, dp=dp, n_heads=H,
                scale=scale, wqkv=wqkv, wo=wo, bo=bo, cos=cos, sin=sin,
                perm=perm, w1=w1, b1=b1, wglu=wglu, bglu=bglu,
                beta=raw["beta"].astype(jnp.float32).reshape((1,)))


def llama_block_forward(x, prep):
    """x: (batch, seq, d_model) float32.  prep: prepare_llama_block_params(...)."""
    B, m, d = x.shape
    assert (m, d) == (prep["m"], prep["d"]), "prep was built for a different shape"
    mp, dp, H = prep["mp"], prep["dp"], prep["n_heads"]

    if (mp, dp) == (m, d):
        xp = x.astype(jnp.float32)
    else:
        xp = jnp.pad(x.astype(jnp.float32), ((0, 0), (0, mp - m), (0, dp - d)))

    # This fused path keeps every weight resident in VMEM -> small-d_model only.
    resident = sum(int(prep[k].size) * 4 for k in
                   ("wqkv", "wo", "perm", "w1", "wglu")) + 4 * mp * dp * 4
    if resident > 24 * 1024 * 1024:
        raise ValueError("d_model too large for the fused LlamaBlock kernel; "
                         "use the tiled kernels instead")

    kernel = functools.partial(_llama_block_kernel, m=m, d=d, n_heads=H)
    out = pl.pallas_call(
        kernel,
        out_shape=jax.ShapeDtypeStruct((B, mp, dp), jnp.float32),
        grid=(B,),
        in_specs=[
            pl.BlockSpec((1, mp, dp), lambda b: (b, 0, 0)),          # x (per batch)
            pl.BlockSpec((mp, dp), lambda b: (0, 0)),                # rms scale
            pl.BlockSpec((3, H, dp, dp), lambda b: (0, 0, 0, 0)),    # Wq/Wk/Wv stack
            pl.BlockSpec((H, dp, dp), lambda b: (0, 0, 0)),          # Wo head blocks
            pl.BlockSpec((1, dp), lambda b: (0, 0)),                 # bo
            pl.BlockSpec((mp, dp), lambda b: (0, 0)),                # rope cos
            pl.BlockSpec((mp, dp), lambda b: (0, 0)),                # rope sin (signed)
            pl.BlockSpec((dp, dp), lambda b: (0, 0)),                # even/odd swap perm
            pl.BlockSpec((dp, dp), lambda b: (0, 0)),                # ff entry W1
            pl.BlockSpec((1, dp), lambda b: (0, 0)),                 # b1
            pl.BlockSpec((dp, 2 * dp), lambda b: (0, 0)),            # [Wg | Wl]
            pl.BlockSpec((1, 2 * dp), lambda b: (0, 0)),             # [bg | bl]
            pl.BlockSpec(memory_space=pltpu.MemorySpace.SMEM),       # beta
        ],
        out_specs=pl.BlockSpec((1, mp, dp), lambda b: (b, 0, 0)),
        compiler_params=pltpu.CompilerParams(
            dimension_semantics=("parallel",)),    # batch -> megacore on v7x
    )(xp, prep["scale"], prep["wqkv"], prep["wo"], prep["bo"], prep["cos"],
      prep["sin"], prep["perm"], prep["w1"], prep["b1"], prep["wglu"],
      prep["bglu"], prep["beta"])
    return out[:, :m, :d]


# ---------------------------------------------------------------------------
# 2. Tiled SwiGLU kernels (large-d_model production path)
# ---------------------------------------------------------------------------
def _swiglu_epilogue(acc, b, beta, tn, out_dtype):
    g = acc[:, :tn] + b[:, :tn]
    h = acc[:, tn:] + b[:, tn:]
    return ((g * jax.nn.sigmoid(beta * g)) * h).astype(out_dtype)


def _swiglu_kernel_single_k(beta_ref, x_ref, w_ref, b_ref, o_ref):
    # grid (M/tm, N/tn); full-K weight slab resident -> no accumulator scratch,
    # no pl.when init/finalize, one long MXU issue stream per grid step.
    acc = jnp.dot(x_ref[...], w_ref[...], preferred_element_type=jnp.float32)
    tn = o_ref.shape[-1]
    o_ref[...] = _swiglu_epilogue(acc, b_ref[...], beta_ref[0], tn, o_ref.dtype)


def _swiglu_kernel_multi_k(beta_ref, x_ref, w_ref, b_ref, o_ref, acc_ref):
    # grid (M/tm, N/tn, K/tk); K is the reduction ("arbitrary") axis.
    k = pl.program_id(2)

    @pl.when(k == 0)
    def _():
        acc_ref[...] = jnp.zeros_like(acc_ref)

    acc_ref[...] += jnp.dot(x_ref[...], w_ref[...],
                            preferred_element_type=jnp.float32)

    @pl.when(k == pl.num_programs(2) - 1)
    def _():
        tn = o_ref.shape[-1]
        o_ref[...] = _swiglu_epilogue(acc_ref[...], b_ref[...], beta_ref[0], tn,
                                      o_ref.dtype)


def select_swiglu_tiles(M: int, D: int):
    """Generation-aware tile selection.

    v5e/v6e (128 MiB VMEM) -> up to 1024x1024 tiles (v6e needs ~650 flop/byte to be
    MXU-bound; 1024 tiles give ~680).  v7x / unknown (64 MiB) -> 512x512 tiles
    (~340 flop/byte vs ~310 needed) so the footprint stays inside physical VMEM.
    tk covers the whole K dimension (single K step, no accumulator) whenever the
    (K, 2*tn) weight slab fits the budget.
    """
    try:
        vmem_cap = int(pltpu.get_tpu_info().vmem_capacity_bytes)
    except Exception:                      # conservative (v7x-safe) fallback
        vmem_cap = 64 * 1024 * 1024
    big_vmem = vmem_cap >= 100 * 1024 * 1024
    tm_cap = 1024 if big_vmem else 512
    tn_cap = 1024 if big_vmem else 512
    budget = int(vmem_cap * 0.45)

    Dp = _round_up(D, 128)
    tm = min(tm_cap, _round_up(M, 16))     # floor at 16 rows (bf16 sublane packing)
    tn = 128
    for cand in (1024, 512, 256, 128):
        if cand <= tn_cap and cand <= Dp and Dp % cand == 0:
            tn = cand
            break

    def footprint(tk, with_acc):
        f = 2 * tm * tk * 2                # x block (bf16, double buffered)
        f += 2 * tk * (2 * tn) * 2         # N-stacked weight block
        f += 2 * tm * tn * 2               # bf16 output block
        f += 2 * 2 * (2 * tn) * 4          # bias block (tiny)
        if with_acc:
            f += tm * (2 * tn) * 4         # f32 accumulator scratch
        return f

    if footprint(Dp, with_acc=False) <= budget:
        tk = Dp                            # single K step
    else:
        tk = 128
        for cand in (2048, 1024, 512, 256, 128):
            if cand <= Dp and Dp % cand == 0 and footprint(cand, True) <= budget:
                tk = cand
                break
    vmem_limit = int(min(0.9 * vmem_cap, budget + 16 * 1024 * 1024))
    return tm, tn, tk, vmem_limit


def prepare_swiglu_params(wg, bg, wl, bl, *, tn):
    """Hoisted (one-time) weight preprocessing for the tiled SwiGLU kernel.

    wg/wl: (D, D) in (in, out) layout (already transposed from torch's (out, in)).
    Returns bf16 weights N-stacked at tn granularity ([gate_j | linear_j] per
    N-tile j) and matching f32 biases.
    """
    D = wg.shape[0]
    Dp = _round_up(D, 128)
    assert Dp % tn == 0
    nN = Dp // tn

    def pad_w(w):
        w = w.astype(jnp.bfloat16)
        if w.shape != (Dp, Dp):
            w = jnp.pad(w, ((0, Dp - w.shape[0]), (0, Dp - w.shape[1])))
        return w

    def pad_b(b):
        b = b.reshape(-1).astype(jnp.float32)
        if b.shape[0] != Dp:
            b = jnp.pad(b, (0, Dp - b.shape[0]))
        return b

    wg_p, wl_p = pad_w(wg), pad_w(wl)
    wcat = jnp.stack([wg_p.reshape(Dp, nN, tn), wl_p.reshape(Dp, nN, tn)],
                     axis=2).reshape(Dp, 2 * Dp)
    bg_p, bl_p = pad_b(bg), pad_b(bl)
    bcat = jnp.stack([bg_p.reshape(nN, tn), bl_p.reshape(nN, tn)],
                     axis=1).reshape(1, 2 * Dp)
    return wcat, bcat


def swiglu(x, wcat, bcat, beta, *, tm, tn, tk, out_dtype=jnp.bfloat16,
           vmem_limit_bytes=None):
    """Tiled SwiGLU: out = swish_beta(x @ Wg + bg) * (x @ Wl + bl)."""
    M, D = x.shape
    Dp = wcat.shape[0]
    assert wcat.shape == (Dp, 2 * Dp) and bcat.shape == (1, 2 * Dp)
    assert Dp % tn == 0 and Dp % tk == 0 and tm % 16 == 0
    Mp = _round_up(M, tm)
    nM, nN, nK = Mp // tm, Dp // tn, Dp // tk

    xb = x.astype(jnp.bfloat16)
    if (Mp, Dp) != (M, D):                 # pad only when actually needed
        xb = jnp.pad(xb, ((0, Mp - M), (0, Dp - D)))

    beta = jnp.asarray(beta, jnp.float32).reshape((1,))

    cost = pl.CostEstimate(
        flops=2 * Mp * Dp * (2 * Dp),
        transcendentals=Mp * Dp,
        bytes_accessed=(Mp * Dp * 2 * nN              # x re-streamed per N block
                        + Dp * (2 * Dp) * 2 * nM      # weights re-streamed per M block
                        + (2 * Dp) * 4 * nM
                        + Mp * Dp * jnp.dtype(out_dtype).itemsize),
    )
    out_shape = jax.ShapeDtypeStruct((Mp, Dp), out_dtype)

    if nK == 1:
        out = pl.pallas_call(
            _swiglu_kernel_single_k,
            out_shape=out_shape,
            grid=(nM, nN),
            in_specs=[
                pl.BlockSpec(memory_space=pltpu.MemorySpace.SMEM),       # beta
                pl.BlockSpec((tm, Dp), lambda i, j: (i, 0)),             # x
                pl.BlockSpec((Dp, 2 * tn), lambda i, j: (0, j)),         # [Wg|Wl]
                pl.BlockSpec((1, 2 * tn), lambda i, j: (0, j)),          # [bg|bl]
            ],
            out_specs=pl.BlockSpec((tm, tn), lambda i, j: (i, j)),
            compiler_params=pltpu.CompilerParams(
                dimension_semantics=("parallel", "parallel"),
                vmem_limit_bytes=vmem_limit_bytes),
            cost_estimate=cost,
        )(beta, xb, wcat, bcat)
    else:
        out = pl.pallas_call(
            _swiglu_kernel_multi_k,
            out_shape=out_shape,
            grid=(nM, nN, nK),
            in_specs=[
                pl.BlockSpec(memory_space=pltpu.MemorySpace.SMEM),
                pl.BlockSpec((tm, tk), lambda i, j, k: (i, k)),
                # If traces show exposed DMA at K-loop restarts on v6e, add
                # pipeline_mode=pl.Buffered(3) to this weight BlockSpec.
                pl.BlockSpec((tk, 2 * tn), lambda i, j, k: (k, j)),
                pl.BlockSpec((1, 2 * tn), lambda i, j, k: (0, j)),
            ],
            out_specs=pl.BlockSpec((tm, tn), lambda i, j, k: (i, j)),
            scratch_shapes=[pltpu.VMEM((tm, 2 * tn), jnp.float32)],
            compiler_params=pltpu.CompilerParams(
                dimension_semantics=("parallel", "parallel", "arbitrary"),
                vmem_limit_bytes=vmem_limit_bytes),
            cost_estimate=cost,
        )(beta, xb, wcat, bcat)
    return out[:M, :D]


# ---------------------------------------------------------------------------
# Pure-JAX references and torch-style init
# ---------------------------------------------------------------------------
def init_llama_params(key, config):
    d, H, cw = config["d_model"], config["n_heads"], config["context_window"]
    ks = iter(jax.random.split(key, 3 * H + 12))

    def lin_w(k, out_dim, in_dim):
        bound = 1.0 / float(np.sqrt(in_dim))
        return jax.random.uniform(k, (out_dim, in_dim), jnp.float32, -bound, bound)

    def lin_b(k, out_dim, in_dim):
        bound = 1.0 / float(np.sqrt(in_dim))
        return jax.random.uniform(k, (out_dim,), jnp.float32, -bound, bound)

    raw = {"rms_scale": jnp.ones((cw, d), jnp.float32)}
    raw["wq"] = jnp.stack([lin_w(next(ks), d, d) for _ in range(H)])
    raw["wk"] = jnp.stack([lin_w(next(ks), d, d) for _ in range(H)])
    raw["wv"] = jnp.stack([lin_w(next(ks), d, d) for _ in range(H)])
    raw["wo"] = lin_w(next(ks), d, H * d)
    raw["bo"] = lin_b(next(ks), d, H * d)
    raw["w1"] = lin_w(next(ks), d, d)
    raw["b1"] = lin_b(next(ks), d, d)
    raw["wg"] = lin_w(next(ks), d, d)
    raw["bg"] = lin_b(next(ks), d, d)
    raw["wl"] = lin_w(next(ks), d, d)
    raw["bl"] = lin_b(next(ks), d, d)
    raw["beta"] = jnp.ones((1,), jnp.float32)
    raw["R"] = get_rotary_matrix(cw, d)
    return raw


def llama_block_ref(x, raw):
    """Pure-JAX mirror of the PyTorch LlamaBlock.forward (eval mode)."""
    hi = jax.lax.Precision.HIGHEST
    _, m, d = x.shape
    H = raw["wq"].shape[0]
    scale = raw["rms_scale"][:m]

    def rms(t):
        ff_rms = jnp.sqrt(jnp.sum(t * t, axis=(1, 2))) * float(m * d) ** -0.5
        return scale[None] * (t / ff_rms[:, None, None])

    x1 = rms(x)
    R = raw["R"][:m]
    mask = jnp.tril(jnp.ones((m, m), bool))
    heads = []
    for h in range(H):
        q = jnp.einsum("bmd,ed->bme", x1, raw["wq"][h], precision=hi)
        k = jnp.einsum("bmd,ed->bme", x1, raw["wk"][h], precision=hi)
        v = jnp.einsum("bmd,ed->bme", x1, raw["wv"][h], precision=hi)
        qr = jnp.einsum("bmd,mde->bme", q, R, precision=hi)
        kr = jnp.einsum("bmd,mde->bme", k, R, precision=hi)
        s = jnp.einsum("bme,bne->bmn", qr, kr, precision=hi) / np.sqrt(d)
        s = jnp.where(mask[None], s, -jnp.inf)
        p = jax.nn.softmax(s, axis=-1)
        heads.append(jnp.einsum("bmn,bne->bme", p, v, precision=hi))
    cat = jnp.concatenate(heads, axis=-1)
    attn = jnp.einsum("bmk,dk->bmd", cat, raw["wo"], precision=hi) + raw["bo"]
    x2 = x1 + attn
    x3 = rms(x2)
    y = jnp.einsum("bmd,ed->bme", x3, raw["w1"], precision=hi) + raw["b1"]
    g = jnp.einsum("bmd,ed->bme", y, raw["wg"], precision=hi) + raw["bg"]
    hl = jnp.einsum("bmd,ed->bme", y, raw["wl"], precision=hi) + raw["bl"]
    return x2 + (g * jax.nn.sigmoid(raw["beta"][0] * g)) * hl


def swiglu_ref(x, wg, bg, wl, bl, beta):
    """Reference over the same bf16-rounded inputs the tiled kernel feeds the MXU."""
    hi = jax.lax.Precision.HIGHEST
    xf = x.astype(jnp.bfloat16).astype(jnp.float32)
    wgf = wg.astype(jnp.bfloat16).astype(jnp.float32)
    wlf = wl.astype(jnp.bfloat16).astype(jnp.float32)
    g = jnp.dot(xf, wgf, precision=hi) + bg
    h = jnp.dot(xf, wlf, precision=hi) + bl
    return (g * jax.nn.sigmoid(beta[0] * g)) * h


# ---------------------------------------------------------------------------
if __name__ == "__main__":
    config = {"d_model": 32, "context_window": 16, "n_heads": 4}
    batch, seq = 2, 8

    root = jax.random.PRNGKey(0)
    k_params, k_x, k_wg, k_wl, k_bg, k_bl, k_x2 = jax.random.split(root, 7)

    # ---- full LlamaBlock (fused kernel, shipped small config) -------------
    raw = init_llama_params(k_params, config)
    x = jax.random.normal(k_x, (batch, seq, config["d_model"]), jnp.float32)

    prep = prepare_llama_block_params(raw, seq)        # hoisted, done once
    out = llama_block_forward(x, prep)
    out = jax.block_until_ready(out)
    ref = llama_block_ref(x, raw)
    assert out.shape == x.shape
    err = float(jnp.max(jnp.abs(out - ref)) / (jnp.max(jnp.abs(ref)) + 1e-12))
    assert err < 2e-2, f"LlamaBlock mismatch: rel err {err}"

    # ---- tiled SwiGLU path (large-d_model production kernel) --------------
    M, D = 640, 512
    bound = 1.0 / float(np.sqrt(D))
    wg_t = jax.random.uniform(k_wg, (D, D), jnp.float32, -bound, bound)  # (in, out)
    wl_t = jax.random.uniform(k_wl, (D, D), jnp.float32, -bound, bound)
    bg = jax.random.uniform(k_bg, (D,), jnp.float32, -bound, bound)
    bl = jax.random.uniform(k_bl, (D,), jnp.float32, -bound, bound)
    beta = jnp.ones((1,), jnp.float32)
    x2d = jax.random.normal(k_x2, (M, D), jnp.float32)
    ref2 = swiglu_ref(x2d, wg_t, bg, wl_t, bl, beta)

    # (a) auto tiles: single-K, N-stacked weights, bf16 out
    tm, tn, tk, vlim = select_swiglu_tiles(M, D)
    wcat, bcat = prepare_swiglu_params(wg_t, bg, wl_t, bl, tn=tn)        # hoisted
    y = swiglu(x2d, wcat, bcat, beta, tm=tm, tn=tn, tk=tk, vmem_limit_bytes=vlim)
    y = jax.block_until_ready(y)
    err2 = float(jnp.max(jnp.abs(y.astype(jnp.float32) - ref2)) /
                 (jnp.max(jnp.abs(ref2)) + 1e-12))
    assert err2 < 2e-2, f"SwiGLU (single-K) mismatch: rel err {err2}"

    # (b) forced small tiles: exercises the multi-K accumulator path
    wcat_s, bcat_s = prepare_swiglu_params(wg_t, bg, wl_t, bl, tn=128)
    y2 = swiglu(x2d, wcat_s, bcat_s, beta, tm=128, tn=128, tk=128,
                vmem_limit_bytes=vlim)
    y2 = jax.block_until_ready(y2)
    err3 = float(jnp.max(jnp.abs(y2.astype(jnp.float32) - ref2)) /
                 (jnp.max(jnp.abs(ref2)) + 1e-12))
    assert err3 < 2e-2, f"SwiGLU (multi-K) mismatch: rel err {err3}"

    print("KERNEL_OK")
</pallas_src>

<mosaic_0001>
module attributes {stable_mosaic.version = 11 : i64} {
  func.func @_llama_block_kernel(%arg0: i32, %arg1: memref<1x8x128xf32, #tpu.memory_space<vmem>>, %arg2: memref<8x128xf32, #tpu.memory_space<vmem>>, %arg3: memref<3x4x128x128xf32, #tpu.memory_space<vmem>>, %arg4: memref<4x128x128xf32, #tpu.memory_space<vmem>>, %arg5: memref<1x128xf32, #tpu.memory_space<vmem>>, %arg6: memref<8x128xf32, #tpu.memory_space<vmem>>, %arg7: memref<8x128xf32, #tpu.memory_space<vmem>>, %arg8: memref<128x128xf32, #tpu.memory_space<vmem>>, %arg9: memref<128x128xf32, #tpu.memory_space<vmem>>, %arg10: memref<1x128xf32, #tpu.memory_space<vmem>>, %arg11: memref<128x256xf32, #tpu.memory_space<vmem>>, %arg12: memref<1x256xf32, #tpu.memory_space<vmem>>, %arg13: memref<1xf32, #tpu.memory_space<smem>>, %arg14: memref<1x8x128xf32, #tpu.memory_space<vmem>>) attributes {dimension_semantics = [#tpu.dimension_semantics<parallel>], iteration_bounds = array<i64: 2>, scalar_prefetch = 0 : i64, scratch_operands = 0 : i64, tpu.core_type = #tpu.core_type<tc>, window_params = [{transform_indices = @transform_0, window_bounds = array<i64: 1, 8, 128>}, {pipeline_mode = #tpu.pipeline_mode<synchronous>, transform_indices = @transform_1, window_bounds = array<i64: 8, 128>}, {pipeline_mode = #tpu.pipeline_mode<synchronous>, transform_indices = @transform_2, window_bounds = array<i64: 3, 4, 128, 128>}, {pipeline_mode = #tpu.pipeline_mode<synchronous>, transform_indices = @transform_3, window_bounds = array<i64: 4, 128, 128>}, {pipeline_mode = #tpu.pipeline_mode<synchronous>, transform_indices = @transform_4, window_bounds = array<i64: 1, 128>}, {pipeline_mode = #tpu.pipeline_mode<synchronous>, transform_indices = @transform_5, window_bounds = array<i64: 8, 128>}, {pipeline_mode = #tpu.pipeline_mode<synchronous>, transform_indices = @transform_6, window_bounds = array<i64: 8, 128>}, {pipeline_mode = #tpu.pipeline_mode<synchronous>, transform_indices = @transform_7, window_bounds = array<i64: 128, 128>}, {pipeline_mode = #tpu.pipeline_mode<synchronous>, transform_indices = @transform_8, window_bounds = array<i64: 128, 128>}, {pipeline_mode = #tpu.pipeline_mode<synchronous>, transform_indices = @transform_9, window_bounds = array<i64: 1, 128>}, {pipeline_mode = #tpu.pipeline_mode<synchronous>, transform_indices = @transform_10, window_bounds = array<i64: 128, 256>}, {pipeline_mode = #tpu.pipeline_mode<synchronous>, transform_indices = @transform_11, window_bounds = array<i64: 1, 256>}, {transform_indices = @transform_12, window_bounds = array<i64: 1>}, {transform_indices = @transform_13, window_bounds = array<i64: 1, 8, 128>}]} {
    %c0 = arith.constant 0 : index
    %c0_0 = arith.constant 0 : index
    %c0_1 = arith.constant 0 : index
    %0 = vector.load %arg1[%c0, %c0_0, %c0_1] : memref<1x8x128xf32, #tpu.memory_space<vmem>>, vector<1x8x128xf32>
    %1 = vector.shape_cast %0 : vector<1x8x128xf32> to vector<8x128xf32>
    %c0_2 = arith.constant 0 : index
    %c0_3 = arith.constant 0 : index
    %2 = vector.load %arg2[%c0_2, %c0_3] : memref<8x128xf32, #tpu.memory_space<vmem>>, vector<8x128xf32>
    %3 = tpu.iota {dimensions = array<i32: 0>} : vector<8x1xi32>
    %c8_i32 = arith.constant 8 : i32
    %4 = vector.broadcast %c8_i32 : i32 to vector<8x1xi32>
    %5 = arith.cmpi slt, %3, %4 : vector<8x1xi32>
    %6 = arith.mulf %1, %1 : vector<8x128xf32>
    %7 = vector.shape_cast %6 : vector<8x128xf32> to vector<1x8x128xf32>
    %cst = arith.constant dense<0.000000e+00> : vector<1xf32>
    %8 = vector.multi_reduction <add>, %7, %cst [1, 2] : vector<1x8x128xf32> to vector<1xf32>
    %9 = vector.shape_cast %8 : vector<1xf32> to vector<1x1x1xf32>
    %10 = vector.extract %9[0, 0, 0] : f32 from vector<1x1x1xf32>
    %cst_4 = arith.constant 3.906250e-03 : f32
    %11 = arith.mulf %10, %cst_4 : f32
    %12 = math.rsqrt %11 : f32
    %13 = vector.broadcast %12 : f32 to vector<8x128xf32>
    %14 = arith.mulf %1, %13 : vector<8x128xf32>
    %15 = arith.mulf %2, %14 : vector<8x128xf32>
    %c0_5 = arith.constant 0 : index
    %c0_6 = arith.constant 0 : index
    %16 = vector.load %arg6[%c0_5, %c0_6] : memref<8x128xf32, #tpu.memory_space<vmem>>, vector<8x128xf32>
    %c0_7 = arith.constant 0 : index
    %c0_8 = arith.constant 0 : index
    %17 = vector.load %arg7[%c0_7, %c0_8] : memref<8x128xf32, #tpu.memory_space<vmem>>, vector<8x128xf32>
    %c0_9 = arith.constant 0 : index
    %c0_10 = arith.constant 0 : index
    %18 = vector.load %arg8[%c0_9, %c0_10] : memref<128x128xf32, #tpu.memory_space<vmem>>, vector<128x128xf32>
    %19 = tpu.iota {dimensions = array<i32: 0>} : vector<8x8xi32>
    %20 = tpu.iota {dimensions = array<i32: 1>} : vector<8x8xi32>
    %21 = arith.cmpi sle, %20, %19 : vector<8x8xi32>
    %c8_i32_11 = arith.constant 8 : i32
    %22 = vector.broadcast %c8_i32_11 : i32 to vector<8x8xi32>
    %23 = arith.cmpi slt, %20, %22 : vector<8x8xi32>
    %24 = arith.andi %21, %23 : vector<8x8xi1>
    %cst_12 = arith.constant 0.000000e+00 : f32
    %25 = vector.broadcast %cst_12 : f32 to vector<8x128xf32>
    %c0_13 = arith.constant 0 : index
    %c0_14 = arith.constant 0 : index
    %c0_15 = arith.constant 0 : index
    %c0_16 = arith.constant 0 : index
    %26 = vector.load %arg3[%c0_13, %c0_14, %c0_15, %c0_16] : memref<3x4x128x128xf32, #tpu.memory_space<vmem>>, vector<1x1x128x128xf32>
    %27 = vector.shape_cast %26 : vector<1x1x128x128xf32> to vector<128x128xf32>
    %cst_17 = arith.constant dense<0.000000e+00> : vector<8x128xf32>
    %28 = tpu.matmul %15, %27, %cst_17 {dimension_numbers = #tpu.dot_dimension_numbers<[1], [0], [0], [1], [0, 0, 1, 1], [], []>} : vector<8x128xf32>, vector<128x128xf32>, vector<8x128xf32> -> vector<8x128xf32>
    %29 = arith.mulf %28, %16 : vector<8x128xf32>
    %cst_18 = arith.constant dense<0.000000e+00> : vector<8x128xf32>
    %30 = tpu.matmul %28, %18, %cst_18 {dimension_numbers = #tpu.dot_dimension_numbers<[1], [0], [0], [1], [0, 0, 1, 1], [], []>} : vector<8x128xf32>, vector<128x128xf32>, vector<8x128xf32> -> vector<8x128xf32>
    %31 = arith.mulf %30, %17 : vector<8x128xf32>
    %32 = arith.addf %29, %31 : vector<8x128xf32>
    %c1 = arith.constant 1 : index
    %c0_19 = arith.constant 0 : index
    %c0_20 = arith.constant 0 : index
    %c0_21 = arith.constant 0 : index
    %33 = vector.load %arg3[%c1, %c0_19, %c0_20, %c0_21] : memref<3x4x128x128xf32, #tpu.memory_space<vmem>>, vector<1x1x128x128xf32>
    %34 = vector.shape_cast %33 : vector<1x1x128x128xf32> to vector<128x128xf32>
    %cst_22 = arith.constant dense<0.000000e+00> : vector<8x128xf32>
    %35 = tpu.matmul %15, %34, %cst_22 {dimension_numbers = #tpu.dot_dimension_numbers<[1], [0], [0], [1], [0, 0, 1, 1], [], []>} : vector<8x128xf32>, vector<128x128xf32>, vector<8x128xf32> -> vector<8x128xf32>
    %36 = arith.mulf %35, %16 : vector<8x128xf32>
    %cst_23 = arith.constant dense<0.000000e+00> : vector<8x128xf32>
    %37 = tpu.matmul %35, %18, %cst_23 {dimension_numbers = #tpu.dot_dimension_numbers<[1], [0], [0], [1], [0, 0, 1, 1], [], []>} : vector<8x128xf32>, vector<128x128xf32>, vector<8x128xf32> -> vector<8x128xf32>
    %38 = arith.mulf %37, %17 : vector<8x128xf32>
    %39 = arith.addf %36, %38 : vector<8x128xf32>
    %c2 = arith.constant 2 : index
    %c0_24 = arith.constant 0 : index
    %c0_25 = arith.constant 0 : index
    %c0_26 = arith.constant 0 : index
    %40 = vector.load %arg3[%c2, %c0_24, %c0_25, %c0_26] : memref<3x4x128x128xf32, #tpu.memory_space<vmem>>, vector<1x1x128x128xf32>
    %41 = vector.shape_cast %40 : vector<1x1x128x128xf32> to vector<128x128xf32>
    %cst_27 = arith.constant dense<0.000000e+00> : vector<8x128xf32>
    %42 = tpu.matmul %15, %41, %cst_27 {dimension_numbers = #tpu.dot_dimension_numbers<[1], [0], [0], [1], [0, 0, 1, 1], [], []>} : vector<8x128xf32>, vector<128x128xf32>, vector<8x128xf32> -> vector<8x128xf32>
    %43 = tpu.transpose %39, [1, 0] : vector<8x128xf32> -> vector<128x8xf32>
    %cst_28 = arith.constant dense<0.000000e+00> : vector<8x8xf32>
    %44 = tpu.matmul %32, %43, %cst_28 {dimension_numbers = #tpu.dot_dimension_numbers<[1], [0], [0], [1], [0, 0, 1, 1], [], []>} : vector<8x128xf32>, vector<128x8xf32>, vector<8x8xf32> -> vector<8x8xf32>
    %cst_29 = arith.constant 0.176776692 : f32
    %45 = vector.broadcast %cst_29 : f32 to vector<8x8xf32>
    %46 = arith.mulf %44, %45 : vector<8x8xf32>
    %cst_30 = arith.constant -1.000000e+30 : f32
    %47 = vector.broadcast %cst_30 : f32 to vector<8x8xf32>
    %48 = arith.select %24, %46, %47 : vector<8x8xi1>, vector<8x8xf32>
    %cst_31 = arith.constant dense<0xFF800000> : vector<8xf32>
    %49 = vector.multi_reduction <maximumf>, %48, %cst_31 [1] : vector<8x8xf32> to vector<8xf32>
    %50 = vector.shape_cast %49 : vector<8xf32> to vector<8x1xf32>
    %51 = vector.broadcast %50 : vector<8x1xf32> to vector<8x8xf32>
    %52 = arith.subf %48, %51 : vector<8x8xf32>
    %53 = math.exp %52 : vector<8x8xf32>
    %cst_32 = arith.constant dense<0.000000e+00> : vector<8xf32>
    %54 = vector.multi_reduction <add>, %53, %cst_32 [1] : vector<8x8xf32> to vector<8xf32>
    %55 = vector.shape_cast %54 : vector<8xf32> to vector<8x1xf32>
    %56 = vector.broadcast %55 : vector<8x1xf32> to vector<8x8xf32>
    %57 = arith.divf %53, %56 : vector<8x8xf32>
    %cst_33 = arith.constant dense<0.000000e+00> : vector<8x128xf32>
    %58 = tpu.matmul %57, %42, %cst_33 {dimension_numbers = #tpu.dot_dimension_numbers<[1], [0], [0], [1], [0, 0, 1, 1], [], []>} : vector<8x8xf32>, vector<8x128xf32>, vector<8x128xf32> -> vector<8x128xf32>
    %c0_34 = arith.constant 0 : index
    %c0_35 = arith.constant 0 : index
    %c0_36 = arith.constant 0 : index
    %59 = vector.load %arg4[%c0_34, %c0_35, %c0_36] : memref<4x128x128xf32, #tpu.memory_space<vmem>>, vector<1x128x128xf32>
    %60 = vector.shape_cast %59 : vector<1x128x128xf32> to vector<128x128xf32>
    %cst_37 = arith.constant dense<0.000000e+00> : vector<8x128xf32>
    %61 = tpu.matmul %58, %60, %cst_37 {dimension_numbers = #tpu.dot_dimension_numbers<[1], [0], [0], [1], [0, 0, 1, 1], [], []>} : vector<8x128xf32>, vector<128x128xf32>, vector<8x128xf32> -> vector<8x128xf32>
    %62 = arith.addf %25, %61 : vector<8x128xf32>
    %c0_38 = arith.constant 0 : index
    %c1_39 = arith.constant 1 : index
    %c0_40 = arith.constant 0 : index
    %c0_41 = arith.constant 0 : index
    %63 = vector.load %arg3[%c0_38, %c1_39, %c0_40, %c0_41] : memref<3x4x128x128xf32, #tpu.memory_space<vmem>>, vector<1x1x128x128xf32>
    %64 = vector.shape_cast %63 : vector<1x1x128x128xf32> to vector<128x128xf32>
    %cst_42 = arith.constant dense<0.000000e+00> : vector<8x128xf32>
    %65 = tpu.matmul %15, %64, %cst_42 {dimension_numbers = #tpu.dot_dimension_numbers<[1], [0], [0], [1], [0, 0, 1, 1], [], []>} : vector<8x128xf32>, vector<128x128xf32>, vector<8x128xf32> -> vector<8x128xf32>
    %66 = arith.mulf %65, %16 : vector<8x128xf32>
    %cst_43 = arith.constant dense<0.000000e+00> : vector<8x128xf32>
    %67 = tpu.matmul %65, %18, %cst_43 {dimension_numbers = #tpu.dot_dimension_numbers<[1], [0], [0], [1], [0, 0, 1, 1], [], []>} : vector<8x128xf32>, vector<128x128xf32>, vector<8x128xf32> -> vector<8x128xf32>
    %68 = arith.mulf %67, %17 : vector<8x128xf32>
    %69 = arith.addf %66, %68 : vector<8x128xf32>
    %c1_44 = arith.constant 1 : index
    %c1_45 = arith.constant 1 : index
    %c0_46 = arith.constant 0 : index
    %c0_47 = arith.constant 0 : index
    %70 = vector.load %arg3[%c1_44, %c1_45, %c0_46, %c0_47] : memref<3x4x128x128xf32, #tpu.memory_space<vmem>>, vector<1x1x128x128xf32>
    %71 = vector.shape_cast %70 : vector<1x1x128x128xf32> to vector<128x128xf32>
    %cst_48 = arith.constant dense<0.000000e+00> : vector<8x128xf32>
    %72 = tpu.matmul %15, %71, %cst_48 {dimension_numbers = #tpu.dot_dimension_numbers<[1], [0], [0], [1], [0, 0, 1, 1], [], []>} : vector<8x128xf32>, vector<128x128xf32>, vector<8x128xf32> -> vector<8x128xf32>
    %73 = arith.mulf %72, %16 : vector<8x128xf32>
    %cst_49 = arith.constant dense<0.000000e+00> : vector<8x128xf32>
    %74 = tpu.matmul %72, %18, %cst_49 {dimension_numbers = #tpu.dot_dimension_numbers<[1], [0], [0], [1], [0, 0, 1, 1], [], []>} : vector<8x128xf32>, vector<128x128xf32>, vector<8x128xf32> -> vector<8x128xf32>
    %75 = arith.mulf %74, %17 : vector<8x128xf32>
    %76 = arith.addf %73, %75 : vector<8x128xf32>
    %c2_50 = arith.constant 2 : index
    %c1_51 = arith.constant 1 : index
    %c0_52 = arith.constant 0 : index
    %c0_53 = arith.constant 0 : index
    %77 = vector.load %arg3[%c2_50, %c1_51, %c0_52, %c0_53] : memref<3x4x128x128xf32, #tpu.memory_space<vmem>>, vector<1x1x128x128xf32>
    %78 = vector.shape_cast %77 : vector<1x1x128x128xf32> to vector<128x128xf32>
    %cst_54 = arith.constant dense<0.000000e+00> : vector<8x128xf32>
    %79 = tpu.matmul %15, %78, %cst_54 {dimension_numbers = #tpu.dot_dimension_numbers<[1], [0], [0], [1], [0, 0, 1, 1], [], []>} : vector<8x128xf32>, vector<128x128xf32>, vector<8x128xf32> -> vector<8x128xf32>
    %80 = tpu.transpose %76, [1, 0] : vector<8x128xf32> -> vector<128x8xf32>
    %cst_55 = arith.constant dense<0.000000e+00> : vector<8x8xf32>
    %81 = tpu.matmul %69, %80, %cst_55 {dimension_numbers = #tpu.dot_dimension_numbers<[1], [0], [0], [1], [0, 0, 1, 1], [], []>} : vector<8x128xf32>, vector<128x8xf32>, vector<8x8xf32> -> vector<8x8xf32>
    %cst_56 = arith.constant 0.176776692 : f32
    %82 = vector.broadcast %cst_56 : f32 to vector<8x8xf32>
    %83 = arith.mulf %81, %82 : vector<8x8xf32>
    %cst_57 = arith.constant -1.000000e+30 : f32
    %84 = vector.broadcast %cst_57 : f32 to vector<8x8xf32>
    %85 = arith.select %24, %83, %84 : vector<8x8xi1>, vector<8x8xf32>
    %cst_58 = arith.constant dense<0xFF800000> : vector<8xf32>
    %86 = vector.multi_reduction <maximumf>, %85, %cst_58 [1] : vector<8x8xf32> to vector<8xf32>
    %87 = vector.shape_cast %86 : vector<8xf32> to vector<8x1xf32>
    %88 = vector.broadcast %87 : vector<8x1xf32> to vector<8x8xf32>
    %89 = arith.subf %85, %88 : vector<8x8xf32>
    %90 = math.exp %89 : vector<8x8xf32>
    %cst_59 = arith.constant dense<0.000000e+00> : vector<8xf32>
    %91 = vector.multi_reduction <add>, %90, %cst_59 [1] : vector<8x8xf32> to vector<8xf32>
    %92 = vector.shape_cast %91 : vector<8xf32> to vector<8x1xf32>
    %93 = vector.broadcast %92 : vector<8x1xf32> to vector<8x8xf32>
    %94 = arith.divf %90, %93 : vector<8x8xf32>
    %cst_60 = arith.constant dense<0.000000e+00> : vector<8x128xf32>
    %95 = tpu.matmul %94, %79, %cst_60 {dimension_numbers = #tpu.dot_dimension_numbers<[1], [0], [0], [1], [0, 0, 1, 1], [], []>} : vector<8x8xf32>, vector<8x128xf32>, vector<8x128xf32> -> vector<8x128xf32>
    %c1_61 = arith.constant 1 : index
    %c0_62 = arith.constant 0 : index
    %c0_63 = arith.constant 0 : index
    %96 = vector.load %arg4[%c1_61, %c0_62, %c0_63] : memref<4x128x128xf32, #tpu.memory_space<vmem>>, vector<1x128x128xf32>
    %97 = vector.shape_cast %96 : vector<1x128x128xf32> to vector<128x128xf32>
    %cst_64 = arith.constant dense<0.000000e+00> : vector<8x128xf32>
    %98 = tpu.matmul %95, %97, %cst_64 {dimension_numbers = #tpu.dot_dimension_numbers<[1], [0], [0], [1], [0, 0, 1, 1], [], []>} : vector<8x128xf32>, vector<128x128xf32>, vector<8x128xf32> -> vector<8x128xf32>
    %99 = arith.addf %62, %98 : vector<8x128xf32>
    %c0_65 = arith.constant 0 : index
    %c2_66 = arith.constant 2 : index
    %c0_67 = arith.constant 0 : index
    %c0_68 = arith.constant 0 : index
    %100 = vector.load %arg3[%c0_65, %c2_66, %c0_67, %c0_68] : memref<3x4x128x128xf32, #tpu.memory_space<vmem>>, vector<1x1x128x128xf32>
    %101 = vector.shape_cast %100 : vector<1x1x128x128xf32> to vector<128x128xf32>
    %cst_69 = arith.constant dense<0.000000e+00> : vector<8x128xf32>
    %102 = tpu.matmul %15, %101, %cst_69 {dimension_numbers = #tpu.dot_dimension_numbers<[1], [0], [0], [1], [0, 0, 1, 1], [], []>} : vector<8x128xf32>, vector<128x128xf32>, vector<8x128xf32> -> vector<8x128xf32>
    %103 = arith.mulf %102, %16 : vector<8x128xf32>
    %cst_70 = arith.constant dense<0.000000e+00> : vector<8x128xf32>
    %104 = tpu.matmul %102, %18, %cst_70 {dimension_numbers = #tpu.dot_dimension_numbers<[1], [0], [0], [1], [0, 0, 1, 1], [], []>} : vector<8x128xf32>, vector<128x128xf32>, vector<8x128xf32> -> vector<8x128xf32>
    %105 = arith.mulf %104, %17 : vector<8x128xf32>
    %106 = arith.addf %103, %105 : vector<8x128xf32>
    %c1_71 = arith.constant 1 : index
    %c2_72 = arith.constant 2 : index
    %c0_73 = arith.constant 0 : index
    %c0_74 = arith.constant 0 : index
    %107 = vector.load %arg3[%c1_71, %c2_72, %c0_73, %c0_74] : memref<3x4x128x128xf32, #tpu.memory_space<vmem>>, vector<1x1x128x128xf32>
    %108 = vector.shape_cast %107 : vector<1x1x128x128xf32> to vector<128x128xf32>
    %cst_75 = arith.constant dense<0.000000e+00> : vector<8x128xf32>
    %109 = tpu.matmul %15, %108, %cst_75 {dimension_numbers = #tpu.dot_dimension_numbers<[1], [0], [0], [1], [0, 0, 1, 1], [], []>} : vector<8x128xf32>, vector<128x128xf32>, vector<8x128xf32> -> vector<8x128xf32>
    %110 = arith.mulf %109, %16 : vector<8x128xf32>
    %cst_76 = arith.constant dense<0.000000e+00> : vector<8x128xf32>
    %111 = tpu.matmul %109, %18, %cst_76 {dimension_numbers = #tpu.dot_dimension_numbers<[1], [0], [0], [1], [0, 0, 1, 1], [], []>} : vector<8x128xf32>, vector<128x128xf32>, vector<8x128xf32> -> vector<8x128xf32>
    %112 = arith.mulf %111, %17 : vector<8x128xf32>
    %113 = arith.addf %110, %112 : vector<8x128xf32>
    %c2_77 = arith.constant 2 : index
    %c2_78 = arith.constant 2 : index
    %c0_79 = arith.constant 0 : index
    %c0_80 = arith.constant 0 : index
    %114 = vector.load %arg3[%c2_77, %c2_78, %c0_79, %c0_80] : memref<3x4x128x128xf32, #tpu.memory_space<vmem>>, vector<1x1x128x128xf32>
    %115 = vector.shape_cast %114 : vector<1x1x128x128xf32> to vector<128x128xf32>
    %cst_81 = arith.constant dense<0.000000e+00> : vector<8x128xf32>
    %116 = tpu.matmul %15, %115, %cst_81 {dimension_numbers = #tpu.dot_dimension_numbers<[1], [0], [0], [1], [0, 0, 1, 1], [], []>} : vector<8x128xf32>, vector<128x128xf32>, vector<8x128xf32> -> vector<8x128xf32>
    %117 = tpu.transpose %113, [1, 0] : vector<8x128xf32> -> vector<128x8xf32>
    %cst_82 = arith.constant dense<0.000000e+00> : vector<8x8xf32>
    %118 = tpu.matmul %106, %117, %cst_82 {dimension_numbers = #tpu.dot_dimension_numbers<[1], [0], [0], [1], [0, 0, 1, 1], [], []>} : vector<8x128xf32>, vector<128x8xf32>, vector<8x8xf32> -> vector<8x8xf32>
    %cst_83 = arith.constant 0.176776692 : f32
    %119 = vector.broadcast %cst_83 : f32 to vector<8x8xf32>
    %120 = arith.mulf %118, %119 : vector<8x8xf32>
    %cst_84 = arith.constant -1.000000e+30 : f32
    %121 = vector.broadcast %cst_84 : f32 to vector<8x8xf32>
    %122 = arith.select %24, %120, %121 : vector<8x8xi1>, vector<8x8xf32>
    %cst_85 = arith.constant dense<0xFF800000> : vector<8xf32>
    %123 = vector.multi_reduction <maximumf>, %122, %cst_85 [1] : vector<8x8xf32> to vector<8xf32>
    %124 = vector.shape_cast %123 : vector<8xf32> to vector<8x1xf32>
    %125 = vector.broadcast %124 : vector<8x1xf32> to vector<8x8xf32>
    %126 = arith.subf %122, %125 : vector<8x8xf32>
    %127 = math.exp %126 : vector<8x8xf32>
    %cst_86 = arith.constant dense<0.000000e+00> : vector<8xf32>
    %128 = vector.multi_reduction <add>, %127, %cst_86 [1] : vector<8x8xf32> to vector<8xf32>
    %129 = vector.shape_cast %128 : vector<8xf32> to vector<8x1xf32>
    %130 = vector.broadcast %129 : vector<8x1xf32> to vector<8x8xf32>
    %131 = arith.divf %127, %130 : vector<8x8xf32>
    %cst_87 = arith.constant dense<0.000000e+00> : vector<8x128xf32>
    %132 = tpu.matmul %131, %116, %cst_87 {dimension_numbers = #tpu.dot_dimension_numbers<[1], [0], [0], [1], [0, 0, 1, 1], [], []>} : vector<8x8xf32>, vector<8x128xf32>, vector<8x128xf32> -> vector<8x128xf32>
    %c2_88 = arith.constant 2 : index
    %c0_89 = arith.constant 0 : index
    %c0_90 = arith.constant 0 : index
    %133 = vector.load %arg4[%c2_88, %c0_89, %c0_90] : memref<4x128x128xf32, #tpu.memory_space<vmem>>, vector<1x128x128xf32>
    %134 = vector.shape_cast %133 : vector<1x128x128xf32> to vector<128x128xf32>
    %cst_91 = arith.constant dense<0.000000e+00> : vector<8x128xf32>
    %135 = tpu.matmul %132, %134, %cst_91 {dimension_numbers = #tpu.dot_dimension_numbers<[1], [0], [0], [1], [0, 0, 1, 1], [], []>} : vector<8x128xf32>, vector<128x128xf32>, vector<8x128xf32> -> vector<8x128xf32>
    %136 = arith.addf %99, %135 : vector<8x128xf32>
    %c0_92 = arith.constant 0 : index
    %c3 = arith.constant 3 : index
    %c0_93 = arith.constant 0 : index
    %c0_94 = arith.constant 0 : index
    %137 = vector.load %arg3[%c0_92, %c3, %c0_93, %c0_94] : memref<3x4x128x128xf32, #tpu.memory_space<vmem>>, vector<1x1x128x128xf32>
    %138 = vector.shape_cast %137 : vector<1x1x128x128xf32> to vector<128x128xf32>
    %cst_95 = arith.constant dense<0.000000e+00> : vector<8x128xf32>
    %139 = tpu.matmul %15, %138, %cst_95 {dimension_numbers = #tpu.dot_dimension_numbers<[1], [0], [0], [1], [0, 0, 1, 1], [], []>} : vector<8x128xf32>, vector<128x128xf32>, vector<8x128xf32> -> vector<8x128xf32>
    %140 = arith.mulf %139, %16 : vector<8x128xf32>
    %cst_96 = arith.constant dense<0.000000e+00> : vector<8x128xf32>
    %141 = tpu.matmul %139, %18, %cst_96 {dimension_numbers = #tpu.dot_dimension_numbers<[1], [0], [0], [1], [0, 0, 1, 1], [], []>} : vector<8x128xf32>, vector<128x128xf32>, vector<8x128xf32> -> vector<8x128xf32>
    %142 = arith.mulf %141, %17 : vector<8x128xf32>
    %143 = arith.addf %140, %142 : vector<8x128xf32>
    %c1_97 = arith.constant 1 : index
    %c3_98 = arith.constant 3 : index
    %c0_99 = arith.constant 0 : index
    %c0_100 = arith.constant 0 : index
    %144 = vector.load %arg3[%c1_97, %c3_98, %c0_99, %c0_100] : memref<3x4x128x128xf32, #tpu.memory_space<vmem>>, vector<1x1x128x128xf32>
    %145 = vector.shape_cast %144 : vector<1x1x128x128xf32> to vector<128x128xf32>
    %cst_101 = arith.constant dense<0.000000e+00> : vector<8x128xf32>
    %146 = tpu.matmul %15, %145, %cst_101 {dimension_numbers = #tpu.dot_dimension_numbers<[1], [0], [0], [1], [0, 0, 1, 1], [], []>} : vector<8x128xf32>, vector<128x128xf32>, vector<8x128xf32> -> vector<8x128xf32>
    %147 = arith.mulf %146, %16 : vector<8x128xf32>
    %cst_102 = arith.constant dense<0.000000e+00> : vector<8x128xf32>
    %148 = tpu.matmul %146, %18, %cst_102 {dimension_numbers = #tpu.dot_dimension_numbers<[1], [0], [0], [1], [0, 0, 1, 1], [], []>} : vector<8x128xf32>, vector<128x128xf32>, vector<8x128xf32> -> vector<8x128xf32>
    %149 = arith.mulf %148, %17 : vector<8x128xf32>
    %150 = arith.addf %147, %149 : vector<8x128xf32>
    %c2_103 = arith.constant 2 : index
    %c3_104 = arith.constant 3 : index
    %c0_105 = arith.constant 0 : index
    %c0_106 = arith.constant 0 : index
    %151 = vector.load %arg3[%c2_103, %c3_104, %c0_105, %c0_106] : memref<3x4x128x128xf32, #tpu.memory_space<vmem>>, vector<1x1x128x128xf32>
    %152 = vector.shape_cast %151 : vector<1x1x128x128xf32> to vector<128x128xf32>
    %cst_107 = arith.constant dense<0.000000e+00> : vector<8x128xf32>
    %153 = tpu.matmul %15, %152, %cst_107 {dimension_numbers = #tpu.dot_dimension_numbers<[1], [0], [0], [1], [0, 0, 1, 1], [], []>} : vector<8x128xf32>, vector<128x128xf32>, vector<8x128xf32> -> vector<8x128xf32>
    %154 = tpu.transpose %150, [1, 0] : vector<8x128xf32> -> vector<128x8xf32>
    %cst_108 = arith.constant dense<0.000000e+00> : vector<8x8xf32>
    %155 = tpu.matmul %143, %154, %cst_108 {dimension_numbers = #tpu.dot_dimension_numbers<[1], [0], [0], [1], [0, 0, 1, 1], [], []>} : vector<8x128xf32>, vector<128x8xf32>, vector<8x8xf32> -> vector<8x8xf32>
    %cst_109 = arith.constant 0.176776692 : f32
    %156 = vector.broadcast %cst_109 : f32 to vector<8x8xf32>
    %157 = arith.mulf %155, %156 : vector<8x8xf32>
    %cst_110 = arith.constant -1.000000e+30 : f32
    %158 = vector.broadcast %cst_110 : f32 to vector<8x8xf32>
    %159 = arith.select %24, %157, %158 : vector<8x8xi1>, vector<8x8xf32>
    %cst_111 = arith.constant dense<0xFF800000> : vector<8xf32>
    %160 = vector.multi_reduction <maximumf>, %159, %cst_111 [1] : vector<8x8xf32> to vector<8xf32>
    %161 = vector.shape_cast %160 : vector<8xf32> to vector<8x1xf32>
    %162 = vector.broadcast %161 : vector<8x1xf32> to vector<8x8xf32>
    %163 = arith.subf %159, %162 : vector<8x8xf32>
    %164 = math.exp %163 : vector<8x8xf32>
    %cst_112 = arith.constant dense<0.000000e+00> : vector<8xf32>
    %165 = vector.multi_reduction <add>, %164, %cst_112 [1] : vector<8x8xf32> to vector<8xf32>
    %166 = vector.shape_cast %165 : vector<8xf32> to vector<8x1xf32>
    %167 = vector.broadcast %166 : vector<8x1xf32> to vector<8x8xf32>
    %168 = arith.divf %164, %167 : vector<8x8xf32>
    %cst_113 = arith.constant dense<0.000000e+00> : vector<8x128xf32>
    %169 = tpu.matmul %168, %153, %cst_113 {dimension_numbers = #tpu.dot_dimension_numbers<[1], [0], [0], [1], [0, 0, 1, 1], [], []>} : vector<8x8xf32>, vector<8x128xf32>, vector<8x128xf32> -> vector<8x128xf32>
    %c3_114 = arith.constant 3 : index
    %c0_115 = arith.constant 0 : index
    %c0_116 = arith.constant 0 : index
    %170 = vector.load %arg4[%c3_114, %c0_115, %c0_116] : memref<4x128x128xf32, #tpu.memory_space<vmem>>, vector<1x128x128xf32>
    %171 = vector.shape_cast %170 : vector<1x128x128xf32> to vector<128x128xf32>
    %cst_117 = arith.constant dense<0.000000e+00> : vector<8x128xf32>
    %172 = tpu.matmul %169, %171, %cst_117 {dimension_numbers = #tpu.dot_dimension_numbers<[1], [0], [0], [1], [0, 0, 1, 1], [], []>} : vector<8x128xf32>, vector<128x128xf32>, vector<8x128xf32> -> vector<8x128xf32>
    %173 = arith.addf %136, %172 : vector<8x128xf32>
    %c0_118 = arith.constant 0 : index
    %c0_119 = arith.constant 0 : index
    %174 = vector.load %arg5[%c0_118, %c0_119] : memref<1x128xf32, #tpu.memory_space<vmem>>, vector<1x128xf32>
    %175 = vector.broadcast %174 : vector<1x128xf32> to vector<8x128xf32>
    %176 = arith.addf %173, %175 : vector<8x128xf32>
    %cst_120 = arith.constant 0.000000e+00 : f32
    %177 = vector.shape_cast %5 : vector<8x1xi1> to vector<8x1xi1>
    %178 = vector.broadcast %177 : vector<8x1xi1> to vector<8x128xi1>
    %179 = vector.broadcast %cst_120 : f32 to vector<8x128xf32>
    %180 = arith.select %178, %176, %179 : vector<8x128xi1>, vector<8x128xf32>
    %181 = arith.addf %15, %180 : vector<8x128xf32>
    %182 = arith.mulf %181, %181 : vector<8x128xf32>
    %183 = vector.shape_cast %182 : vector<8x128xf32> to vector<1x8x128xf32>
    %cst_121 = arith.constant dense<0.000000e+00> : vector<1xf32>
    %184 = vector.multi_reduction <add>, %183, %cst_121 [1, 2] : vector<1x8x128xf32> to vector<1xf32>
    %185 = vector.shape_cast %184 : vector<1xf32> to vector<1x1x1xf32>
    %186 = vector.extract %185[0, 0, 0] : f32 from vector<1x1x1xf32>
    %cst_122 = arith.constant 3.906250e-03 : f32
    %187 = arith.mulf %186, %cst_122 : f32
    %188 = math.rsqrt %187 : f32
    %189 = vector.broadcast %188 : f32 to vector<8x128xf32>
    %190 = arith.mulf %181, %189 : vector<8x128xf32>
    %191 = arith.mulf %2, %190 : vector<8x128xf32>
    %c0_123 = arith.constant 0 : index
    %c0_124 = arith.constant 0 : index
    %192 = vector.load %arg9[%c0_123, %c0_124] : memref<128x128xf32, #tpu.memory_space<vmem>>, vector<128x128xf32>
    %cst_125 = arith.constant dense<0.000000e+00> : vector<8x128xf32>
    %193 = tpu.matmul %191, %192, %cst_125 {dimension_numbers = #tpu.dot_dimension_numbers<[1], [0], [0], [1], [0, 0, 1, 1], [], []>} : vector<8x128xf32>, vector<128x128xf32>, vector<8x128xf32> -> vector<8x128xf32>
    %c0_126 = arith.constant 0 : index
    %c0_127 = arith.constant 0 : index
    %194 = vector.load %arg10[%c0_126, %c0_127] : memref<1x128xf32, #tpu.memory_space<vmem>>, vector<1x128xf32>
    %195 = vector.broadcast %194 : vector<1x128xf32> to vector<8x128xf32>
    %196 = arith.addf %193, %195 : vector<8x128xf32>
    %cst_128 = arith.constant 0.000000e+00 : f32
    %197 = vector.shape_cast %5 : vector<8x1xi1> to vector<8x1xi1>
    %198 = vector.broadcast %197 : vector<8x1xi1> to vector<8x128xi1>
    %199 = vector.broadcast %cst_128 : f32 to vector<8x128xf32>
    %200 = arith.select %198, %196, %199 : vector<8x128xi1>, vector<8x128xf32>
    %c0_129 = arith.constant 0 : index
    %c0_130 = arith.constant 0 : index
    %201 = vector.load %arg11[%c0_129, %c0_130] : memref<128x256xf32, #tpu.memory_space<vmem>>, vector<128x256xf32>
    %cst_131 = arith.constant dense<0.000000e+00> : vector<8x256xf32>
    %202 = tpu.matmul %200, %201, %cst_131 {dimension_numbers = #tpu.dot_dimension_numbers<[1], [0], [0], [1], [0, 0, 1, 1], [], []>} : vector<8x128xf32>, vector<128x256xf32>, vector<8x256xf32> -> vector<8x256xf32>
    %c0_132 = arith.constant 0 : index
    %c0_133 = arith.constant 0 : index
    %203 = vector.load %arg12[%c0_132, %c0_133] : memref<1x256xf32, #tpu.memory_space<vmem>>, vector<1x256xf32>
    %204 = vector.broadcast %203 : vector<1x256xf32> to vector<8x256xf32>
    %205 = arith.addf %202, %204 : vector<8x256xf32>
    %206 = vector.extract_strided_slice %205 {offsets = [0, 0], sizes = [8, 128], strides = [1, 1]} : vector<8x256xf32> to vector<8x128xf32>
    %207 = vector.extract_strided_slice %205 {offsets = [0, 128], sizes = [8, 128], strides = [1, 1]} : vector<8x256xf32> to vector<8x128xf32>
    %c0_134 = arith.constant 0 : index
    %208 = memref.load %arg13[%c0_134] : memref<1xf32, #tpu.memory_space<smem>>
    %209 = vector.broadcast %208 : f32 to vector<8x128xf32>
    %210 = arith.mulf %209, %206 : vector<8x128xf32>
    %211 = arith.negf %210 : vector<8x128xf32>
    %212 = math.exp %211 : vector<8x128xf32>
    %cst_135 = arith.constant 1.000000e+00 : f32
    %213 = vector.broadcast %cst_135 : f32 to vector<8x128xf32>
    %214 = arith.addf %213, %212 : vector<8x128xf32>
    %215 = arith.divf %213, %214 : vector<8x128xf32>
    %216 = arith.mulf %206, %215 : vector<8x128xf32>
    %217 = arith.mulf %216, %207 : vector<8x128xf32>
    %cst_136 = arith.constant 0.000000e+00 : f32
    %218 = vector.shape_cast %5 : vector<8x1xi1> to vector<8x1xi1>
    %219 = vector.broadcast %218 : vector<8x1xi1> to vector<8x128xi1>
    %220 = vector.broadcast %cst_136 : f32 to vector<8x128xf32>
    %221 = arith.select %219, %217, %220 : vector<8x128xi1>, vector<8x128xf32>
    %222 = arith.addf %181, %221 : vector<8x128xf32>
    %c0_137 = arith.constant 0 : index
    %c0_138 = arith.constant 0 : index
    %c0_139 = arith.constant 0 : index
    %223 = vector.load %arg14[%c0_137, %c0_138, %c0_139] : memref<1x8x128xf32, #tpu.memory_space<vmem>>, vector<1x8x128xf32>
    %224 = vector.shape_cast %223 : vector<1x8x128xf32> to vector<8x128xf32>
    %225 = vector.shape_cast %222 : vector<8x128xf32> to vector<1x8x128xf32>
    tpu.vector_store %arg14[%c0_137, %c0_138, %c0_139], %225 {strides = array<i32>} : memref<1x8x128xf32, #tpu.memory_space<vmem>>, vector<1x8x128xf32>,
    return
  }
  func.func @transform_0(%arg0: i32) -> (i32, i32, i32) {
    %c0_i32 = arith.constant 0 : i32
    %c0_i32_0 = arith.constant 0 : i32
    %c0_i32_1 = arith.constant 0 : i32
    return %arg0, %c0_i32, %c0_i32_0 : i32, i32, i32
  }
  func.func @transform_1(%arg0: i32) -> (i32, i32) {
    %c0_i32 = arith.constant 0 : i32
    %c0_i32_0 = arith.constant 0 : i32
    %c0_i32_1 = arith.constant 0 : i32
    return %c0_i32, %c0_i32_0 : i32, i32
  }
  func.func @transform_2(%arg0: i32) -> (i32, i32, i32, i32) {
    %c0_i32 = arith.constant 0 : i32
    %c0_i32_0 = arith.constant 0 : i32
    %c0_i32_1 = arith.constant 0 : i32
    %c0_i32_2 = arith.constant 0 : i32
    %c0_i32_3 = arith.constant 0 : i32
    return %c0_i32, %c0_i32_0, %c0_i32_1, %c0_i32_2 : i32, i32, i32, i32
  }
  func.func @transform_3(%arg0: i32) -> (i32, i32, i32) {
    %c0_i32 = arith.constant 0 : i32
    %c0_i32_0 = arith.constant 0 : i32
    %c0_i32_1 = arith.constant 0 : i32
    %c0_i32_2 = arith.constant 0 : i32
    return %c0_i32, %c0_i32_0, %c0_i32_1 : i32, i32, i32
  }
  func.func @transform_4(%arg0: i32) -> (i32, i32) {
    %c0_i32 = arith.constant 0 : i32
    %c0_i32_0 = arith.constant 0 : i32
    %c0_i32_1 = arith.constant 0 : i32
    return %c0_i32, %c0_i32_0 : i32, i32
  }
  func.func @transform_5(%arg0: i32) -> (i32, i32) {
    %c0_i32 = arith.constant 0 : i32
    %c0_i32_0 = arith.constant 0 : i32
    %c0_i32_1 = arith.constant 0 : i32
    return %c0_i32, %c0_i32_0 : i32, i32
  }
  func.func @transform_6(%arg0: i32) -> (i32, i32) {
    %c0_i32 = arith.constant 0 : i32
    %c0_i32_0 = arith.constant 0 : i32
    %c0_i32_1 = arith.constant 0 : i32
    return %c0_i32, %c0_i32_0 : i32, i32
  }
  func.func @transform_7(%arg0: i32) -> (i32, i32) {
    %c0_i32 = arith.constant 0 : i32
    %c0_i32_0 = arith.constant 0 : i32
    %c0_i32_1 = arith.constant 0 : i32
    return %c0_i32, %c0_i32_0 : i32, i32
  }
  func.func @transform_8(%arg0: i32) -> (i32, i32) {
    %c0_i32 = arith.constant 0 : i32
    %c0_i32_0 = arith.constant 0 : i32
    %c0_i32_1 = arith.constant 0 : i32
    return %c0_i32, %c0_i32_0 : i32, i32
  }
  func.func @transform_9(%arg0: i32) -> (i32, i32) {
    %c0_i32 = arith.constant 0 : i32
    %c0_i32_0 = arith.constant 0 : i32
    %c0_i32_1 = arith.constant 0 : i32
    return %c0_i32, %c0_i32_0 : i32, i32
  }
  func.func @transform_10(%arg0: i32) -> (i32, i32) {
    %c0_i32 = arith.constant 0 : i32
    %c0_i32_0 = arith.constant 0 : i32
    %c0_i32_1 = arith.constant 0 : i32
    return %c0_i32, %c0_i32_0 : i32, i32
  }
  func.func @transform_11(%arg0: i32) -> (i32, i32) {
    %c0_i32 = arith.constant 0 : i32
    %c0_i32_0 = arith.constant 0 : i32
    %c0_i32_1 = arith.constant 0 : i32
    return %c0_i32, %c0_i32_0 : i32, i32
  }
  func.func @transform_12(%arg0: i32) -> i32 {
    %c0_i32 = arith.constant 0 : i32
    %c0_i32_0 = arith.constant 0 : i32
    return %c0_i32 : i32
  }
  func.func @transform_13(%arg0: i32) -> (i32, i32, i32) {
    %c0_i32 = arith.constant 0 : i32
    %c0_i32_0 = arith.constant 0 : i32
    %c0_i32_1 = arith.constant 0 : i32
    return %arg0, %c0_i32, %c0_i32_0 : i32, i32, i32
  }
}

</mosaic_0001>

<llo_original>
// kernel: tpu_custom_call.1
$region0: #{tpu_custom_call.1}
  #allocation0 [shape = 'u32[]', space=smem, size = 0x4, offset = 0x4, fixed_abs, tag = 'smem constant byte address 0x4 - core index']
  #allocation1 [shape = 'u32[144,128]{1,0:T(1,128)}', space=vmem, size = 0x12000, scoped, tag = 'internal scratch']
  #allocation2 [shape = 'f32[1]{0:T(128)S(6)}', space=smem, size = 0x200, scoped, tag = 'scoped memory for tpu_custom_call.1']
  %s0 = inlined_call_operand.hbm [shape: f32[2,8,128], index: 0, kind: input, shape index: {}]
  %s1 = inlined_call_operand.hbm [shape: f32[8,128], index: 1, kind: input, shape index: {}]
  %s2 = inlined_call_operand.hbm [shape: f32[3,4,128,128], index: 2, kind: input, shape index: {}]
  %s3 = inlined_call_operand.hbm [shape: f32[4,128,128], index: 3, kind: input, shape index: {}]
  %s4 = inlined_call_operand.hbm [shape: f32[1,128], index: 4, kind: input, shape index: {}]
  %s5 = inlined_call_operand.vmem [shape: f32[8,128], index: 5, kind: input, shape index: {}]
  %s6 = inlined_call_operand.vmem [shape: f32[8,128], index: 6, kind: input, shape index: {}]
  %s7 = inlined_call_operand.hbm [shape: f32[128,128], index: 7, kind: input, shape index: {}]
  %s8 = inlined_call_operand.hbm [shape: f32[128,128], index: 8, kind: input, shape index: {}]
  %s9 = inlined_call_operand.vmem [shape: f32[1,128], index: 9, kind: input, shape index: {}]
  %s10 = inlined_call_operand.hbm [shape: f32[128,256], index: 10, kind: input, shape index: {}]
  %s11 = inlined_call_operand.vmem [shape: f32[1,256], index: 11, kind: input, shape index: {}]
  %s12 = inlined_call_operand.<no memory space> [shape: f32[1], index: 12, kind: input, shape index: {}]
  %s13 = inlined_call_operand.hbm [shape: f32[2,8,128], index: 13, kind: output, shape index: {}]
  %s14 = sld [smem:[#allocation0]]
  $region117: #{tpu_custom_call.1} parent=0
    _
  %s16 = ssub.s32 1, %s14
  %s17 = scalar_select 0, %s16, %s14
  %18 = sst [smem:[#allocation2]] %s12
  $region1: #{tpu_custom_call.1} parent=0
    #allocation3 [shape = 'u8[8192]{0}', space=vmem, size = 0x2000, scoped, tag = 'input window, operand 0']
    #allocation4 [shape = 's32[2]{0}', space=sflag, size = 0x8, scoped, tag = 'scoped memory for tpu_custom_call.1']
    #allocation5 [shape = 's32[2]{0}', space=sflag, size = 0x8, scoped, tag = 'scoped memory for tpu_custom_call.1']
    #allocation6 [shape = 'u8[4096]{0}', space=vmem, size = 0x1000, scoped, tag = 'input window, operand 1, single buffered']
    #allocation7 [shape = 's32[1]{0}', space=sflag, size = 0x4, scoped, tag = 'scoped memory for tpu_custom_call.1']
    #allocation8 [shape = 'u8[786432]{0}', space=vmem, size = 0xc0000, scoped, tag = 'input window, operand 2, single buffered']
    #allocation9 [shape = 'u8[262144]{0}', space=vmem, size = 0x40000, scoped, tag = 'input window, operand 3, single buffered']
    #allocation10 [shape = 's32[1]{0}', space=sflag, size = 0x4, scoped, tag = 'scoped memory for tpu_custom_call.1']
    #allocation11 [shape = 'u8[512]{0}', space=vmem, size = 0x400, scoped, tag = 'input window, operand 4, single buffered']
    #allocation12 [shape = 'u8[65536]{0}', space=vmem, size = 0x10000, scoped, tag = 'input window, operand 7, single buffered']
    #allocation13 [shape = 's32[1]{0}', space=sflag, size = 0x4, scoped, tag = 'scoped memory for tpu_custom_call.1']
    #allocation14 [shape = 'u8[65536]{0}', space=vmem, size = 0x10000, scoped, tag = 'input window, operand 8, single buffered']
    #allocation15 [shape = 'u8[131072]{0}', space=vmem, size = 0x20000, scoped, tag = 'input window, operand 10, single buffered']
    #allocation16 [shape = 's32[1]{0}', space=sflag, size = 0x4, scoped, tag = 'scoped memory for tpu_custom_call.1']
    #allocation17 [shape = 'u8[8192]{0}', space=vmem, size = 0x2000, scoped, tag = 'output window, operand 0']
    %19 = vsyncpa [#allocation4], 0
    %s20 = scalar_lea.sflag [#allocation4], 1
    %21 = vsyncpa %s20, 0
    %22 = vsyncpa [#allocation7], 0
    %23 = vsyncpa [#allocation10], 0
    %24 = vsyncpa [#allocation13], 0
    %25 = vsyncpa [#allocation16], 0
    %26 = vsyncpa [#allocation5], 0
    %s27 = scalar_lea.sflag [#allocation5], 1
    %28 = vsyncpa %s27, 0
    loop: start=0, step=1, limit=4
    $region2: #{tpu_custom_call.1} parent=1 // loop_pre_header
      _
    $region3: #{tpu_custom_call.1} parent=1 // loop_header
      %s30 = sphi 0, %s34
      %p31 = scmp.ge.s32.totalorder %s30, 4
      %s40 = sphi 0, %s42
      %s43 = sphi 0, %s40
      %s44 = sphi 0, %s43
      %s60 = sphi 0, %s44
      %s64 = sphi 0, %s64
      %s66 = sphi 0, %s64
      %s67 = sphi 0, %s66
      %s81 = sphi 0, %s67
      %s85 = sphi 0, %s85
      %s87 = sphi 0, %s85
      %s88 = sphi 0, %s87
      %s102 = sphi 0, %s88
      %s106 = sphi 0, %s106
      %s108 = sphi 0, %s106
      %s109 = sphi 0, %s108
      %s123 = sphi 0, %s109
      %s127 = sphi 0, %s127
      %s129 = sphi 0, %s127
      %s130 = sphi 0, %s129
      %s144 = sphi 0, %s130
      %s148 = sphi 0, %s148
      %s150 = sphi 0, %s148
      %s151 = sphi 0, %s150
      %s165 = sphi 0, %s151
      %s169 = sphi 0, %s169
      %s171 = sphi 0, %s169
      %s172 = sphi 0, %s171
      %s186 = sphi 0, %s172
      %s190 = sphi 0, %s190
      %s192 = sphi 0, %s190
      %s193 = sphi 0, %s192
      %s207 = sphi 0, %s193
      %s211 = sphi 0, %s211
      %s213 = sphi 0, %s211
      %s214 = sphi 0, %s213
      %s228 = sphi 0, %s214
      %s232 = sphi 0, %s232
      %s234 = sphi 0, %s232
      %s235 = sphi 0, %s234
      %s249 = sphi 0, %s235
      %s253 = sphi 0, %s253
      %s255 = sphi 0, %s253
      %s256 = sphi 0, %s255
      %s270 = sphi 0, %s256
      %s274 = sphi 0, %s274
      %s276 = sphi 0, %s274
      %s277 = sphi 0, %s276
      %s291 = sphi 0, %s277
      %s295 = sphi 0, %s295
      %s297 = sphi 0, %s295
      %s298 = sphi 0, %s297
      %s312 = sphi 0, %s298
      %s318 = sphi 0, %s320
      %s321 = sphi 0, %s318
      %s322 = sphi 0, %s321
      %s338 = sphi 0, %s322
    $region4: #{tpu_custom_call.1} parent=1 // loop_header_branch
      %33 = sbr.rel (%p31) target = $region8
    $region5: #{tpu_custom_call.1} parent=1 // loop_body
      %s35 = ssub.s32 %s30, 1
      %s36 = ssub.s32 %s30, 2
      %s37 = sadd.s32 %s30, 1
      %s38 = ssub.s32 %s30, %s37
      %p39 = scmp.eq.s32.totalorder %s38, 0
      %s41 = sadd.s32 %s40, 1
      %s42 = scalar_select %p39, %s40, %s41
      %p45 = pneg %p39
      %p46 = scmp.eq.s32.totalorder %s30, 1
      %p47 = por %p45, %p46
      %p48 = scmp.ne.s32.totalorder %s40, %s43
      %p49 = scmp.eq.s32.totalorder %s30, 0
      %p50 = por %p48, %p49
      %p51 = scmp.ne.s32.totalorder %s40, %s43
      %p52 = scmp.eq.s32.totalorder %s35, 1
      %p53 = por %p51, %p52
      %p54 = scmp.ne.s32.totalorder %s43, %s44
      %p55 = scmp.eq.s32.totalorder %s35, 0
      %p56 = por %p54, %p55
      %p57 = scmp.ne.s32.totalorder %s43, %s44
      %p58 = scmp.eq.s32.totalorder %s36, 1
      %p59 = por %p57, %p58
      %p61 = scmp.ne.s32.totalorder %s44, %s60
      %p62 = scmp.eq.s32.totalorder %s36, 0
      %p63 = por %p61, %p62
      %s65 = sadd.s32 %s64, 1
      %p68 = scmp.eq.s32.totalorder %s30, 1
      %p69 = scmp.ne.s32.totalorder %s64, %s66
      %p70 = scmp.eq.s32.totalorder %s30, 0
      %p71 = por %p69, %p70
      %p72 = scmp.ne.s32.totalorder %s64, %s66
      %p73 = scmp.eq.s32.totalorder %s35, 1
      %p74 = por %p72, %p73
      %p75 = scmp.ne.s32.totalorder %s66, %s67
      %p76 = scmp.eq.s32.totalorder %s35, 0
      %p77 = por %p75, %p76
      %p78 = scmp.ne.s32.totalorder %s66, %s67
      %p79 = scmp.eq.s32.totalorder %s36, 1
      %p80 = por %p78, %p79
      %p82 = scmp.ne.s32.totalorder %s67, %s81
      %p83 = scmp.eq.s32.totalorder %s36, 0
      %p84 = por %p82, %p83
      %s86 = sadd.s32 %s85, 1
      %p89 = scmp.eq.s32.totalorder %s30, 1
      %p90 = scmp.ne.s32.totalorder %s85, %s87
      %p91 = scmp.eq.s32.totalorder %s30, 0
      %p92 = por %p90, %p91
      %p93 = scmp.ne.s32.totalorder %s85, %s87
      %p94 = scmp.eq.s32.totalorder %s35, 1
      %p95 = por %p93, %p94
      %p96 = scmp.ne.s32.totalorder %s87, %s88
      %p97 = scmp.eq.s32.totalorder %s35, 0
      %p98 = por %p96, %p97
      %p99 = scmp.ne.s32.totalorder %s87, %s88
      %p100 = scmp.eq.s32.totalorder %s36, 1
      %p101 = por %p99, %p100
      %p103 = scmp.ne.s32.totalorder %s88, %s102
      %p104 = scmp.eq.s32.totalorder %s36, 0
      %p105 = por %p103, %p104
      %s107 = sadd.s32 %s106, 1
      %p110 = scmp.eq.s32.totalorder %s30, 1
      %p111 = scmp.ne.s32.totalorder %s106, %s108
      %p112 = scmp.eq.s32.totalorder %s30, 0
      %p113 = por %p111, %p112
      %p114 = scmp.ne.s32.totalorder %s106, %s108
      %p115 = scmp.eq.s32.totalorder %s35, 1
      %p116 = por %p114, %p115
      %p117 = scmp.ne.s32.totalorder %s108, %s109
      %p118 = scmp.eq.s32.totalorder %s35, 0
      %p119 = por %p117, %p118
      %p120 = scmp.ne.s32.totalorder %s108, %s109
      %p121 = scmp.eq.s32.totalorder %s36, 1
      %p122 = por %p120, %p121
      %p124 = scmp.ne.s32.totalorder %s109, %s123
      %p125 = scmp.eq.s32.totalorder %s36, 0
      %p126 = por %p124, %p125
      %s128 = sadd.s32 %s127, 1
      %p131 = scmp.eq.s32.totalorder %s30, 1
      %p132 = scmp.ne.s32.totalorder %s127, %s129
      %p133 = scmp.eq.s32.totalorder %s30, 0
      %p134 = por %p132, %p133
      %p135 = scmp.ne.s32.totalorder %s127, %s129
      %p136 = scmp.eq.s32.totalorder %s35, 1
      %p137 = por %p135, %p136
      %p138 = scmp.ne.s32.totalorder %s129, %s130
      %p139 = scmp.eq.s32.totalorder %s35, 0
      %p140 = por %p138, %p139
      %p141 = scmp.ne.s32.totalorder %s129, %s130
      %p142 = scmp.eq.s32.totalorder %s36, 1
      %p143 = por %p141, %p142
      %p145 = scmp.ne.s32.totalorder %s130, %s144
      %p146 = scmp.eq.s32.totalorder %s36, 0
      %p147 = por %p145, %p146
      %s149 = sadd.s32 %s148, 1
      %p152 = scmp.eq.s32.totalorder %s30, 1
      %p153 = scmp.ne.s32.totalorder %s148, %s150
      %p154 = scmp.eq.s32.totalorder %s30, 0
      %p155 = por %p153, %p154
      %p156 = scmp.ne.s32.totalorder %s148, %s150
      %p157 = scmp.eq.s32.totalorder %s35, 1
      %p158 = por %p156, %p157
      %p159 = scmp.ne.s32.totalorder %s150, %s151
      %p160 = scmp.eq.s32.totalorder %s35, 0
      %p161 = por %p159, %p160
      %p162 = scmp.ne.s32.totalorder %s150, %s151
      %p163 = scmp.eq.s32.totalorder %s36, 1
      %p164 = por %p162, %p163
      %p166 = scmp.ne.s32.totalorder %s151, %s165
      %p167 = scmp.eq.s32.totalorder %s36, 0
      %p168 = por %p166, %p167
      %s170 = sadd.s32 %s169, 1
      %p173 = scmp.eq.s32.totalorder %s30, 1
      %p174 = scmp.ne.s32.totalorder %s169, %s171
      %p175 = scmp.eq.s32.totalorder %s30, 0
      %p176 = por %p174, %p175
      %p177 = scmp.ne.s32.totalorder %s169, %s171
      %p178 = scmp.eq.s32.totalorder %s35, 1
      %p179 = por %p177, %p178
      %p180 = scmp.ne.s32.totalorder %s171, %s172
      %p181 = scmp.eq.s32.totalorder %s35, 0
      %p182 = por %p180, %p181
      %p183 = scmp.ne.s32.totalorder %s171, %s172
      %p184 = scmp.eq.s32.totalorder %s36, 1
      %p185 = por %p183, %p184
      %p187 = scmp.ne.s32.totalorder %s172, %s186
      %p188 = scmp.eq.s32.totalorder %s36, 0
      %p189 = por %p187, %p188
      %s191 = sadd.s32 %s190, 1
      %p194 = scmp.eq.s32.totalorder %s30, 1
      %p195 = scmp.ne.s32.totalorder %s190, %s192
      %p196 = scmp.eq.s32.totalorder %s30, 0
      %p197 = por %p195, %p196
      %p198 = scmp.ne.s32.totalorder %s190, %s192
      %p199 = scmp.eq.s32.totalorder %s35, 1
      %p200 = por %p198, %p199
      %p201 = scmp.ne.s32.totalorder %s192, %s193
      %p202 = scmp.eq.s32.totalorder %s35, 0
      %p203 = por %p201, %p202
      %p204 = scmp.ne.s32.totalorder %s192, %s193
      %p205 = scmp.eq.s32.totalorder %s36, 1
      %p206 = por %p204, %p205
      %p208 = scmp.ne.s32.totalorder %s193, %s207
      %p209 = scmp.eq.s32.totalorder %s36, 0
      %p210 = por %p208, %p209
      %s212 = sadd.s32 %s211, 1
      %p215 = scmp.eq.s32.totalorder %s30, 1
      %p216 = scmp.ne.s32.totalorder %s211, %s213
      %p217 = scmp.eq.s32.totalorder %s30, 0
      %p218 = por %p216, %p217
      %p219 = scmp.ne.s32.totalorder %s211, %s213
      %p220 = scmp.eq.s32.totalorder %s35, 1
      %p221 = por %p219, %p220
      %p222 = scmp.ne.s32.totalorder %s213, %s214
      %p223 = scmp.eq.s32.totalorder %s35, 0
      %p224 = por %p222, %p223
      %p225 = scmp.ne.s32.totalorder %s213, %s214
      %p226 = scmp.eq.s32.totalorder %s36, 1
      %p227 = por %p225, %p226
      %p229 = scmp.ne.s32.totalorder %s214, %s228
      %p230 = scmp.eq.s32.totalorder %s36, 0
      %p231 = por %p229, %p230
      %s233 = sadd.s32 %s232, 1
      %p236 = scmp.eq.s32.totalorder %s30, 1
      %p237 = scmp.ne.s32.totalorder %s232, %s234
      %p238 = scmp.eq.s32.totalorder %s30, 0
      %p239 = por %p237, %p238
      %p240 = scmp.ne.s32.totalorder %s232, %s234
      %p241 = scmp.eq.s32.totalorder %s35, 1
      %p242 = por %p240, %p241
      %p243 = scmp.ne.s32.totalorder %s234, %s235
      %p244 = scmp.eq.s32.totalorder %s35, 0
      %p245 = por %p243, %p244
      %p246 = scmp.ne.s32.totalorder %s234, %s235
      %p247 = scmp.eq.s32.totalorder %s36, 1
      %p248 = por %p246, %p247
      %p250 = scmp.ne.s32.totalorder %s235, %s249
      %p251 = scmp.eq.s32.totalorder %s36, 0
      %p252 = por %p250, %p251
      %s254 = sadd.s32 %s253, 1
      %p257 = scmp.eq.s32.totalorder %s30, 1
      %p258 = scmp.ne.s32.totalorder %s253, %s255
      %p259 = scmp.eq.s32.totalorder %s30, 0
      %p260 = por %p258, %p259
      %p261 = scmp.ne.s32.totalorder %s253, %s255
      %p262 = scmp.eq.s32.totalorder %s35, 1
      %p263 = por %p261, %p262
      %p264 = scmp.ne.s32.totalorder %s255, %s256
      %p265 = scmp.eq.s32.totalorder %s35, 0
      %p266 = por %p264, %p265
      %p267 = scmp.ne.s32.totalorder %s255, %s256
      %p268 = scmp.eq.s32.totalorder %s36, 1
      %p269 = por %p267, %p268
      %p271 = scmp.ne.s32.totalorder %s256, %s270
      %p272 = scmp.eq.s32.totalorder %s36, 0
      %p273 = por %p271, %p272
      %s275 = sadd.s32 %s274, 1
      %p278 = scmp.eq.s32.totalorder %s30, 1
      %p279 = scmp.ne.s32.totalorder %s274, %s276
      %p280 = scmp.eq.s32.totalorder %s30, 0
      %p281 = por %p279, %p280
      %p282 = scmp.ne.s32.totalorder %s274, %s276
      %p283 = scmp.eq.s32.totalorder %s35, 1
      %p284 = por %p282, %p283
      %p285 = scmp.ne.s32.totalorder %s276, %s277
      %p286 = scmp.eq.s32.totalorder %s35, 0
      %p287 = por %p285, %p286
      %p288 = scmp.ne.s32.totalorder %s276, %s277
      %p289 = scmp.eq.s32.totalorder %s36, 1
      %p290 = por %p288, %p289
      %p292 = scmp.ne.s32.totalorder %s277, %s291
      %p293 = scmp.eq.s32.totalorder %s36, 0
      %p294 = por %p292, %p293
      %s296 = sadd.s32 %s295, 1
      %p299 = scmp.eq.s32.totalorder %s30, 1
      %p300 = scmp.ne.s32.totalorder %s295, %s297
      %p301 = scmp.eq.s32.totalorder %s30, 0
      %p302 = por %p300, %p301
      %p303 = scmp.ne.s32.totalorder %s295, %s297
      %p304 = scmp.eq.s32.totalorder %s35, 1
      %p305 = por %p303, %p304
      %p306 = scmp.ne.s32.totalorder %s297, %s298
      %p307 = scmp.eq.s32.totalorder %s35, 0
      %p308 = por %p306, %p307
      %p309 = scmp.ne.s32.totalorder %s297, %s298
      %p310 = scmp.eq.s32.totalorder %s36, 1
      %p311 = por %p309, %p310
      %p313 = scmp.ne.s32.totalorder %s298, %s312
      %p314 = scmp.eq.s32.totalorder %s36, 0
      %p315 = por %p313, %p314
      %s316 = ssub.s32 %s30, %s37
      %p317 = scmp.eq.s32.totalorder %s316, 0
      %s319 = sadd.s32 %s318, 1
      %s320 = scalar_select %p317, %s318, %s319
      %p323 = pneg %p317
      %p324 = scmp.eq.s32.totalorder %s30, 1
      %p325 = por %p323, %p324
      %p326 = scmp.ne.s32.totalorder %s318, %s321
      %p327 = scmp.eq.s32.totalorder %s30, 0
      %p328 = por %p326, %p327
      %p329 = scmp.ne.s32.totalorder %s318, %s321
      %p330 = scmp.eq.s32.totalorder %s35, 1
      %p331 = por %p329, %p330
      %p332 = scmp.ne.s32.totalorder %s321, %s322
      %p333 = scmp.eq.s32.totalorder %s35, 0
      %p334 = por %p332, %p333
      %p335 = scmp.ne.s32.totalorder %s321, %s322
      %p336 = scmp.eq.s32.totalorder %s36, 1
      %p337 = por %p335, %p336
      %p339 = scmp.ne.s32.totalorder %s322, %s338
      %p340 = scmp.eq.s32.totalorder %s36, 0
      %p341 = por %p339, %p340
      %p342 = scmp.le.s32.totalorder 1, %s30
      %p343 = scmp.lt.s32.totalorder %s30, 3
      %p344 = pnand %p342, %p343
      %p345 = pneg %p344
      // Predicated region
      $region9: #{tpu_custom_call.1} parent=5 // pred_check
        _
      $region10: #{tpu_custom_call.1} parent=5 // pred_check_branch
        %347 = sbr.rel (%p344) target = $region12
      $region11: #{tpu_custom_call.1} parent=5 // pred_region
        %s348 = ssub.s32 %s30, 1
        // Predicated region
        $region13: #{tpu_custom_call.1} parent=11 // pred_check
          %p349 = pneg %p77
        $region14: #{tpu_custom_call.1} parent=11 // pred_check_branch
          %351 = sbr.rel (%p349) target = $region16
        $region15: #{tpu_custom_call.1} parent=11 // pred_region
          %s353 = ssub.s32 128, 128
          %354 = vsyncadd [#allocation7], %s353
          %s356 = sshll.u32 [#allocation6], 4
          %s357 = int_to_ptr.vmem [resolvable:$true] %s356
          %359 = dma.hbm_to_vmem [thread:$0]  %s1, 128, %s357, [#allocation7]
        $region16: #{tpu_custom_call.1} parent=11 // pred_fallthru
          _
        // Predicated region
        $region17: #{tpu_custom_call.1} parent=11 // pred_check
          %p360 = pneg %p98
        $region18: #{tpu_custom_call.1} parent=11 // pred_check_branch
          %362 = sbr.rel (%p360) target = $region20
        $region19: #{tpu_custom_call.1} parent=11 // pred_region
          %s364 = ssub.s32 24576, 24576
          %365 = vsyncadd [#allocation7], %s364
          %s366 = sshll.u32 [#allocation8], 4
          %s367 = int_to_ptr.vmem [resolvable:$true] %s366
          %372 = dma.hbm_to_vmem [thread:$0]  %s2, 24576, %s367, [#allocation7], 128, 128, 8
        $region20: #{tpu_custom_call.1} parent=11 // pred_fallthru
          _
        // Predicated region
        $region21: #{tpu_custom_call.1} parent=11 // pred_check
          %p373 = pneg %p119
        $region22: #{tpu_custom_call.1} parent=11 // pred_check_branch
          %375 = sbr.rel (%p373) target = $region24
        $region23: #{tpu_custom_call.1} parent=11 // pred_region
          %s377 = ssub.s32 8192, 8192
          %378 = vsyncadd [#allocation10], %s377
          %s379 = sshll.u32 [#allocation9], 4
          %s380 = int_to_ptr.vmem [resolvable:$true] %s379
          %385 = dma.hbm_to_vmem [thread:$0]  %s3, 8192, %s380, [#allocation10], 128, 128, 8
        $region24: #{tpu_custom_call.1} parent=11 // pred_fallthru
          _
        // Predicated region
        $region25: #{tpu_custom_call.1} parent=11 // pred_check
          %p386 = pneg %p140
        $region26: #{tpu_custom_call.1} parent=11 // pred_check_branch
          %388 = sbr.rel (%p386) target = $region28
        $region27: #{tpu_custom_call.1} parent=11 // pred_region
          %s390 = ssub.s32 16, 16
          %391 = vsyncadd [#allocation10], %s390
          %s393 = sshll.u32 [#allocation11], 4
          %s394 = int_to_ptr.vmem [resolvable:$true] %s393
          %396 = dma.hbm_to_vmem [thread:$0]  %s4, 16, %s394, [#allocation10]
        $region28: #{tpu_custom_call.1} parent=11 // pred_fallthru
          _
        // Predicated region
        $region29: #{tpu_custom_call.1} parent=11 // pred_check
          %p397 = pneg %p161
        $region30: #{tpu_custom_call.1} parent=11 // pred_check_branch
          %399 = sbr.rel (%p397) target = $region32
        $region31: #{tpu_custom_call.1} parent=11 // pred_region
          _
        $region32: #{tpu_custom_call.1} parent=11 // pred_fallthru
          _
        // Predicated region
        $region33: #{tpu_custom_call.1} parent=11 // pred_check
          %p400 = pneg %p182
        $region34: #{tpu_custom_call.1} parent=11 // pred_check_branch
          %402 = sbr.rel (%p400) target = $region36
        $region35: #{tpu_custom_call.1} parent=11 // pred_region
          _
        $region36: #{tpu_custom_call.1} parent=11 // pred_fallthru
          _
        // Predicated region
        $region37: #{tpu_custom_call.1} parent=11 // pred_check
          %p403 = pneg %p203
        $region38: #{tpu_custom_call.1} parent=11 // pred_check_branch
          %405 = sbr.rel (%p403) target = $region40
        $region39: #{tpu_custom_call.1} parent=11 // pred_region
          %s407 = ssub.s32 2048, 2048
          %408 = vsyncadd [#allocation13], %s407
          %s409 = sshll.u32 [#allocation12], 4
          %s410 = int_to_ptr.vmem [resolvable:$true] %s409
          %415 = dma.hbm_to_vmem [thread:$0]  %s7, 2048, %s410, [#allocation13], 128, 128, 8
        $region40: #{tpu_custom_call.1} parent=11 // pred_fallthru
          _
        // Predicated region
        $region41: #{tpu_custom_call.1} parent=11 // pred_check
          %p416 = pneg %p224
        $region42: #{tpu_custom_call.1} parent=11 // pred_check_branch
          %418 = sbr.rel (%p416) target = $region44
        $region43: #{tpu_custom_call.1} parent=11 // pred_region
          %s420 = ssub.s32 2048, 2048
          %421 = vsyncadd [#allocation13], %s420
          %s422 = sshll.u32 [#allocation14], 4
          %s423 = int_to_ptr.vmem [resolvable:$true] %s422
          %428 = dma.hbm_to_vmem [thread:$0]  %s8, 2048, %s423, [#allocation13], 128, 128, 8
        $region44: #{tpu_custom_call.1} parent=11 // pred_fallthru
          _
        // Predicated region
        $region45: #{tpu_custom_call.1} parent=11 // pred_check
          %p429 = pneg %p245
        $region46: #{tpu_custom_call.1} parent=11 // pred_check_branch
          %431 = sbr.rel (%p429) target = $region48
        $region47: #{tpu_custom_call.1} parent=11 // pred_region
          _
        $region48: #{tpu_custom_call.1} parent=11 // pred_fallthru
          _
        // Predicated region
        $region49: #{tpu_custom_call.1} parent=11 // pred_check
          %p432 = pneg %p266
        $region50: #{tpu_custom_call.1} parent=11 // pred_check_branch
          %434 = sbr.rel (%p432) target = $region52
        $region51: #{tpu_custom_call.1} parent=11 // pred_region
          %s436 = ssub.s32 4096, 4096
          %437 = vsyncadd [#allocation16], %s436
          %s438 = sshll.u32 [#allocation15], 4
          %s439 = int_to_ptr.vmem [resolvable:$true] %s438
          %444 = dma.hbm_to_vmem [thread:$0]  %s10, 4096, %s439, [#allocation16], 256, 256, 16
        $region52: #{tpu_custom_call.1} parent=11 // pred_fallthru
          _
        // Predicated region
        $region53: #{tpu_custom_call.1} parent=11 // pred_check
          %p445 = pneg %p287
        $region54: #{tpu_custom_call.1} parent=11 // pred_check_branch
          %447 = sbr.rel (%p445) target = $region56
        $region55: #{tpu_custom_call.1} parent=11 // pred_region
          _
        $region56: #{tpu_custom_call.1} parent=11 // pred_fallthru
          _
        // Predicated region
        $region57: #{tpu_custom_call.1} parent=11 // pred_check
          %p448 = pneg %p308
        $region58: #{tpu_custom_call.1} parent=11 // pred_check_branch
          %450 = sbr.rel (%p448) target = $region60
        $region59: #{tpu_custom_call.1} parent=11 // pred_region
          _
        $region60: #{tpu_custom_call.1} parent=11 // pred_fallthru
          _
      $region12: #{tpu_custom_call.1} parent=5 // pred_fallthru
        _
      %p451 = scmp.lt.s32.totalorder %s30, 2
      // Predicated region
      $region61: #{tpu_custom_call.1} parent=5 // pred_check
        %p452 = pneg %p451
      $region62: #{tpu_custom_call.1} parent=5 // pred_check_branch
        %454 = sbr.rel (%p452) target = $region64
      $region63: #{tpu_custom_call.1} parent=5 // pred_region
        // Predicated region
        $region65: #{tpu_custom_call.1} parent=63 // pred_check
          %p455 = pneg %p50
        $region66: #{tpu_custom_call.1} parent=63 // pred_check_branch
          %457 = sbr.rel (%p455) target = $region68
        $region67: #{tpu_custom_call.1} parent=63 // pred_region
          %s458 = sand.u32 %s40, 1
          %s459 = scalar_lea.sflag [#allocation4], %s458
          %s460 = sand.u32 %s40, 1
          %s461 = smul.addr %s460, 8
          %s462 = scalar_lea.vmem [#allocation3], %s461
          %s464 = ssub.s32 128, 128
          %465 = vsyncadd %s459, %s464
          %s466 = smul.addr %s30, 128
          %s467 = scalar_lea.hbm %s0, %s466
          %s469 = sshll.u32 %s462, 4
          %s470 = int_to_ptr.vmem [resolvable:$true] %s469
          %472 = dma.hbm_to_vmem [thread:$0]  %s467, 128, %s470, %s459
        $region68: #{tpu_custom_call.1} parent=63 // pred_fallthru
          _
      $region64: #{tpu_custom_call.1} parent=5 // pred_fallthru
        _
      %p473 = scmp.le.s32.totalorder 1, %s30
      %p474 = scmp.lt.s32.totalorder %s30, 3
      %p475 = pnand %p473, %p474
      %p476 = pneg %p475
      // Predicated region
      $region69: #{tpu_custom_call.1} parent=5 // pred_check
        _
      $region70: #{tpu_custom_call.1} parent=5 // pred_check_branch
        %478 = sbr.rel (%p475) target = $region72
      $region71: #{tpu_custom_call.1} parent=5 // pred_region
        %s479 = ssub.s32 %s30, 1
        %s480 = sand.u32 %s43, 1
        %s481 = scalar_lea.sflag [#allocation4], %s480
        %s482 = sand.u32 %s43, 1
        %s483 = smul.addr %s482, 8
        %s484 = scalar_lea.vmem [#allocation3], %s483
        // Predicated region
        $region73: #{tpu_custom_call.1} parent=71 // pred_check
          %p485 = pneg %p56
        $region74: #{tpu_custom_call.1} parent=71 // pred_check_branch
          %487 = sbr.rel (%p485) target = $region76
        $region75: #{tpu_custom_call.1} parent=71 // pred_region
          %488 = dma.done %s481, 128
        $region76: #{tpu_custom_call.1} parent=71 // pred_fallthru
          _
        // Predicated region
        $region77: #{tpu_custom_call.1} parent=71 // pred_check
          %p489 = pneg %p77
        $region78: #{tpu_custom_call.1} parent=71 // pred_check_branch
          %491 = sbr.rel (%p489) target = $region80
        $region79: #{tpu_custom_call.1} parent=71 // pred_region
          %492 = dma.done [#allocation7], 128
        $region80: #{tpu_custom_call.1} parent=71 // pred_fallthru
          _
        // Predicated region
        $region81: #{tpu_custom_call.1} parent=71 // pred_check
          %p493 = pneg %p98
        $region82: #{tpu_custom_call.1} parent=71 // pred_check_branch
          %495 = sbr.rel (%p493) target = $region84
        $region83: #{tpu_custom_call.1} parent=71 // pred_region
          %496 = dma.done [#allocation7], 24576
        $region84: #{tpu_custom_call.1} parent=71 // pred_fallthru
          _
        // Predicated region
        $region85: #{tpu_custom_call.1} parent=71 // pred_check
          %p497 = pneg %p119
        $region86: #{tpu_custom_call.1} parent=71 // pred_check_branch
          %499 = sbr.rel (%p497) target = $region88
        $region87: #{tpu_custom_call.1} parent=71 // pred_region
          %500 = dma.done [#allocation10], 8192
        $region88: #{tpu_custom_call.1} parent=71 // pred_fallthru
          _
        // Predicated region
        $region89: #{tpu_custom_call.1} parent=71 // pred_check
          %p501 = pneg %p140
        $region90: #{tpu_custom_call.1} parent=71 // pred_check_branch
          %503 = sbr.rel (%p501) target = $region92
        $region91: #{tpu_custom_call.1} parent=71 // pred_region
          %504 = dma.done [#allocation10], 16
        $region92: #{tpu_custom_call.1} parent=71 // pred_fallthru
          _
        // Predicated region
        $region93: #{tpu_custom_call.1} parent=71 // pred_check
          %p505 = pneg %p203
        $region94: #{tpu_custom_call.1} parent=71 // pred_check_branch
          %507 = sbr.rel (%p505) target = $region96
        $region95: #{tpu_custom_call.1} parent=71 // pred_region
          %508 = dma.done [#allocation13], 2048
        $region96: #{tpu_custom_call.1} parent=71 // pred_fallthru
          _
        // Predicated region
        $region97: #{tpu_custom_call.1} parent=71 // pred_check
          %p509 = pneg %p224
        $region98: #{tpu_custom_call.1} parent=71 // pred_check_branch
          %511 = sbr.rel (%p509) target = $region100
        $region99: #{tpu_custom_call.1} parent=71 // pred_region
          %512 = dma.done [#allocation13], 2048
        $region100: #{tpu_custom_call.1} parent=71 // pred_fallthru
          _
        // Predicated region
        $region101: #{tpu_custom_call.1} parent=71 // pred_check
          %p513 = pneg %p266
        $region102: #{tpu_custom_call.1} parent=71 // pred_check_branch
          %515 = sbr.rel (%p513) target = $region104
        $region103: #{tpu_custom_call.1} parent=71 // pred_region
          %516 = dma.done [#allocation16], 4096
        $region104: #{tpu_custom_call.1} parent=71 // pred_fallthru
          _
        %s517 = sand.u32 %s43, 1
        %s518 = scalar_lea.sflag [#allocation4], %s517
        %s519 = sand.u32 %s43, 1
        %s520 = smul.addr %s519, 8
        %s521 = scalar_lea.vmem [#allocation3], %s520
        %p522 = pneg %p56
        %p523 = pneg %p53
        %p524 = pneg %p77
        %p525 = pneg %p74
        %p526 = pneg %p98
        %p527 = pneg %p95
        %p528 = pneg %p119
        %p529 = pneg %p116
        %p530 = pneg %p140
        %p531 = pneg %p137
        %p532 = pneg %p161
        %p533 = pneg %p158
        %p534 = pneg %p182
        %p535 = pneg %p179
        %p536 = pneg %p203
        %p537 = pneg %p200
        %p538 = pneg %p224
        %p539 = pneg %p221
        %p540 = pneg %p245
        %p541 = pneg %p242
        %p542 = pneg %p266
        %p543 = pneg %p263
        %p544 = pneg %p287
        %p545 = pneg %p284
        %p546 = pneg %p308
        %p547 = pneg %p305
        %p548 = pneg %p334
        %p549 = pneg %p331
        %s550 = sand.u32 %s321, 1
        %s551 = scalar_lea.sflag [#allocation5], %s550
        %s552 = sand.u32 %s321, 1
        %s553 = smul.addr %s552, 8
        %s554 = scalar_lea.vmem [#allocation17], %s553
        %v555 = vld [vmem:[%s484] sm:$0xff]
        %v556 = vld [vmem:[#allocation6] sm:$0xff]
        %v557 = vlaneseq
        %v558 = vshrl.u32 %v557, 7
        %vm559 = vcmp.lt.s32.totalorder %v558, 8
        %v560 = vmul.f32 %v555, %v555
        %561 = vadd.xlane.f32.xlu0 %v560
        %v562 = vpop.xlane.xlu0 %561
        %v563 = vrot.slane %v562, 4
        %v564 = vadd.f32 %v562, %v563
        %v565 = vrot.slane %v564, 2
        %v566 = vadd.f32 %v564, %v565
        %v567 = vrot.slane %v566, 1
        %v568 = vadd.f32 %v566, %v567
        %s569 = vtos %v568
        %s570 = smul.f32 %s569, 0.00390625
        %v571 = vstv %s570
        %v572 = vrsqrt.pop %v571
        %s573 = vtos %v572
        %v574 = vstv %s573
        %v575 = vmul.f32 %v555, %v574
        %v576 = vmul.f32 %v556, %v575
        %v577 = vld [vmem:[%s5] sm:$0xff]
        %v578 = vld [vmem:[%s6] sm:$0xff]
        %v579 = vld [vmem:[#allocation12] sm:$0xff]
        %v580 = vld [vmem:[#allocation12 + $0x8] sm:$0xff]
        %v581 = vld [vmem:[#allocation12 + $0x10] sm:$0xff]
        %v582 = vld [vmem:[#allocation12 + $0x18] sm:$0xff]
        %v583 = vld [vmem:[#allocation12 + $0x20] sm:$0xff]
        %v584 = vld [vmem:[#allocation12 + $0x28] sm:$0xff]
        %v585 = vld [vmem:[#allocation12 + $0x30] sm:$0xff]
        %v586 = vld [vmem:[#allocation12 + $0x38] sm:$0xff]
        %v587 = vld [vmem:[#allocation12 + $0x40] sm:$0xff]
        %v588 = vld [vmem:[#allocation12 + $0x48] sm:$0xff]
        %v589 = vld [vmem:[#allocation12 + $0x50] sm:$0xff]
        %v590 = vld [vmem:[#allocation12 + $0x58] sm:$0xff]
        %v591 = vld [vmem:[#allocation12 + $0x60] sm:$0xff]
        %v592 = vld [vmem:[#allocation12 + $0x68] sm:$0xff]
        %v593 = vld [vmem:[#allocation12 + $0x70] sm:$0xff]
        %v594 = vld [vmem:[#allocation12 + $0x78] sm:$0xff]
        %v595 = vlaneseq
        %v596 = vand.u32 %v595, 127
        %vm597 = vcmp.le.s32.totalorder %v596, %v558
        %vm598 = vcmp.lt.s32.totalorder %v596, 8
        %vm599 = vmand %vm597, %vm598
        %v600 = vld [vmem:[#allocation8] sm:$0xff]
        %v601 = vld [vmem:[#allocation8 + $0x8] sm:$0xff]
        %v602 = vld [vmem:[#allocation8 + $0x10] sm:$0xff]
        %v603 = vld [vmem:[#allocation8 + $0x18] sm:$0xff]
        %v604 = vld [vmem:[#allocation8 + $0x20] sm:$0xff]
        %v605 = vld [vmem:[#allocation8 + $0x28] sm:$0xff]
        %v606 = vld [vmem:[#allocation8 + $0x30] sm:$0xff]
        %v607 = vld [vmem:[#allocation8 + $0x38] sm:$0xff]
        %v608 = vld [vmem:[#allocation8 + $0x40] sm:$0xff]
        %v609 = vld [vmem:[#allocation8 + $0x48] sm:$0xff]
        %v610 = vld [vmem:[#allocation8 + $0x50] sm:$0xff]
        %v611 = vld [vmem:[#allocation8 + $0x58] sm:$0xff]
        %v612 = vld [vmem:[#allocation8 + $0x60] sm:$0xff]
        %v613 = vld [vmem:[#allocation8 + $0x68] sm:$0xff]
        %v614 = vld [vmem:[#allocation8 + $0x70] sm:$0xff]
        %v615 = vld [vmem:[#allocation8 + $0x78] sm:$0xff]
        %616 = vmatprep.subr.mxu0 0.0
        %617 = vmatpush1.msra.mxu0 %v600
        %618 = vmatprep.subr.mxu0 0.0
        %619 = vmatpush1.msra.mxu0 %v601
        %620 = vmatprep.subr.mxu0 0.0
        %621 = vmatpush1.msra.mxu0 %v602
        %622 = vmatprep.subr.mxu0 0.0
        %623 = vmatpush1.msra.mxu0 %v603
        %624 = vmatprep.subr.mxu0 0.0
        %625 = vmatpush1.msra.mxu0 %v604
        %626 = vmatprep.subr.mxu0 0.0
        %627 = vmatpush1.msra.mxu0 %v605
        %628 = vmatprep.subr.mxu0 0.0
        %629 = vmatpush1.msra.mxu0 %v606
        %630 = vmatprep.subr.mxu0 0.0
        %631 = vmatpush1.msra.mxu0 %v607
        %632 = vmatprep.subr.mxu0 0.0
        %633 = vmatpush1.msra.mxu0 %v608
        %634 = vmatprep.subr.mxu0 0.0
        %635 = vmatpush1.msra.mxu0 %v609
        %636 = vmatprep.subr.mxu0 0.0
        %637 = vmatpush1.msra.mxu0 %v610
        %638 = vmatprep.subr.mxu0 0.0
        %639 = vmatpush1.msra.mxu0 %v611
        %640 = vmatprep.subr.mxu0 0.0
        %641 = vmatpush1.msra.mxu0 %v612
        %642 = vmatprep.subr.mxu0 0.0
        %643 = vmatpush1.msra.mxu0 %v613
        %644 = vmatprep.subr.mxu0 0.0
        %645 = vmatpush1.msra.mxu0 %v614
        %646 = vmatprep.subr.mxu0 0.0
        %647 = vmatpush1.msra.mxu0 %v615
        %648 = vmatprep.subr.mxu0 0.0
        %649 = vmatpush1.msra.mxu0 0.0
        %650 = vmatprep.subr.mxu0 0.0
        %651 = vmatpush1.msra.mxu0 0.0
        %652 = vmatprep.subr.mxu0 0.0
        %653 = vmatpush1.msra.mxu0 0.0
        %654 = vmatprep.subr.mxu0 0.0
        %655 = vmatpush1.msra.mxu0 0.0
        %656 = vmatprep.subr.mxu0 0.0
        %657 = vmatpush1.msra.mxu0 0.0
        %658 = vmatprep.subr.mxu0 0.0
        %659 = vmatpush1.msra.mxu0 0.0
        %660 = vmatprep.subr.mxu0 0.0
        %661 = vmatpush1.msra.mxu0 0.0
        %662 = vmatprep.subr.mxu0 0.0
        %663 = vmatpush1.msra.mxu0 0.0
        %664 = vmatprep.subr.mxu0 0.0
        %665 = vmatpush1.msra.mxu0 0.0
        %666 = vmatprep.subr.mxu0 0.0
        %667 = vmatpush1.msra.mxu0 0.0
        %668 = vmatprep.subr.mxu0 0.0
        %669 = vmatpush1.msra.mxu0 0.0
        %670 = vmatprep.subr.mxu0 0.0
        %671 = vmatpush1.msra.mxu0 0.0
        %672 = vmatprep.subr.mxu0 0.0
        %673 = vmatpush1.msra.mxu0 0.0
        %674 = vmatprep.subr.mxu0 0.0
        %675 = vmatpush1.msra.mxu0 0.0
        %676 = vmatprep.subr.mxu0 0.0
        %677 = vmatpush1.msra.mxu0 0.0
        %678 = vmatprep.subr.mxu0 0.0
        %679 = vmatpush1.msra.mxu0 0.0
        %680 = vmatprep.mubr.f32.mxu0 0.0
        %681 = vmatmul.mubr.f32.gmra.mrb[0].mxu0 %v576
        %v682 = vpop.f32.mrb[0].mxu0
        %v683 = vadd.f32 0.0, %v682
        %v684 = vpop.f32.mrb[0].mxu0
        %685 = vdwg.mxu0
        %v686 = vmul.f32 %v683, %v577
        %687 = vmatprep.subr.mxu0 0.0
        %688 = vmatpush1.msra.mxu0 %v579
        %689 = vmatprep.subr.mxu0 0.0
        %690 = vmatpush1.msra.mxu0 %v580
        %691 = vmatprep.subr.mxu0 0.0
        %692 = vmatpush1.msra.mxu0 %v581
        %693 = vmatprep.subr.mxu0 0.0
        %694 = vmatpush1.msra.mxu0 %v582
        %695 = vmatprep.subr.mxu0 0.0
        %696 = vmatpush1.msra.mxu0 %v583
        %697 = vmatprep.subr.mxu0 0.0
        %698 = vmatpush1.msra.mxu0 %v584
        %699 = vmatprep.subr.mxu0 0.0
        %700 = vmatpush1.msra.mxu0 %v585
        %701 = vmatprep.subr.mxu0 0.0
        %702 = vmatpush1.msra.mxu0 %v586
        %703 = vmatprep.subr.mxu0 0.0
        %704 = vmatpush1.msra.mxu0 %v587
        %705 = vmatprep.subr.mxu0 0.0
        %706 = vmatpush1.msra.mxu0 %v588
        %707 = vmatprep.subr.mxu0 0.0
        %708 = vmatpush1.msra.mxu0 %v589
        %709 = vmatprep.subr.mxu0 0.0
        %710 = vmatpush1.msra.mxu0 %v590
        %711 = vmatprep.subr.mxu0 0.0
        %712 = vmatpush1.msra.mxu0 %v591
        %713 = vmatprep.subr.mxu0 0.0
        %714 = vmatpush1.msra.mxu0 %v592
        %715 = vmatprep.subr.mxu0 0.0
        %716 = vmatpush1.msra.mxu0 %v593
        %717 = vmatprep.subr.mxu0 0.0
        %718 = vmatpush1.msra.mxu0 %v594
        %719 = vmatprep.subr.mxu0 0.0
        %720 = vmatpush1.msra.mxu0 0.0
        %721 = vmatprep.subr.mxu0 0.0
        %722 = vmatpush1.msra.mxu0 0.0
        %723 = vmatprep.subr.mxu0 0.0
        %724 = vmatpush1.msra.mxu0 0.0
        %725 = vmatprep.subr.mxu0 0.0
        %726 = vmatpush1.msra.mxu0 0.0
        %727 = vmatprep.subr.mxu0 0.0
        %728 = vmatpush1.msra.mxu0 0.0
        %729 = vmatprep.subr.mxu0 0.0
        %730 = vmatpush1.msra.mxu0 0.0
        %731 = vmatprep.subr.mxu0 0.0
        %732 = vmatpush1.msra.mxu0 0.0
        %733 = vmatprep.subr.mxu0 0.0
        %734 = vmatpush1.msra.mxu0 0.0
        %735 = vmatprep.subr.mxu0 0.0
        %736 = vmatpush1.msra.mxu0 0.0
        %737 = vmatprep.subr.mxu0 0.0
        %738 = vmatpush1.msra.mxu0 0.0
        %739 = vmatprep.subr.mxu0 0.0
        %740 = vmatpush1.msra.mxu0 0.0
        %741 = vmatprep.subr.mxu0 0.0
        %742 = vmatpush1.msra.mxu0 0.0
        %743 = vmatprep.subr.mxu0 0.0
        %744 = vmatpush1.msra.mxu0 0.0
        %745 = vmatprep.subr.mxu0 0.0
        %746 = vmatpush1.msra.mxu0 0.0
        %747 = vmatprep.subr.mxu0 0.0
        %748 = vmatpush1.msra.mxu0 0.0
        %749 = vmatprep.subr.mxu0 0.0
        %750 = vmatpush1.msra.mxu0 0.0
        %751 = vmatprep.mubr.f32.mxu0 0.0
        %752 = vmatmul.mubr.f32.gmra.mrb[0].mxu0 %v683
        %v753 = vpop.f32.mrb[0].mxu0
        %v754 = vadd.f32 0.0, %v753
        %v755 = vpop.f32.mrb[0].mxu0
        %756 = vdwg.mxu0
        %v757 = vmul.f32 %v754, %v578
        %v758 = vadd.f32 %v686, %v757
        %s759 = scalar_lea.vmem [#allocation8], 512
        %v760 = vld [vmem:[%s759] sm:$0xff]
        %v761 = vld [vmem:[%s759 + $0x8] sm:$0xff]
        %v762 = vld [vmem:[%s759 + $0x10] sm:$0xff]
        %v763 = vld [vmem:[%s759 + $0x18] sm:$0xff]
        %v764 = vld [vmem:[%s759 + $0x20] sm:$0xff]
        %v765 = vld [vmem:[%s759 + $0x28] sm:$0xff]
        %v766 = vld [vmem:[%s759 + $0x30] sm:$0xff]
        %v767 = vld [vmem:[%s759 + $0x38] sm:$0xff]
        %v768 = vld [vmem:[%s759 + $0x40] sm:$0xff]
        %v769 = vld [vmem:[%s759 + $0x48] sm:$0xff]
        %v770 = vld [vmem:[%s759 + $0x50] sm:$0xff]
        %v771 = vld [vmem:[%s759 + $0x58] sm:$0xff]
        %v772 = vld [vmem:[%s759 + $0x60] sm:$0xff]
        %v773 = vld [vmem:[%s759 + $0x68] sm:$0xff]
        %v774 = vld [vmem:[%s759 + $0x70] sm:$0xff]
        %v775 = vld [vmem:[%s759 + $0x78] sm:$0xff]
        %776 = vmatprep.subr.mxu0 0.0
        %777 = vmatpush1.msra.mxu0 %v760
        %778 = vmatprep.subr.mxu0 0.0
        %779 = vmatpush1.msra.mxu0 %v761
        %780 = vmatprep.subr.mxu0 0.0
        %781 = vmatpush1.msra.mxu0 %v762
        %782 = vmatprep.subr.mxu0 0.0
        %783 = vmatpush1.msra.mxu0 %v763
        %784 = vmatprep.subr.mxu0 0.0
        %785 = vmatpush1.msra.mxu0 %v764
        %786 = vmatprep.subr.mxu0 0.0
        %787 = vmatpush1.msra.mxu0 %v765
        %788 = vmatprep.subr.mxu0 0.0
        %789 = vmatpush1.msra.mxu0 %v766
        %790 = vmatprep.subr.mxu0 0.0
        %791 = vmatpush1.msra.mxu0 %v767
        %792 = vmatprep.subr.mxu0 0.0
        %793 = vmatpush1.msra.mxu0 %v768
        %794 = vmatprep.subr.mxu0 0.0
        %795 = vmatpush1.msra.mxu0 %v769
        %796 = vmatprep.subr.mxu0 0.0
        %797 = vmatpush1.msra.mxu0 %v770
        %798 = vmatprep.subr.mxu0 0.0
        %799 = vmatpush1.msra.mxu0 %v771
        %800 = vmatprep.subr.mxu0 0.0
        %801 = vmatpush1.msra.mxu0 %v772
        %802 = vmatprep.subr.mxu0 0.0
        %803 = vmatpush1.msra.mxu0 %v773
        %804 = vmatprep.subr.mxu0 0.0
        %805 = vmatpush1.msra.mxu0 %v774
        %806 = vmatprep.subr.mxu0 0.0
        %807 = vmatpush1.msra.mxu0 %v775
        %808 = vmatprep.subr.mxu0 0.0
        %809 = vmatpush1.msra.mxu0 0.0
        %810 = vmatprep.subr.mxu0 0.0
        %811 = vmatpush1.msra.mxu0 0.0
        %812 = vmatprep.subr.mxu0 0.0
        %813 = vmatpush1.msra.mxu0 0.0
        %814 = vmatprep.subr.mxu0 0.0
        %815 = vmatpush1.msra.mxu0 0.0
        %816 = vmatprep.subr.mxu0 0.0
        %817 = vmatpush1.msra.mxu0 0.0
        %818 = vmatprep.subr.mxu0 0.0
        %819 = vmatpush1.msra.mxu0 0.0
        %820 = vmatprep.subr.mxu0 0.0
        %821 = vmatpush1.msra.mxu0 0.0
        %822 = vmatprep.subr.mxu0 0.0
        %823 = vmatpush1.msra.mxu0 0.0
        %824 = vmatprep.subr.mxu0 0.0
        %825 = vmatpush1.msra.mxu0 0.0
        %826 = vmatprep.subr.mxu0 0.0
        %827 = vmatpush1.msra.mxu0 0.0
        %828 = vmatprep.subr.mxu0 0.0
        %829 = vmatpush1.msra.mxu0 0.0
        %830 = vmatprep.subr.mxu0 0.0
        %831 = vmatpush1.msra.mxu0 0.0
        %832 = vmatprep.subr.mxu0 0.0
        %833 = vmatpush1.msra.mxu0 0.0
        %834 = vmatprep.subr.mxu0 0.0
        %835 = vmatpush1.msra.mxu0 0.0
        %836 = vmatprep.subr.mxu0 0.0
        %837 = vmatpush1.msra.mxu0 0.0
        %838 = vmatprep.subr.mxu0 0.0
        %839 = vmatpush1.msra.mxu0 0.0
        %840 = vmatprep.mubr.f32.mxu0 0.0
        %841 = vmatmul.mubr.f32.gmra.mrb[0].mxu0 %v576
        %v842 = vpop.f32.mrb[0].mxu0
        %v843 = vadd.f32 0.0, %v842
        %v844 = vpop.f32.mrb[0].mxu0
        %845 = vdwg.mxu0
        %v846 = vmul.f32 %v843, %v577
        %847 = vmatprep.subr.mxu0 0.0
        %848 = vmatpush1.msra.mxu0 %v579
        %849 = vmatprep.subr.mxu0 0.0
        %850 = vmatpush1.msra.mxu0 %v580
        %851 = vmatprep.subr.mxu0 0.0
        %852 = vmatpush1.msra.mxu0 %v581
        %853 = vmatprep.subr.mxu0 0.0
        %854 = vmatpush1.msra.mxu0 %v582
        %855 = vmatprep.subr.mxu0 0.0
        %856 = vmatpush1.msra.mxu0 %v583
        %857 = vmatprep.subr.mxu0 0.0
        %858 = vmatpush1.msra.mxu0 %v584
        %859 = vmatprep.subr.mxu0 0.0
        %860 = vmatpush1.msra.mxu0 %v585
        %861 = vmatprep.subr.mxu0 0.0
        %862 = vmatpush1.msra.mxu0 %v586
        %863 = vmatprep.subr.mxu0 0.0
        %864 = vmatpush1.msra.mxu0 %v587
        %865 = vmatprep.subr.mxu0 0.0
        %866 = vmatpush1.msra.mxu0 %v588
        %867 = vmatprep.subr.mxu0 0.0
        %868 = vmatpush1.msra.mxu0 %v589
        %869 = vmatprep.subr.mxu0 0.0
        %870 = vmatpush1.msra.mxu0 %v590
        %871 = vmatprep.subr.mxu0 0.0
        %872 = vmatpush1.msra.mxu0 %v591
        %873 = vmatprep.subr.mxu0 0.0
        %874 = vmatpush1.msra.mxu0 %v592
        %875 = vmatprep.subr.mxu0 0.0
        %876 = vmatpush1.msra.mxu0 %v593
        %877 = vmatprep.subr.mxu0 0.0
        %878 = vmatpush1.msra.mxu0 %v594
        %879 = vmatprep.subr.mxu0 0.0
        %880 = vmatpush1.msra.mxu0 0.0
        %881 = vmatprep.subr.mxu0 0.0
        %882 = vmatpush1.msra.mxu0 0.0
        %883 = vmatprep.subr.mxu0 0.0
        %884 = vmatpush1.msra.mxu0 0.0
        %885 = vmatprep.subr.mxu0 0.0
        %886 = vmatpush1.msra.mxu0 0.0
        %887 = vmatprep.subr.mxu0 0.0
        %888 = vmatpush1.msra.mxu0 0.0
        %889 = vmatprep.subr.mxu0 0.0
        %890 = vmatpush1.msra.mxu0 0.0
        %891 = vmatprep.subr.mxu0 0.0
        %892 = vmatpush1.msra.mxu0 0.0
        %893 = vmatprep.subr.mxu0 0.0
        %894 = vmatpush1.msra.mxu0 0.0
        %895 = vmatprep.subr.mxu0 0.0
        %896 = vmatpush1.msra.mxu0 0.0
        %897 = vmatprep.subr.mxu0 0.0
        %898 = vmatpush1.msra.mxu0 0.0
        %899 = vmatprep.subr.mxu0 0.0
        %900 = vmatpush1.msra.mxu0 0.0
        %901 = vmatprep.subr.mxu0 0.0
        %902 = vmatpush1.msra.mxu0 0.0
        %903 = vmatprep.subr.mxu0 0.0
        %904 = vmatpush1.msra.mxu0 0.0
        %905 = vmatprep.subr.mxu0 0.0
        %906 = vmatpush1.msra.mxu0 0.0
        %907 = vmatprep.subr.mxu0 0.0
        %908 = vmatpush1.msra.mxu0 0.0
        %909 = vmatprep.subr.mxu0 0.0
        %910 = vmatpush1.msra.mxu0 0.0
        %911 = vmatprep.mubr.f32.mxu0 0.0
        %912 = vmatmul.mubr.f32.gmra.mrb[0].mxu0 %v843
        %v913 = vpop.f32.mrb[0].mxu0
        %v914 = vadd.f32 0.0, %v913
        %v915 = vpop.f32.mrb[0].mxu0
        %916 = vdwg.mxu0
        %v917 = vmul.f32 %v914, %v578
        %v918 = vadd.f32 %v846, %v917
        %s919 = scalar_lea.vmem [#allocation8], 1024
        %v920 = vld [vmem:[%s919] sm:$0xff]
        %v921 = vld [vmem:[%s919 + $0x8] sm:$0xff]
        %v922 = vld [vmem:[%s919 + $0x10] sm:$0xff]
        %v923 = vld [vmem:[%s919 + $0x18] sm:$0xff]
        %v924 = vld [vmem:[%s919 + $0x20] sm:$0xff]
        %v925 = vld [vmem:[%s919 + $0x28] sm:$0xff]
        %v926 = vld [vmem:[%s919 + $0x30] sm:$0xff]
        %v927 = vld [vmem:[%s919 + $0x38] sm:$0xff]
        %v928 = vld [vmem:[%s919 + $0x40] sm:$0xff]
        %v929 = vld [vmem:[%s919 + $0x48] sm:$0xff]
        %v930 = vld [vmem:[%s919 + $0x50] sm:$0xff]
        %v931 = vld [vmem:[%s919 + $0x58] sm:$0xff]
        %v932 = vld [vmem:[%s919 + $0x60] sm:$0xff]
        %v933 = vld [vmem:[%s919 + $0x68] sm:$0xff]
        %v934 = vld [vmem:[%s919 + $0x70] sm:$0xff]
        %v935 = vld [vmem:[%s919 + $0x78] sm:$0xff]
        %936 = vmatprep.subr.mxu0 0.0
        %937 = vmatpush1.msra.mxu0 %v920
        %938 = vmatprep.subr.mxu0 0.0
        %939 = vmatpush1.msra.mxu0 %v921
        %940 = vmatprep.subr.mxu0 0.0
        %941 = vmatpush1.msra.mxu0 %v922
        %942 = vmatprep.subr.mxu0 0.0
        %943 = vmatpush1.msra.mxu0 %v923
        %944 = vmatprep.subr.mxu0 0.0
        %945 = vmatpush1.msra.mxu0 %v924
        %946 = vmatprep.subr.mxu0 0.0
        %947 = vmatpush1.msra.mxu0 %v925
        %948 = vmatprep.subr.mxu0 0.0
        %949 = vmatpush1.msra.mxu0 %v926
        %950 = vmatprep.subr.mxu0 0.0
        %951 = vmatpush1.msra.mxu0 %v927
        %952 = vmatprep.subr.mxu0 0.0
        %953 = vmatpush1.msra.mxu0 %v928
        %954 = vmatprep.subr.mxu0 0.0
        %955 = vmatpush1.msra.mxu0 %v929
        %956 = vmatprep.subr.mxu0 0.0
        %957 = vmatpush1.msra.mxu0 %v930
        %958 = vmatprep.subr.mxu0 0.0
        %959 = vmatpush1.msra.mxu0 %v931
        %960 = vmatprep.subr.mxu0 0.0
        %961 = vmatpush1.msra.mxu0 %v932
        %962 = vmatprep.subr.mxu0 0.0
        %963 = vmatpush1.msra.mxu0 %v933
        %964 = vmatprep.subr.mxu0 0.0
        %965 = vmatpush1.msra.mxu0 %v934
        %966 = vmatprep.subr.mxu0 0.0
        %967 = vmatpush1.msra.mxu0 %v935
        %968 = vmatprep.subr.mxu0 0.0
        %969 = vmatpush1.msra.mxu0 0.0
        %970 = vmatprep.subr.mxu0 0.0
        %971 = vmatpush1.msra.mxu0 0.0
        %972 = vmatprep.subr.mxu0 0.0
        %973 = vmatpush1.msra.mxu0 0.0
        %974 = vmatprep.subr.mxu0 0.0
        %975 = vmatpush1.msra.mxu0 0.0
        %976 = vmatprep.subr.mxu0 0.0
        %977 = vmatpush1.msra.mxu0 0.0
        %978 = vmatprep.subr.mxu0 0.0
        %979 = vmatpush1.msra.mxu0 0.0
        %980 = vmatprep.subr.mxu0 0.0
        %981 = vmatpush1.msra.mxu0 0.0
        %982 = vmatprep.subr.mxu0 0.0
        %983 = vmatpush1.msra.mxu0 0.0
        %984 = vmatprep.subr.mxu0 0.0
        %985 = vmatpush1.msra.mxu0 0.0
        %986 = vmatprep.subr.mxu0 0.0
        %987 = vmatpush1.msra.mxu0 0.0
        %988 = vmatprep.subr.mxu0 0.0
        %989 = vmatpush1.msra.mxu0 0.0
        %990 = vmatprep.subr.mxu0 0.0
        %991 = vmatpush1.msra.mxu0 0.0
        %992 = vmatprep.subr.mxu0 0.0
        %993 = vmatpush1.msra.mxu0 0.0
        %994 = vmatprep.subr.mxu0 0.0
        %995 = vmatpush1.msra.mxu0 0.0
        %996 = vmatprep.subr.mxu0 0.0
        %997 = vmatpush1.msra.mxu0 0.0
        %998 = vmatprep.subr.mxu0 0.0
        %999 = vmatpush1.msra.mxu0 0.0
        %1000 = vmatprep.mubr.f32.mxu0 0.0
        %1001 = vmatmul.mubr.f32.gmra.mrb[0].mxu0 %v576
        %v1002 = vpop.f32.mrb[0].mxu0
        %v1003 = vadd.f32 0.0, %v1002
        %v1004 = vpop.f32.mrb[0].mxu0
        %1005 = vdwg.mxu0
        %1006 = vmatprep.subr.mxu0 0.0
        %1007 = vmatpush1.xpose.msra.mxu0 %v918
        %1008 = vmatprep.subr.mxu0 0.0
        %1009 = vmatpush1.xpose.msra.mxu0 0.0
        %1010 = vmatprep.subr.mxu0 0.0
        %1011 = vmatpush1.xpose.msra.mxu0 0.0
        %1012 = vmatprep.subr.mxu0 0.0
        %1013 = vmatpush1.xpose.msra.mxu0 0.0
        %1014 = vmatprep.subr.mxu0 0.0
        %1015 = vmatpush1.xpose.msra.mxu0 0.0
        %1016 = vmatprep.subr.mxu0 0.0
        %1017 = vmatpush1.xpose.msra.mxu0 0.0
        %1018 = vmatprep.subr.mxu0 0.0
        %1019 = vmatpush1.xpose.msra.mxu0 0.0
        %1020 = vmatprep.subr.mxu0 0.0
        %1021 = vmatpush1.xpose.msra.mxu0 0.0
        %1022 = vmatprep.subr.mxu0 0.0
        %1023 = vmatpush1.xpose.msra.mxu0 0.0
        %1024 = vmatprep.subr.mxu0 0.0
        %1025 = vmatpush1.xpose.msra.mxu0 0.0
        %1026 = vmatprep.subr.mxu0 0.0
        %1027 = vmatpush1.xpose.msra.mxu0 0.0
        %1028 = vmatprep.subr.mxu0 0.0
        %1029 = vmatpush1.xpose.msra.mxu0 0.0
        %1030 = vmatprep.subr.mxu0 0.0
        %1031 = vmatpush1.xpose.msra.mxu0 0.0
        %1032 = vmatprep.subr.mxu0 0.0
        %1033 = vmatpush1.xpose.msra.mxu0 0.0
        %1034 = vmatprep.subr.mxu0 0.0
        %1035 = vmatpush1.xpose.msra.mxu0 0.0
        %1036 = vmatprep.subr.mxu0 0.0
        %1037 = vmatpush1.xpose.msra.mxu0 0.0
        %1038 = vmatprep.subr.mxu0 0.0
        %1039 = vmatpush1.xpose.msra.mxu0 0.0
        %1040 = vmatprep.subr.mxu0 0.0
        %1041 = vmatpush1.xpose.msra.mxu0 0.0
        %1042 = vmatprep.subr.mxu0 0.0
        %1043 = vmatpush1.xpose.msra.mxu0 0.0
        %1044 = vmatprep.subr.mxu0 0.0
        %1045 = vmatpush1.xpose.msra.mxu0 0.0
        %1046 = vmatprep.subr.mxu0 0.0
        %1047 = vmatpush1.xpose.msra.mxu0 0.0
        %1048 = vmatprep.subr.mxu0 0.0
        %1049 = vmatpush1.xpose.msra.mxu0 0.0
        %1050 = vmatprep.subr.mxu0 0.0
        %1051 = vmatpush1.xpose.msra.mxu0 0.0
        %1052 = vmatprep.subr.mxu0 0.0
        %1053 = vmatpush1.xpose.msra.mxu0 0.0
        %1054 = vmatprep.subr.mxu0 0.0
        %1055 = vmatpush1.xpose.msra.mxu0 0.0
        %1056 = vmatprep.subr.mxu0 0.0
        %1057 = vmatpush1.xpose.msra.mxu0 0.0
        %1058 = vmatprep.subr.mxu0 0.0
        %1059 = vmatpush1.xpose.msra.mxu0 0.0
        %1060 = vmatprep.subr.mxu0 0.0
        %1061 = vmatpush1.xpose.msra.mxu0 0.0
        %1062 = vmatprep.subr.mxu0 0.0
        %1063 = vmatpush1.xpose.msra.mxu0 0.0
        %1064 = vmatprep.subr.mxu0 0.0
        %1065 = vmatpush1.xpose.msra.mxu0 0.0
        %1066 = vmatprep.subr.mxu0 0.0
        %1067 = vmatpush1.xpose.msra.mxu0 0.0
        %1068 = vmatprep.subr.mxu0 0.0
        %1069 = vmatpush1.xpose.msra.mxu0 0.0
        %1070 = vmatprep.mubr.f32.mxu0 0.0
        %1071 = vmatmul.mubr.f32.gmra.mrb[0].mxu0 %v758
        %v1072 = vpop.f32.mrb[0].mxu0
        %v1073 = vadd.f32 0.0, %v1072
        %v1074 = vpop.f32.mrb[0].mxu0
        %1075 = vdwg.mxu0
        %v1076 = vmul.f32 %v1073, 0.17677669
        %v1077 = vsel %vm599, %v1076, -1e+30
        %vm1078 = vcmask 64512
        %v1079 = vsel %vm1078, %v1077, -inf
        %1080 = vmax.xlane.f32.xlu0 %v1079
        %v1081 = vpop.xlane.xlu0 %1080
        %v1082 = vsub.f32 %v1077, %v1081
        %v1083 = vmul.f32 %v1082, 1.442695
        %v1084 = vpow.pop %v1083
        %v1085 = vsel %vm1078, %v1084, 0.0
        %1086 = vadd.xlane.f32.xlu0 %v1085
        %v1087 = vpop.xlane.xlu0 %1086
        %v1088 = vrcp.pop %v1087
        %v1089 = vmul.f32 %v1084, %v1088
        %v1091 = vsel %vm1078, %v1089, 0
        %1093 = vmatprep.subr.mxu0 0.0
        %1094 = vmatpush1.msra.mxu0 %v1003
        %1095 = vmatprep.subr.mxu0 0.0
        %1096 = vmatpush1.msra.mxu0 0.0
        %1097 = vmatprep.subr.mxu0 0.0
        %1098 = vmatpush1.msra.mxu0 0.0
        %1099 = vmatprep.subr.mxu0 0.0
        %1100 = vmatpush1.msra.mxu0 0.0
        %1101 = vmatprep.subr.mxu0 0.0
        %1102 = vmatpush1.msra.mxu0 0.0
        %1103 = vmatprep.subr.mxu0 0.0
        %1104 = vmatpush1.msra.mxu0 0.0
        %1105 = vmatprep.subr.mxu0 0.0
        %1106 = vmatpush1.msra.mxu0 0.0
        %1107 = vmatprep.subr.mxu0 0.0
        %1108 = vmatpush1.msra.mxu0 0.0
        %1109 = vmatprep.subr.mxu0 0.0
        %1110 = vmatpush1.msra.mxu0 0.0
        %1111 = vmatprep.subr.mxu0 0.0
        %1112 = vmatpush1.msra.mxu0 0.0
        %1113 = vmatprep.subr.mxu0 0.0
        %1114 = vmatpush1.msra.mxu0 0.0
        %1115 = vmatprep.subr.mxu0 0.0
        %1116 = vmatpush1.msra.mxu0 0.0
        %1117 = vmatprep.subr.mxu0 0.0
        %1118 = vmatpush1.msra.mxu0 0.0
        %1119 = vmatprep.subr.mxu0 0.0
        %1120 = vmatpush1.msra.mxu0 0.0
        %1121 = vmatprep.subr.mxu0 0.0
        %1122 = vmatpush1.msra.mxu0 0.0
        %1123 = vmatprep.subr.mxu0 0.0
        %1124 = vmatpush1.msra.mxu0 0.0
        %1125 = vmatprep.subr.mxu0 0.0
        %1126 = vmatpush1.msra.mxu0 0.0
        %1127 = vmatprep.subr.mxu0 0.0
        %1128 = vmatpush1.msra.mxu0 0.0
        %1129 = vmatprep.subr.mxu0 0.0
        %1130 = vmatpush1.msra.mxu0 0.0
        %1131 = vmatprep.subr.mxu0 0.0
        %1132 = vmatpush1.msra.mxu0 0.0
        %1133 = vmatprep.subr.mxu0 0.0
        %1134 = vmatpush1.msra.mxu0 0.0
        %1135 = vmatprep.subr.mxu0 0.0
        %1136 = vmatpush1.msra.mxu0 0.0
        %1137 = vmatprep.subr.mxu0 0.0
        %1138 = vmatpush1.msra.mxu0 0.0
        %1139 = vmatprep.subr.mxu0 0.0
        %1140 = vmatpush1.msra.mxu0 0.0
        %1141 = vmatprep.subr.mxu0 0.0
        %1142 = vmatpush1.msra.mxu0 0.0
        %1143 = vmatprep.subr.mxu0 0.0
        %1144 = vmatpush1.msra.mxu0 0.0
        %1145 = vmatprep.subr.mxu0 0.0
        %1146 = vmatpush1.msra.mxu0 0.0
        %1147 = vmatprep.subr.mxu0 0.0
        %1148 = vmatpush1.msra.mxu0 0.0
        %1149 = vmatprep.subr.mxu0 0.0
        %1150 = vmatpush1.msra.mxu0 0.0
        %1151 = vmatprep.subr.mxu0 0.0
        %1152 = vmatpush1.msra.mxu0 0.0
        %1153 = vmatprep.subr.mxu0 0.0
        %1154 = vmatpush1.msra.mxu0 0.0
        %1155 = vmatprep.subr.mxu0 0.0
        %1156 = vmatpush1.msra.mxu0 0.0
        %1157 = vmatprep.mubr.f32.mxu0 0.0
        %1158 = vmatmul.mubr.f32.gmra.mrb[0].mxu0 %v1091
        %v1159 = vpop.f32.mrb[0].mxu0
        %v1160 = vadd.f32 0.0, %v1159
        %v1161 = vpop.f32.mrb[0].mxu0
        %1162 = vdwg.mxu0
        %v1163 = vld [vmem:[#allocation9] sm:$0xff]
        %v1164 = vld [vmem:[#allocation9 + $0x8] sm:$0xff]
        %v1165 = vld [vmem:[#allocation9 + $0x10] sm:$0xff]
        %v1166 = vld [vmem:[#allocation9 + $0x18] sm:$0xff]
        %v1167 = vld [vmem:[#allocation9 + $0x20] sm:$0xff]
        %v1168 = vld [vmem:[#allocation9 + $0x28] sm:$0xff]
        %v1169 = vld [vmem:[#allocation9 + $0x30] sm:$0xff]
        %v1170 = vld [vmem:[#allocation9 + $0x38] sm:$0xff]
        %v1171 = vld [vmem:[#allocation9 + $0x40] sm:$0xff]
        %v1172 = vld [vmem:[#allocation9 + $0x48] sm:$0xff]
        %v1173 = vld [vmem:[#allocation9 + $0x50] sm:$0xff]
        %v1174 = vld [vmem:[#allocation9 + $0x58] sm:$0xff]
        %v1175 = vld [vmem:[#allocation9 + $0x60] sm:$0xff]
        %v1176 = vld [vmem:[#allocation9 + $0x68] sm:$0xff]
        %v1177 = vld [vmem:[#allocation9 + $0x70] sm:$0xff]
        %v1178 = vld [vmem:[#allocation9 + $0x78] sm:$0xff]
        %s1179 = scalar_lea.vmem [#allocation8], 128
        %v1180 = vld [vmem:[%s1179] sm:$0xff]
        %v1181 = vld [vmem:[%s1179 + $0x8] sm:$0xff]
        %v1182 = vld [vmem:[%s1179 + $0x10] sm:$0xff]
        %v1183 = vld [vmem:[%s1179 + $0x18] sm:$0xff]
        %v1184 = vld [vmem:[%s1179 + $0x20] sm:$0xff]
        %v1185 = vld [vmem:[%s1179 + $0x28] sm:$0xff]
        %v1186 = vld [vmem:[%s1179 + $0x30] sm:$0xff]
        %v1187 = vld [vmem:[%s1179 + $0x38] sm:$0xff]
        %v1188 = vld [vmem:[%s1179 + $0x40] sm:$0xff]
        %v1189 = vld [vmem:[%s1179 + $0x48] sm:$0xff]
        %v1190 = vld [vmem:[%s1179 + $0x50] sm:$0xff]
        %v1191 = vld [vmem:[%s1179 + $0x58] sm:$0xff]
        %v1192 = vld [vmem:[%s1179 + $0x60] sm:$0xff]
        %v1193 = vld [vmem:[%s1179 + $0x68] sm:$0xff]
        %v1194 = vld [vmem:[%s1179 + $0x70] sm:$0xff]
        %v1195 = vld [vmem:[%s1179 + $0x78] sm:$0xff]
        %1196 = vmatprep.subr.mxu0 0.0
        %1197 = vmatpush1.msra.mxu0 %v1180
        %1198 = vmatprep.subr.mxu0 0.0
        %1199 = vmatpush1.msra.mxu0 %v1181
        %1200 = vmatprep.subr.mxu0 0.0
        %1201 = vmatpush1.msra.mxu0 %v1182
        %1202 = vmatprep.subr.mxu0 0.0
        %1203 = vmatpush1.msra.mxu0 %v1183
        %1204 = vmatprep.subr.mxu0 0.0
        %1205 = vmatpush1.msra.mxu0 %v1184
        %1206 = vmatprep.subr.mxu0 0.0
        %1207 = vmatpush1.msra.mxu0 %v1185
        %1208 = vmatprep.subr.mxu0 0.0
        %1209 = vmatpush1.msra.mxu0 %v1186
        %1210 = vmatprep.subr.mxu0 0.0
        %1211 = vmatpush1.msra.mxu0 %v1187
        %1212 = vmatprep.subr.mxu0 0.0
        %1213 = vmatpush1.msra.mxu0 %v1188
        %1214 = vmatprep.subr.mxu0 0.0
        %1215 = vmatpush1.msra.mxu0 %v1189
        %1216 = vmatprep.subr.mxu0 0.0
        %1217 = vmatpush1.msra.mxu0 %v1190
        %1218 = vmatprep.subr.mxu0 0.0
        %1219 = vmatpush1.msra.mxu0 %v1191
        %1220 = vmatprep.subr.mxu0 0.0
        %1221 = vmatpush1.msra.mxu0 %v1192
        %1222 = vmatprep.subr.mxu0 0.0
        %1223 = vmatpush1.msra.mxu0 %v1193
        %1224 = vmatprep.subr.mxu0 0.0
        %1225 = vmatpush1.msra.mxu0 %v1194
        %1226 = vmatprep.subr.mxu0 0.0
        %1227 = vmatpush1.msra.mxu0 %v1195
        %1228 = vmatprep.subr.mxu0 0.0
        %1229 = vmatpush1.msra.mxu0 0.0
        %1230 = vmatprep.subr.mxu0 0.0
        %1231 = vmatpush1.msra.mxu0 0.0
        %1232 = vmatprep.subr.mxu0 0.0
        %1233 = vmatpush1.msra.mxu0 0.0
        %1234 = vmatprep.subr.mxu0 0.0
        %1235 = vmatpush1.msra.mxu0 0.0
        %1236 = vmatprep.subr.mxu0 0.0
        %1237 = vmatpush1.msra.mxu0 0.0
        %1238 = vmatprep.subr.mxu0 0.0
        %1239 = vmatpush1.msra.mxu0 0.0
        %1240 = vmatprep.subr.mxu0 0.0
        %1241 = vmatpush1.msra.mxu0 0.0
        %1242 = vmatprep.subr.mxu0 0.0
        %1243 = vmatpush1.msra.mxu0 0.0
        %1244 = vmatprep.subr.mxu0 0.0
        %1245 = vmatpush1.msra.mxu0 0.0
        %1246 = vmatprep.subr.mxu0 0.0
        %1247 = vmatpush1.msra.mxu0 0.0
        %1248 = vmatprep.subr.mxu0 0.0
        %1249 = vmatpush1.msra.mxu0 0.0
        %1250 = vmatprep.subr.mxu0 0.0
        %1251 = vmatpush1.msra.mxu0 0.0
        %1252 = vmatprep.subr.mxu0 0.0
        %1253 = vmatpush1.msra.mxu0 0.0
        %1254 = vmatprep.subr.mxu0 0.0
        %1255 = vmatpush1.msra.mxu0 0.0
        %1256 = vmatprep.subr.mxu0 0.0
        %1257 = vmatpush1.msra.mxu0 0.0
        %1258 = vmatprep.subr.mxu0 0.0
        %1259 = vmatpush1.msra.mxu0 0.0
        %1260 = vmatprep.mubr.f32.mxu0 0.0
        %1261 = vmatmul.mubr.f32.gmra.mrb[0].mxu0 %v576
        %v1262 = vpop.f32.mrb[0].mxu0
        %v1263 = vadd.f32 0.0, %v1262
        %v1264 = vpop.f32.mrb[0].mxu0
        %1265 = vdwg.mxu0
        %v1266 = vmul.f32 %v1263, %v577
        %1267 = vmatprep.subr.mxu0 0.0
        %1268 = vmatpush1.msra.mxu0 %v579
        %1269 = vmatprep.subr.mxu0 0.0
        %1270 = vmatpush1.msra.mxu0 %v580
        %1271 = vmatprep.subr.mxu0 0.0
        %1272 = vmatpush1.msra.mxu0 %v581
        %1273 = vmatprep.subr.mxu0 0.0
        %1274 = vmatpush1.msra.mxu0 %v582
        %1275 = vmatprep.subr.mxu0 0.0
        %1276 = vmatpush1.msra.mxu0 %v583
        %1277 = vmatprep.subr.mxu0 0.0
        %1278 = vmatpush1.msra.mxu0 %v584
        %1279 = vmatprep.subr.mxu0 0.0
        %1280 = vmatpush1.msra.mxu0 %v585
        %1281 = vmatprep.subr.mxu0 0.0
        %1282 = vmatpush1.msra.mxu0 %v586
        %1283 = vmatprep.subr.mxu0 0.0
        %1284 = vmatpush1.msra.mxu0 %v587
        %1285 = vmatprep.subr.mxu0 0.0
        %1286 = vmatpush1.msra.mxu0 %v588
        %1287 = vmatprep.subr.mxu0 0.0
        %1288 = vmatpush1.msra.mxu0 %v589
        %1289 = vmatprep.subr.mxu0 0.0
        %1290 = vmatpush1.msra.mxu0 %v590
        %1291 = vmatprep.subr.mxu0 0.0
        %1292 = vmatpush1.msra.mxu0 %v591
        %1293 = vmatprep.subr.mxu0 0.0
        %1294 = vmatpush1.msra.mxu0 %v592
        %1295 = vmatprep.subr.mxu0 0.0
        %1296 = vmatpush1.msra.mxu0 %v593
        %1297 = vmatprep.subr.mxu0 0.0
        %1298 = vmatpush1.msra.mxu0 %v594
        %1299 = vmatprep.subr.mxu0 0.0
        %1300 = vmatpush1.msra.mxu0 0.0
        %1301 = vmatprep.subr.mxu0 0.0
        %1302 = vmatpush1.msra.mxu0 0.0
        %1303 = vmatprep.subr.mxu0 0.0
        %1304 = vmatpush1.msra.mxu0 0.0
        %1305 = vmatprep.subr.mxu0 0.0
        %1306 = vmatpush1.msra.mxu0 0.0
        %1307 = vmatprep.subr.mxu0 0.0
        %1308 = vmatpush1.msra.mxu0 0.0
        %1309 = vmatprep.subr.mxu0 0.0
        %1310 = vmatpush1.msra.mxu0 0.0
        %1311 = vmatprep.subr.mxu0 0.0
        %1312 = vmatpush1.msra.mxu0 0.0
        %1313 = vmatprep.subr.mxu0 0.0
        %1314 = vmatpush1.msra.mxu0 0.0
        %1315 = vmatprep.subr.mxu0 0.0
        %1316 = vmatpush1.msra.mxu0 0.0
        %1317 = vmatprep.subr.mxu0 0.0
        %1318 = vmatpush1.msra.mxu0 0.0
        %1319 = vmatprep.subr.mxu0 0.0
        %1320 = vmatpush1.msra.mxu0 0.0
        %1321 = vmatprep.subr.mxu0 0.0
        %1322 = vmatpush1.msra.mxu0 0.0
        %1323 = vmatprep.subr.mxu0 0.0
        %1324 = vmatpush1.msra.mxu0 0.0
        %1325 = vmatprep.subr.mxu0 0.0
        %1326 = vmatpush1.msra.mxu0 0.0
        %1327 = vmatprep.subr.mxu0 0.0
        %1328 = vmatpush1.msra.mxu0 0.0
        %1329 = vmatprep.subr.mxu0 0.0
        %1330 = vmatpush1.msra.mxu0 0.0
        %1331 = vmatprep.mubr.f32.mxu0 0.0
        %1332 = vmatmul.mubr.f32.gmra.mrb[0].mxu0 %v1263
        %v1333 = vpop.f32.mrb[0].mxu0
        %v1334 = vadd.f32 0.0, %v1333
        %v1335 = vpop.f32.mrb[0].mxu0
        %1336 = vdwg.mxu0
        %v1337 = vmul.f32 %v1334, %v578
        %v1338 = vadd.f32 %v1266, %v1337
        %s1339 = scalar_lea.vmem [#allocation8], 640
        %v1340 = vld [vmem:[%s1339] sm:$0xff]
        %v1341 = vld [vmem:[%s1339 + $0x8] sm:$0xff]
        %v1342 = vld [vmem:[%s1339 + $0x10] sm:$0xff]
        %v1343 = vld [vmem:[%s1339 + $0x18] sm:$0xff]
        %v1344 = vld [vmem:[%s1339 + $0x20] sm:$0xff]
        %v1345 = vld [vmem:[%s1339 + $0x28] sm:$0xff]
        %v1346 = vld [vmem:[%s1339 + $0x30] sm:$0xff]
        %v1347 = vld [vmem:[%s1339 + $0x38] sm:$0xff]
        %v1348 = vld [vmem:[%s1339 + $0x40] sm:$0xff]
        %v1349 = vld [vmem:[%s1339 + $0x48] sm:$0xff]
        %v1350 = vld [vmem:[%s1339 + $0x50] sm:$0xff]
        %v1351 = vld [vmem:[%s1339 + $0x58] sm:$0xff]
        %v1352 = vld [vmem:[%s1339 + $0x60] sm:$0xff]
        %v1353 = vld [vmem:[%s1339 + $0x68] sm:$0xff]
        %v1354 = vld [vmem:[%s1339 + $0x70] sm:$0xff]
        %v1355 = vld [vmem:[%s1339 + $0x78] sm:$0xff]
        %1356 = vmatprep.subr.mxu0 0.0
        %1357 = vmatpush1.msra.mxu0 %v1340
        %1358 = vmatprep.subr.mxu0 0.0
        %1359 = vmatpush1.msra.mxu0 %v1341
        %1360 = vmatprep.subr.mxu0 0.0
        %1361 = vmatpush1.msra.mxu0 %v1342
        %1362 = vmatprep.subr.mxu0 0.0
        %1363 = vmatpush1.msra.mxu0 %v1343
        %1364 = vmatprep.subr.mxu0 0.0
        %1365 = vmatpush1.msra.mxu0 %v1344
        %1366 = vmatprep.subr.mxu0 0.0
        %1367 = vmatpush1.msra.mxu0 %v1345
        %1368 = vmatprep.subr.mxu0 0.0
        %1369 = vmatpush1.msra.mxu0 %v1346
        %1370 = vmatprep.subr.mxu0 0.0
        %1371 = vmatpush1.msra.mxu0 %v1347
        %1372 = vmatprep.subr.mxu0 0.0
        %1373 = vmatpush1.msra.mxu0 %v1348
        %1374 = vmatprep.subr.mxu0 0.0
        %1375 = vmatpush1.msra.mxu0 %v1349
        %1376 = vmatprep.subr.mxu0 0.0
        %1377 = vmatpush1.msra.mxu0 %v1350
        %1378 = vmatprep.subr.mxu0 0.0
        %1379 = vmatpush1.msra.mxu0 %v1351
        %1380 = vmatprep.subr.mxu0 0.0
        %1381 = vmatpush1.msra.mxu0 %v1352
        %1382 = vmatprep.subr.mxu0 0.0
        %1383 = vmatpush1.msra.mxu0 %v1353
        %1384 = vmatprep.subr.mxu0 0.0
        %1385 = vmatpush1.msra.mxu0 %v1354
        %1386 = vmatprep.subr.mxu0 0.0
        %1387 = vmatpush1.msra.mxu0 %v1355
        %1388 = vmatprep.subr.mxu0 0.0
        %1389 = vmatpush1.msra.mxu0 0.0
        %1390 = vmatprep.subr.mxu0 0.0
        %1391 = vmatpush1.msra.mxu0 0.0
        %1392 = vmatprep.subr.mxu0 0.0
        %1393 = vmatpush1.msra.mxu0 0.0
        %1394 = vmatprep.subr.mxu0 0.0
        %1395 = vmatpush1.msra.mxu0 0.0
        %1396 = vmatprep.subr.mxu0 0.0
        %1397 = vmatpush1.msra.mxu0 0.0
        %1398 = vmatprep.subr.mxu0 0.0
        %1399 = vmatpush1.msra.mxu0 0.0
        %1400 = vmatprep.subr.mxu0 0.0
        %1401 = vmatpush1.msra.mxu0 0.0
        %1402 = vmatprep.subr.mxu0 0.0
        %1403 = vmatpush1.msra.mxu0 0.0
        %1404 = vmatprep.subr.mxu0 0.0
        %1405 = vmatpush1.msra.mxu0 0.0
        %1406 = vmatprep.subr.mxu0 0.0
        %1407 = vmatpush1.msra.mxu0 0.0
        %1408 = vmatprep.subr.mxu0 0.0
        %1409 = vmatpush1.msra.mxu0 0.0
        %1410 = vmatprep.subr.mxu0 0.0
        %1411 = vmatpush1.msra.mxu0 0.0
        %1412 = vmatprep.subr.mxu0 0.0
        %1413 = vmatpush1.msra.mxu0 0.0
        %1414 = vmatprep.subr.mxu0 0.0
        %1415 = vmatpush1.msra.mxu0 0.0
        %1416 = vmatprep.subr.mxu0 0.0
        %1417 = vmatpush1.msra.mxu0 0.0
        %1418 = vmatprep.subr.mxu0 0.0
        %1419 = vmatpush1.msra.mxu0 0.0
        %1420 = vmatprep.mubr.f32.mxu0 0.0
        %1421 = vmatmul.mubr.f32.gmra.mrb[0].mxu0 %v576
        %v1422 = vpop.f32.mrb[0].mxu0
        %v1423 = vadd.f32 0.0, %v1422
        %v1424 = vpop.f32.mrb[0].mxu0
        %1425 = vdwg.mxu0
        %v1426 = vmul.f32 %v1423, %v577
        %1427 = vmatprep.subr.mxu0 0.0
        %1428 = vmatpush1.msra.mxu0 %v579
        %1429 = vmatprep.subr.mxu0 0.0
        %1430 = vmatpush1.msra.mxu0 %v580
        %1431 = vmatprep.subr.mxu0 0.0
        %1432 = vmatpush1.msra.mxu0 %v581
        %1433 = vmatprep.subr.mxu0 0.0
        %1434 = vmatpush1.msra.mxu0 %v582
        %1435 = vmatprep.subr.mxu0 0.0
        %1436 = vmatpush1.msra.mxu0 %v583
        %1437 = vmatprep.subr.mxu0 0.0
        %1438 = vmatpush1.msra.mxu0 %v584
        %1439 = vmatprep.subr.mxu0 0.0
        %1440 = vmatpush1.msra.mxu0 %v585
        %1441 = vmatprep.subr.mxu0 0.0
        %1442 = vmatpush1.msra.mxu0 %v586
        %1443 = vmatprep.subr.mxu0 0.0
        %1444 = vmatpush1.msra.mxu0 %v587
        %1445 = vmatprep.subr.mxu0 0.0
        %1446 = vmatpush1.msra.mxu0 %v588
        %1447 = vmatprep.subr.mxu0 0.0
        %1448 = vmatpush1.msra.mxu0 %v589
        %1449 = vmatprep.subr.mxu0 0.0
        %1450 = vmatpush1.msra.mxu0 %v590
        %1451 = vmatprep.subr.mxu0 0.0
        %1452 = vmatpush1.msra.mxu0 %v591
        %1453 = vmatprep.subr.mxu0 0.0
        %1454 = vmatpush1.msra.mxu0 %v592
        %1455 = vmatprep.subr.mxu0 0.0
        %1456 = vmatpush1.msra.mxu0 %v593
        %1457 = vmatprep.subr.mxu0 0.0
        %1458 = vmatpush1.msra.mxu0 %v594
        %1459 = vmatprep.subr.mxu0 0.0
        %1460 = vmatpush1.msra.mxu0 0.0
        %1461 = vmatprep.subr.mxu0 0.0
        %1462 = vmatpush1.msra.mxu0 0.0
        %1463 = vmatprep.subr.mxu0 0.0
        %1464 = vmatpush1.msra.mxu0 0.0
        %1465 = vmatprep.subr.mxu0 0.0
        %1466 = vmatpush1.msra.mxu0 0.0
        %1467 = vmatprep.subr.mxu0 0.0
        %1468 = vmatpush1.msra.mxu0 0.0
        %1469 = vmatprep.subr.mxu0 0.0
        %1470 = vmatpush1.msra.mxu0 0.0
        %1471 = vmatprep.subr.mxu0 0.0
        %1472 = vmatpush1.msra.mxu0 0.0
        %1473 = vmatprep.subr.mxu0 0.0
        %1474 = vmatpush1.msra.mxu0 0.0
        %1475 = vmatprep.subr.mxu0 0.0
        %1476 = vmatpush1.msra.mxu0 0.0
        %1477 = vmatprep.subr.mxu0 0.0
        %1478 = vmatpush1.msra.mxu0 0.0
        %1479 = vmatprep.subr.mxu0 0.0
        %1480 = vmatpush1.msra.mxu0 0.0
        %1481 = vmatprep.subr.mxu0 0.0
        %1482 = vmatpush1.msra.mxu0 0.0
        %1483 = vmatprep.subr.mxu0 0.0
        %1484 = vmatpush1.msra.mxu0 0.0
        %1485 = vmatprep.subr.mxu0 0.0
        %1486 = vmatpush1.msra.mxu0 0.0
        %1487 = vmatprep.subr.mxu0 0.0
        %1488 = vmatpush1.msra.mxu0 0.0
        %1489 = vmatprep.subr.mxu0 0.0
        %1490 = vmatpush1.msra.mxu0 0.0
        %1491 = vmatprep.mubr.f32.mxu0 0.0
        %1492 = vmatmul.mubr.f32.gmra.mrb[0].mxu0 %v1423
        %v1493 = vpop.f32.mrb[0].mxu0
        %v1494 = vadd.f32 0.0, %v1493
        %v1495 = vpop.f32.mrb[0].mxu0
        %1496 = vdwg.mxu0
        %v1497 = vmul.f32 %v1494, %v578
        %v1498 = vadd.f32 %v1426, %v1497
        %s1499 = scalar_lea.vmem [#allocation8], 1152
        %v1500 = vld [vmem:[%s1499] sm:$0xff]
        %v1501 = vld [vmem:[%s1499 + $0x8] sm:$0xff]
        %v1502 = vld [vmem:[%s1499 + $0x10] sm:$0xff]
        %v1503 = vld [vmem:[%s1499 + $0x18] sm:$0xff]
        %v1504 = vld [vmem:[%s1499 + $0x20] sm:$0xff]
        %v1505 = vld [vmem:[%s1499 + $0x28] sm:$0xff]
        %v1506 = vld [vmem:[%s1499 + $0x30] sm:$0xff]
        %v1507 = vld [vmem:[%s1499 + $0x38] sm:$0xff]
        %v1508 = vld [vmem:[%s1499 + $0x40] sm:$0xff]
        %v1509 = vld [vmem:[%s1499 + $0x48] sm:$0xff]
        %v1510 = vld [vmem:[%s1499 + $0x50] sm:$0xff]
        %v1511 = vld [vmem:[%s1499 + $0x58] sm:$0xff]
        %v1512 = vld [vmem:[%s1499 + $0x60] sm:$0xff]
        %v1513 = vld [vmem:[%s1499 + $0x68] sm:$0xff]
        %v1514 = vld [vmem:[%s1499 + $0x70] sm:$0xff]
        %v1515 = vld [vmem:[%s1499 + $0x78] sm:$0xff]
        %1516 = vmatprep.subr.mxu0 0.0
        %1517 = vmatpush1.msra.mxu0 %v1500
        %1518 = vmatprep.subr.mxu0 0.0
        %1519 = vmatpush1.msra.mxu0 %v1501
        %1520 = vmatprep.subr.mxu0 0.0
        %1521 = vmatpush1.msra.mxu0 %v1502
        %1522 = vmatprep.subr.mxu0 0.0
        %1523 = vmatpush1.msra.mxu0 %v1503
        %1524 = vmatprep.subr.mxu0 0.0
        %1525 = vmatpush1.msra.mxu0 %v1504
        %1526 = vmatprep.subr.mxu0 0.0
        %1527 = vmatpush1.msra.mxu0 %v1505
        %1528 = vmatprep.subr.mxu0 0.0
        %1529 = vmatpush1.msra.mxu0 %v1506
        %1530 = vmatprep.subr.mxu0 0.0
        %1531 = vmatpush1.msra.mxu0 %v1507
        %1532 = vmatprep.subr.mxu0 0.0
        %1533 = vmatpush1.msra.mxu0 %v1508
        %1534 = vmatprep.subr.mxu0 0.0
        %1535 = vmatpush1.msra.mxu0 %v1509
        %1536 = vmatprep.subr.mxu0 0.0
        %1537 = vmatpush1.msra.mxu0 %v1510
        %1538 = vmatprep.subr.mxu0 0.0
        %1539 = vmatpush1.msra.mxu0 %v1511
        %1540 = vmatprep.subr.mxu0 0.0
        %1541 = vmatpush1.msra.mxu0 %v1512
        %1542 = vmatprep.subr.mxu0 0.0
        %1543 = vmatpush1.msra.mxu0 %v1513
        %1544 = vmatprep.subr.mxu0 0.0
        %1545 = vmatpush1.msra.mxu0 %v1514
        %1546 = vmatprep.subr.mxu0 0.0
        %1547 = vmatpush1.msra.mxu0 %v1515
        %1548 = vmatprep.subr.mxu0 0.0
        %1549 = vmatpush1.msra.mxu0 0.0
        %1550 = vmatprep.subr.mxu0 0.0
        %1551 = vmatpush1.msra.mxu0 0.0
        %1552 = vmatprep.subr.mxu0 0.0
        %1553 = vmatpush1.msra.mxu0 0.0
        %1554 = vmatprep.subr.mxu0 0.0
        %1555 = vmatpush1.msra.mxu0 0.0
        %1556 = vmatprep.subr.mxu0 0.0
        %1557 = vmatpush1.msra.mxu0 0.0
        %1558 = vmatprep.subr.mxu0 0.0
        %1559 = vmatpush1.msra.mxu0 0.0
        %1560 = vmatprep.subr.mxu0 0.0
        %1561 = vmatpush1.msra.mxu0 0.0
        %1562 = vmatprep.subr.mxu0 0.0
        %1563 = vmatpush1.msra.mxu0 0.0
        %1564 = vmatprep.subr.mxu0 0.0
        %1565 = vmatpush1.msra.mxu0 0.0
        %1566 = vmatprep.subr.mxu0 0.0
        %1567 = vmatpush1.msra.mxu0 0.0
        %1568 = vmatprep.subr.mxu0 0.0
        %1569 = vmatpush1.msra.mxu0 0.0
        %1570 = vmatprep.subr.mxu0 0.0
        %1571 = vmatpush1.msra.mxu0 0.0
        %1572 = vmatprep.subr.mxu0 0.0
        %1573 = vmatpush1.msra.mxu0 0.0
        %1574 = vmatprep.subr.mxu0 0.0
        %1575 = vmatpush1.msra.mxu0 0.0
        %1576 = vmatprep.subr.mxu0 0.0
        %1577 = vmatpush1.msra.mxu0 0.0
        %1578 = vmatprep.subr.mxu0 0.0
        %1579 = vmatpush1.msra.mxu0 0.0
        %1580 = vmatprep.mubr.f32.mxu0 0.0
        %1581 = vmatmul.mubr.f32.gmra.mrb[0].mxu0 %v576
        %v1582 = vpop.f32.mrb[0].mxu0
        %v1583 = vadd.f32 0.0, %v1582
        %v1584 = vpop.f32.mrb[0].mxu0
        %1585 = vdwg.mxu0
        %1586 = vmatprep.subr.mxu0 0.0
        %1587 = vmatpush1.xpose.msra.mxu0 %v1498
        %1588 = vmatprep.subr.mxu0 0.0
        %1589 = vmatpush1.xpose.msra.mxu0 0.0
        %1590 = vmatprep.subr.mxu0 0.0
        %1591 = vmatpush1.xpose.msra.mxu0 0.0
        %1592 = vmatprep.subr.mxu0 0.0
        %1593 = vmatpush1.xpose.msra.mxu0 0.0
        %1594 = vmatprep.subr.mxu0 0.0
        %1595 = vmatpush1.xpose.msra.mxu0 0.0
        %1596 = vmatprep.subr.mxu0 0.0
        %1597 = vmatpush1.xpose.msra.mxu0 0.0
        %1598 = vmatprep.subr.mxu0 0.0
        %1599 = vmatpush1.xpose.msra.mxu0 0.0
        %1600 = vmatprep.subr.mxu0 0.0
        %1601 = vmatpush1.xpose.msra.mxu0 0.0
        %1602 = vmatprep.subr.mxu0 0.0
        %1603 = vmatpush1.xpose.msra.mxu0 0.0
        %1604 = vmatprep.subr.mxu0 0.0
        %1605 = vmatpush1.xpose.msra.mxu0 0.0
        %1606 = vmatprep.subr.mxu0 0.0
        %1607 = vmatpush1.xpose.msra.mxu0 0.0
        %1608 = vmatprep.subr.mxu0 0.0
        %1609 = vmatpush1.xpose.msra.mxu0 0.0
        %1610 = vmatprep.subr.mxu0 0.0
        %1611 = vmatpush1.xpose.msra.mxu0 0.0
        %1612 = vmatprep.subr.mxu0 0.0
        %1613 = vmatpush1.xpose.msra.mxu0 0.0
        %1614 = vmatprep.subr.mxu0 0.0
        %1615 = vmatpush1.xpose.msra.mxu0 0.0
        %1616 = vmatprep.subr.mxu0 0.0
        %1617 = vmatpush1.xpose.msra.mxu0 0.0
        %1618 = vmatprep.subr.mxu0 0.0
        %1619 = vmatpush1.xpose.msra.mxu0 0.0
        %1620 = vmatprep.subr.mxu0 0.0
        %1621 = vmatpush1.xpose.msra.mxu0 0.0
        %1622 = vmatprep.subr.mxu0 0.0
        %1623 = vmatpush1.xpose.msra.mxu0 0.0
        %1624 = vmatprep.subr.mxu0 0.0
        %1625 = vmatpush1.xpose.msra.mxu0 0.0
        %1626 = vmatprep.subr.mxu0 0.0
        %1627 = vmatpush1.xpose.msra.mxu0 0.0
        %1628 = vmatprep.subr.mxu0 0.0
        %1629 = vmatpush1.xpose.msra.mxu0 0.0
        %1630 = vmatprep.subr.mxu0 0.0
        %1631 = vmatpush1.xpose.msra.mxu0 0.0
        %1632 = vmatprep.subr.mxu0 0.0
        %1633 = vmatpush1.xpose.msra.mxu0 0.0
        %1634 = vmatprep.subr.mxu0 0.0
        %1635 = vmatpush1.xpose.msra.mxu0 0.0
        %1636 = vmatprep.subr.mxu0 0.0
        %1637 = vmatpush1.xpose.msra.mxu0 0.0
        %1638 = vmatprep.subr.mxu0 0.0
        %1639 = vmatpush1.xpose.msra.mxu0 0.0
        %1640 = vmatprep.subr.mxu0 0.0
        %1641 = vmatpush1.xpose.msra.mxu0 0.0
        %1642 = vmatprep.subr.mxu0 0.0
        %1643 = vmatpush1.xpose.msra.mxu0 0.0
        %1644 = vmatprep.subr.mxu0 0.0
        %1645 = vmatpush1.xpose.msra.mxu0 0.0
        %1646 = vmatprep.subr.mxu0 0.0
        %1647 = vmatpush1.xpose.msra.mxu0 0.0
        %1648 = vmatprep.subr.mxu0 0.0
        %1649 = vmatpush1.xpose.msra.mxu0 0.0
        %1650 = vmatprep.mubr.f32.mxu0 0.0
        %1651 = vmatmul.mubr.f32.gmra.mrb[0].mxu0 %v1338
        %v1652 = vpop.f32.mrb[0].mxu0
        %v1653 = vadd.f32 0.0, %v1652
        %v1654 = vpop.f32.mrb[0].mxu0
        %1655 = vdwg.mxu0
        %v1656 = vmul.f32 %v1653, 0.17677669
        %v1657 = vsel %vm599, %v1656, -1e+30
        %v1658 = vsel %vm1078, %v1657, -inf
        %1659 = vmax.xlane.f32.xlu0 %v1658
        %v1660 = vpop.xlane.xlu0 %1659
        %v1661 = vsub.f32 %v1657, %v1660
        %v1662 = vmul.f32 %v1661, 1.442695
        %v1663 = vpow.pop %v1662
        %v1664 = vsel %vm1078, %v1663, 0.0
        %1665 = vadd.xlane.f32.xlu0 %v1664
        %v1666 = vpop.xlane.xlu0 %1665
        %v1667 = vrcp.pop %v1666
        %v1668 = vmul.f32 %v1663, %v1667
        %v1670 = vsel %vm1078, %v1668, 0
        %1672 = vmatprep.subr.mxu0 0.0
        %1673 = vmatpush1.msra.mxu0 %v1583
        %1674 = vmatprep.subr.mxu0 0.0
        %1675 = vmatpush1.msra.mxu0 0.0
        %1676 = vmatprep.subr.mxu0 0.0
        %1677 = vmatpush1.msra.mxu0 0.0
        %1678 = vmatprep.subr.mxu0 0.0
        %1679 = vmatpush1.msra.mxu0 0.0
        %1680 = vmatprep.subr.mxu0 0.0
        %1681 = vmatpush1.msra.mxu0 0.0
        %1682 = vmatprep.subr.mxu0 0.0
        %1683 = vmatpush1.msra.mxu0 0.0
        %1684 = vmatprep.subr.mxu0 0.0
        %1685 = vmatpush1.msra.mxu0 0.0
        %1686 = vmatprep.subr.mxu0 0.0
        %1687 = vmatpush1.msra.mxu0 0.0
        %1688 = vmatprep.subr.mxu0 0.0
        %1689 = vmatpush1.msra.mxu0 0.0
        %1690 = vmatprep.subr.mxu0 0.0
        %1691 = vmatpush1.msra.mxu0 0.0
        %1692 = vmatprep.subr.mxu0 0.0
        %1693 = vmatpush1.msra.mxu0 0.0
        %1694 = vmatprep.subr.mxu0 0.0
        %1695 = vmatpush1.msra.mxu0 0.0
        %1696 = vmatprep.subr.mxu0 0.0
        %1697 = vmatpush1.msra.mxu0 0.0
        %1698 = vmatprep.subr.mxu0 0.0
        %1699 = vmatpush1.msra.mxu0 0.0
        %1700 = vmatprep.subr.mxu0 0.0
        %1701 = vmatpush1.msra.mxu0 0.0
        %1702 = vmatprep.subr.mxu0 0.0
        %1703 = vmatpush1.msra.mxu0 0.0
        %1704 = vmatprep.subr.mxu0 0.0
        %1705 = vmatpush1.msra.mxu0 0.0
        %1706 = vmatprep.subr.mxu0 0.0
        %1707 = vmatpush1.msra.mxu0 0.0
        %1708 = vmatprep.subr.mxu0 0.0
        %1709 = vmatpush1.msra.mxu0 0.0
        %1710 = vmatprep.subr.mxu0 0.0
        %1711 = vmatpush1.msra.mxu0 0.0
        %1712 = vmatprep.subr.mxu0 0.0
        %1713 = vmatpush1.msra.mxu0 0.0
        %1714 = vmatprep.subr.mxu0 0.0
        %1715 = vmatpush1.msra.mxu0 0.0
        %1716 = vmatprep.subr.mxu0 0.0
        %1717 = vmatpush1.msra.mxu0 0.0
        %1718 = vmatprep.subr.mxu0 0.0
        %1719 = vmatpush1.msra.mxu0 0.0
        %1720 = vmatprep.subr.mxu0 0.0
        %1721 = vmatpush1.msra.mxu0 0.0
        %1722 = vmatprep.subr.mxu0 0.0
        %1723 = vmatpush1.msra.mxu0 0.0
        %1724 = vmatprep.subr.mxu0 0.0
        %1725 = vmatpush1.msra.mxu0 0.0
        %1726 = vmatprep.subr.mxu0 0.0
        %1727 = vmatpush1.msra.mxu0 0.0
        %1728 = vmatprep.subr.mxu0 0.0
        %1729 = vmatpush1.msra.mxu0 0.0
        %1730 = vmatprep.subr.mxu0 0.0
        %1731 = vmatpush1.msra.mxu0 0.0
        %1732 = vmatprep.subr.mxu0 0.0
        %1733 = vmatpush1.msra.mxu0 0.0
        %1734 = vmatprep.subr.mxu0 0.0
        %1735 = vmatpush1.msra.mxu0 0.0
        %1736 = vmatprep.mubr.f32.mxu0 0.0
        %1737 = vmatmul.mubr.f32.gmra.mrb[0].mxu0 %v1670
        %v1738 = vpop.f32.mrb[0].mxu0
        %v1739 = vadd.f32 0.0, %v1738
        %v1740 = vpop.f32.mrb[0].mxu0
        %1741 = vdwg.mxu0
        %s1742 = scalar_lea.vmem [#allocation9], 128
        %v1743 = vld [vmem:[%s1742] sm:$0xff]
        %v1744 = vld [vmem:[%s1742 + $0x8] sm:$0xff]
        %v1745 = vld [vmem:[%s1742 + $0x10] sm:$0xff]
        %v1746 = vld [vmem:[%s1742 + $0x18] sm:$0xff]
        %v1747 = vld [vmem:[%s1742 + $0x20] sm:$0xff]
        %v1748 = vld [vmem:[%s1742 + $0x28] sm:$0xff]
        %v1749 = vld [vmem:[%s1742 + $0x30] sm:$0xff]
        %v1750 = vld [vmem:[%s1742 + $0x38] sm:$0xff]
        %v1751 = vld [vmem:[%s1742 + $0x40] sm:$0xff]
        %v1752 = vld [vmem:[%s1742 + $0x48] sm:$0xff]
        %v1753 = vld [vmem:[%s1742 + $0x50] sm:$0xff]
        %v1754 = vld [vmem:[%s1742 + $0x58] sm:$0xff]
        %v1755 = vld [vmem:[%s1742 + $0x60] sm:$0xff]
        %v1756 = vld [vmem:[%s1742 + $0x68] sm:$0xff]
        %v1757 = vld [vmem:[%s1742 + $0x70] sm:$0xff]
        %v1758 = vld [vmem:[%s1742 + $0x78] sm:$0xff]
        %1759 = vmatprep.subr.mxu0 0.0
        %1760 = vmatpush1.msra.mxu0 %v1743
        %1761 = vmatprep.subr.mxu0 0.0
        %1762 = vmatpush1.msra.mxu0 %v1744
        %1763 = vmatprep.subr.mxu0 0.0
        %1764 = vmatpush1.msra.mxu0 %v1745
        %1765 = vmatprep.subr.mxu0 0.0
        %1766 = vmatpush1.msra.mxu0 %v1746
        %1767 = vmatprep.subr.mxu0 0.0
        %1768 = vmatpush1.msra.mxu0 %v1747
        %1769 = vmatprep.subr.mxu0 0.0
        %1770 = vmatpush1.msra.mxu0 %v1748
        %1771 = vmatprep.subr.mxu0 0.0
        %1772 = vmatpush1.msra.mxu0 %v1749
        %1773 = vmatprep.subr.mxu0 0.0
        %1774 = vmatpush1.msra.mxu0 %v1750
        %1775 = vmatprep.subr.mxu0 0.0
        %1776 = vmatpush1.msra.mxu0 %v1751
        %1777 = vmatprep.subr.mxu0 0.0
        %1778 = vmatpush1.msra.mxu0 %v1752
        %1779 = vmatprep.subr.mxu0 0.0
        %1780 = vmatpush1.msra.mxu0 %v1753
        %1781 = vmatprep.subr.mxu0 0.0
        %1782 = vmatpush1.msra.mxu0 %v1754
        %1783 = vmatprep.subr.mxu0 0.0
        %1784 = vmatpush1.msra.mxu0 %v1755
        %1785 = vmatprep.subr.mxu0 0.0
        %1786 = vmatpush1.msra.mxu0 %v1756
        %1787 = vmatprep.subr.mxu0 0.0
        %1788 = vmatpush1.msra.mxu0 %v1757
        %1789 = vmatprep.subr.mxu0 0.0
        %1790 = vmatpush1.msra.mxu0 %v1758
        %1791 = vmatprep.subr.mxu0 0.0
        %1792 = vmatpush1.msra.mxu0 0.0
        %1793 = vmatprep.subr.mxu0 0.0
        %1794 = vmatpush1.msra.mxu0 0.0
        %1795 = vmatprep.subr.mxu0 0.0
        %1796 = vmatpush1.msra.mxu0 0.0
        %1797 = vmatprep.subr.mxu0 0.0
        %1798 = vmatpush1.msra.mxu0 0.0
        %1799 = vmatprep.subr.mxu0 0.0
        %1800 = vmatpush1.msra.mxu0 0.0
        %1801 = vmatprep.subr.mxu0 0.0
        %1802 = vmatpush1.msra.mxu0 0.0
        %1803 = vmatprep.subr.mxu0 0.0
        %1804 = vmatpush1.msra.mxu0 0.0
        %1805 = vmatprep.subr.mxu0 0.0
        %1806 = vmatpush1.msra.mxu0 0.0
        %1807 = vmatprep.subr.mxu0 0.0
        %1808 = vmatpush1.msra.mxu0 0.0
        %1809 = vmatprep.subr.mxu0 0.0
        %1810 = vmatpush1.msra.mxu0 0.0
        %1811 = vmatprep.subr.mxu0 0.0
        %1812 = vmatpush1.msra.mxu0 0.0
        %1813 = vmatprep.subr.mxu0 0.0
        %1814 = vmatpush1.msra.mxu0 0.0
        %1815 = vmatprep.subr.mxu0 0.0
        %1816 = vmatpush1.msra.mxu0 0.0
        %1817 = vmatprep.subr.mxu0 0.0
        %1818 = vmatpush1.msra.mxu0 0.0
        %1819 = vmatprep.subr.mxu0 0.0
        %1820 = vmatpush1.msra.mxu0 0.0
        %1821 = vmatprep.subr.mxu0 0.0
        %1822 = vmatpush1.msra.mxu0 0.0
        %1823 = vmatprep.mubr.f32.mxu0 0.0
        %1824 = vmatmul.mubr.f32.gmra.mrb[0].mxu0 %v1739
        %v1825 = vpop.f32.mrb[0].mxu0
        %v1826 = vadd.f32 0.0, %v1825
        %v1827 = vpop.f32.mrb[0].mxu0
        %1828 = vdwg.mxu0
        %1829 = vmatprep.subr.mxu0 0.0
        %1830 = vmatpush1.msra.mxu0 %v1163
        %1831 = vmatprep.subr.mxu0 0.0
        %1832 = vmatpush1.msra.mxu0 %v1164
        %1833 = vmatprep.subr.mxu0 0.0
        %1834 = vmatpush1.msra.mxu0 %v1165
        %1835 = vmatprep.subr.mxu0 0.0
        %1836 = vmatpush1.msra.mxu0 %v1166
        %1837 = vmatprep.subr.mxu0 0.0
        %1838 = vmatpush1.msra.mxu0 %v1167
        %1839 = vmatprep.subr.mxu0 0.0
        %1840 = vmatpush1.msra.mxu0 %v1168
        %1841 = vmatprep.subr.mxu0 0.0
        %1842 = vmatpush1.msra.mxu0 %v1169
        %1843 = vmatprep.subr.mxu0 0.0
        %1844 = vmatpush1.msra.mxu0 %v1170
        %1845 = vmatprep.subr.mxu0 0.0
        %1846 = vmatpush1.msra.mxu0 %v1171
        %1847 = vmatprep.subr.mxu0 0.0
        %1848 = vmatpush1.msra.mxu0 %v1172
        %1849 = vmatprep.subr.mxu0 0.0
        %1850 = vmatpush1.msra.mxu0 %v1173
        %1851 = vmatprep.subr.mxu0 0.0
        %1852 = vmatpush1.msra.mxu0 %v1174
        %1853 = vmatprep.subr.mxu0 0.0
        %1854 = vmatpush1.msra.mxu0 %v1175
        %1855 = vmatprep.subr.mxu0 0.0
        %1856 = vmatpush1.msra.mxu0 %v1176
        %1857 = vmatprep.subr.mxu0 0.0
        %1858 = vmatpush1.msra.mxu0 %v1177
        %1859 = vmatprep.subr.mxu0 0.0
        %1860 = vmatpush1.msra.mxu0 %v1178
        %1861 = vmatprep.subr.mxu0 0.0
        %1862 = vmatpush1.msra.mxu0 0.0
        %1863 = vmatprep.subr.mxu0 0.0
        %1864 = vmatpush1.msra.mxu0 0.0
        %1865 = vmatprep.subr.mxu0 0.0
        %1866 = vmatpush1.msra.mxu0 0.0
        %1867 = vmatprep.subr.mxu0 0.0
        %1868 = vmatpush1.msra.mxu0 0.0
        %1869 = vmatprep.subr.mxu0 0.0
        %1870 = vmatpush1.msra.mxu0 0.0
        %1871 = vmatprep.subr.mxu0 0.0
        %1872 = vmatpush1.msra.mxu0 0.0
        %1873 = vmatprep.subr.mxu0 0.0
        %1874 = vmatpush1.msra.mxu0 0.0
        %1875 = vmatprep.subr.mxu0 0.0
        %1876 = vmatpush1.msra.mxu0 0.0
        %1877 = vmatprep.subr.mxu0 0.0
        %1878 = vmatpush1.msra.mxu0 0.0
        %1879 = vmatprep.subr.mxu0 0.0
        %1880 = vmatpush1.msra.mxu0 0.0
        %1881 = vmatprep.subr.mxu0 0.0
        %1882 = vmatpush1.msra.mxu0 0.0
        %1883 = vmatprep.subr.mxu0 0.0
        %1884 = vmatpush1.msra.mxu0 0.0
        %1885 = vmatprep.subr.mxu0 0.0
        %1886 = vmatpush1.msra.mxu0 0.0
        %1887 = vmatprep.subr.mxu0 0.0
        %1888 = vmatpush1.msra.mxu0 0.0
        %1889 = vmatprep.subr.mxu0 0.0
        %1890 = vmatpush1.msra.mxu0 0.0
        %1891 = vmatprep.subr.mxu0 0.0
        %1892 = vmatpush1.msra.mxu0 0.0
        %1893 = vmatprep.mubr.f32.mxu0 0.0
        %1894 = vmatmul.mubr.f32.gmra.mrb[0].mxu0 %v1160
        %v1895 = vpop.f32.mrb[0].mxu0
        %v1896 = vadd.f32 %v1826, %v1895
        %v1897 = vpop.f32.mrb[0].mxu0
        %1898 = vdwg.mxu0
        %s1899 = scalar_lea.vmem [#allocation8], 256
        %v1900 = vld [vmem:[%s1899] sm:$0xff]
        %v1901 = vld [vmem:[%s1899 + $0x8] sm:$0xff]
        %v1902 = vld [vmem:[%s1899 + $0x10] sm:$0xff]
        %v1903 = vld [vmem:[%s1899 + $0x18] sm:$0xff]
        %v1904 = vld [vmem:[%s1899 + $0x20] sm:$0xff]
        %v1905 = vld [vmem:[%s1899 + $0x28] sm:$0xff]
        %v1906 = vld [vmem:[%s1899 + $0x30] sm:$0xff]
        %v1907 = vld [vmem:[%s1899 + $0x38] sm:$0xff]
        %v1908 = vld [vmem:[%s1899 + $0x40] sm:$0xff]
        %v1909 = vld [vmem:[%s1899 + $0x48] sm:$0xff]
        %v1910 = vld [vmem:[%s1899 + $0x50] sm:$0xff]
        %v1911 = vld [vmem:[%s1899 + $0x58] sm:$0xff]
        %v1912 = vld [vmem:[%s1899 + $0x60] sm:$0xff]
        %v1913 = vld [vmem:[%s1899 + $0x68] sm:$0xff]
        %v1914 = vld [vmem:[%s1899 + $0x70] sm:$0xff]
        %v1915 = vld [vmem:[%s1899 + $0x78] sm:$0xff]
        %1916 = vmatprep.subr.mxu0 0.0
        %1917 = vmatpush1.msra.mxu0 %v1900
        %1918 = vmatprep.subr.mxu0 0.0
        %1919 = vmatpush1.msra.mxu0 %v1901
        %1920 = vmatprep.subr.mxu0 0.0
        %1921 = vmatpush1.msra.mxu0 %v1902
        %1922 = vmatprep.subr.mxu0 0.0
        %1923 = vmatpush1.msra.mxu0 %v1903
        %1924 = vmatprep.subr.mxu0 0.0
        %1925 = vmatpush1.msra.mxu0 %v1904
        %1926 = vmatprep.subr.mxu0 0.0
        %1927 = vmatpush1.msra.mxu0 %v1905
        %1928 = vmatprep.subr.mxu0 0.0
        %1929 = vmatpush1.msra.mxu0 %v1906
        %1930 = vmatprep.subr.mxu0 0.0
        %1931 = vmatpush1.msra.mxu0 %v1907
        %1932 = vmatprep.subr.mxu0 0.0
        %1933 = vmatpush1.msra.mxu0 %v1908
        %1934 = vmatprep.subr.mxu0 0.0
        %1935 = vmatpush1.msra.mxu0 %v1909
        %1936 = vmatprep.subr.mxu0 0.0
        %1937 = vmatpush1.msra.mxu0 %v1910
        %1938 = vmatprep.subr.mxu0 0.0
        %1939 = vmatpush1.msra.mxu0 %v1911
        %1940 = vmatprep.subr.mxu0 0.0
        %1941 = vmatpush1.msra.mxu0 %v1912
        %1942 = vmatprep.subr.mxu0 0.0
        %1943 = vmatpush1.msra.mxu0 %v1913
        %1944 = vmatprep.subr.mxu0 0.0
        %1945 = vmatpush1.msra.mxu0 %v1914
        %1946 = vmatprep.subr.mxu0 0.0
        %1947 = vmatpush1.msra.mxu0 %v1915
        %1948 = vmatprep.subr.mxu0 0.0
        %1949 = vmatpush1.msra.mxu0 0.0
        %1950 = vmatprep.subr.mxu0 0.0
        %1951 = vmatpush1.msra.mxu0 0.0
        %1952 = vmatprep.subr.mxu0 0.0
        %1953 = vmatpush1.msra.mxu0 0.0
        %1954 = vmatprep.subr.mxu0 0.0
        %1955 = vmatpush1.msra.mxu0 0.0
        %1956 = vmatprep.subr.mxu0 0.0
        %1957 = vmatpush1.msra.mxu0 0.0
        %1958 = vmatprep.subr.mxu0 0.0
        %1959 = vmatpush1.msra.mxu0 0.0
        %1960 = vmatprep.subr.mxu0 0.0
        %1961 = vmatpush1.msra.mxu0 0.0
        %1962 = vmatprep.subr.mxu0 0.0
        %1963 = vmatpush1.msra.mxu0 0.0
        %1964 = vmatprep.subr.mxu0 0.0
        %1965 = vmatpush1.msra.mxu0 0.0
        %1966 = vmatprep.subr.mxu0 0.0
        %1967 = vmatpush1.msra.mxu0 0.0
        %1968 = vmatprep.subr.mxu0 0.0
        %1969 = vmatpush1.msra.mxu0 0.0
        %1970 = vmatprep.subr.mxu0 0.0
        %1971 = vmatpush1.msra.mxu0 0.0
        %1972 = vmatprep.subr.mxu0 0.0
        %1973 = vmatpush1.msra.mxu0 0.0
        %1974 = vmatprep.subr.mxu0 0.0
        %1975 = vmatpush1.msra.mxu0 0.0
        %1976 = vmatprep.subr.mxu0 0.0
        %1977 = vmatpush1.msra.mxu0 0.0
        %1978 = vmatprep.subr.mxu0 0.0
        %1979 = vmatpush1.msra.mxu0 0.0
        %1980 = vmatprep.mubr.f32.mxu0 0.0
        %1981 = vmatmul.mubr.f32.gmra.mrb[0].mxu0 %v576
        %v1982 = vpop.f32.mrb[0].mxu0
        %v1983 = vadd.f32 0.0, %v1982
        %v1984 = vpop.f32.mrb[0].mxu0
        %1985 = vdwg.mxu0
        %v1986 = vmul.f32 %v1983, %v577
        %1987 = vmatprep.subr.mxu0 0.0
        %1988 = vmatpush1.msra.mxu0 %v579
        %1989 = vmatprep.subr.mxu0 0.0
        %1990 = vmatpush1.msra.mxu0 %v580
        %1991 = vmatprep.subr.mxu0 0.0
        %1992 = vmatpush1.msra.mxu0 %v581
        %1993 = vmatprep.subr.mxu0 0.0
        %1994 = vmatpush1.msra.mxu0 %v582
        %1995 = vmatprep.subr.mxu0 0.0
        %1996 = vmatpush1.msra.mxu0 %v583
        %1997 = vmatprep.subr.mxu0 0.0
        %1998 = vmatpush1.msra.mxu0 %v584
        %1999 = vmatprep.subr.mxu0 0.0
        %2000 = vmatpush1.msra.mxu0 %v585
        %2001 = vmatprep.subr.mxu0 0.0
        %2002 = vmatpush1.msra.mxu0 %v586
        %2003 = vmatprep.subr.mxu0 0.0
        %2004 = vmatpush1.msra.mxu0 %v587
        %2005 = vmatprep.subr.mxu0 0.0
        %2006 = vmatpush1.msra.mxu0 %v588
        %2007 = vmatprep.subr.mxu0 0.0
        %2008 = vmatpush1.msra.mxu0 %v589
        %2009 = vmatprep.subr.mxu0 0.0
        %2010 = vmatpush1.msra.mxu0 %v590
        %2011 = vmatprep.subr.mxu0 0.0
        %2012 = vmatpush1.msra.mxu0 %v591
        %2013 = vmatprep.subr.mxu0 0.0
        %2014 = vmatpush1.msra.mxu0 %v592
        %2015 = vmatprep.subr.mxu0 0.0
        %2016 = vmatpush1.msra.mxu0 %v593
        %2017 = vmatprep.subr.mxu0 0.0
        %2018 = vmatpush1.msra.mxu0 %v594
        %2019 = vmatprep.subr.mxu0 0.0
        %2020 = vmatpush1.msra.mxu0 0.0
        %2021 = vmatprep.subr.mxu0 0.0
        %2022 = vmatpush1.msra.mxu0 0.0
        %2023 = vmatprep.subr.mxu0 0.0
        %2024 = vmatpush1.msra.mxu0 0.0
        %2025 = vmatprep.subr.mxu0 0.0
        %2026 = vmatpush1.msra.mxu0 0.0
        %2027 = vmatprep.subr.mxu0 0.0
        %2028 = vmatpush1.msra.mxu0 0.0
        %2029 = vmatprep.subr.mxu0 0.0
        %2030 = vmatpush1.msra.mxu0 0.0
        %2031 = vmatprep.subr.mxu0 0.0
        %2032 = vmatpush1.msra.mxu0 0.0
        %2033 = vmatprep.subr.mxu0 0.0
        %2034 = vmatpush1.msra.mxu0 0.0
        %2035 = vmatprep.subr.mxu0 0.0
        %2036 = vmatpush1.msra.mxu0 0.0
        %2037 = vmatprep.subr.mxu0 0.0
        %2038 = vmatpush1.msra.mxu0 0.0
        %2039 = vmatprep.subr.mxu0 0.0
        %2040 = vmatpush1.msra.mxu0 0.0
        %2041 = vmatprep.subr.mxu0 0.0
        %2042 = vmatpush1.msra.mxu0 0.0
        %2043 = vmatprep.subr.mxu0 0.0
        %2044 = vmatpush1.msra.mxu0 0.0
        %2045 = vmatprep.subr.mxu0 0.0
        %2046 = vmatpush1.msra.mxu0 0.0
        %2047 = vmatprep.subr.mxu0 0.0
        %2048 = vmatpush1.msra.mxu0 0.0
        %2049 = vmatprep.subr.mxu0 0.0
        %2050 = vmatpush1.msra.mxu0 0.0
        %2051 = vmatprep.mubr.f32.mxu0 0.0
        %2052 = vmatmul.mubr.f32.gmra.mrb[0].mxu0 %v1983
        %v2053 = vpop.f32.mrb[0].mxu0
        %v2054 = vadd.f32 0.0, %v2053
        %v2055 = vpop.f32.mrb[0].mxu0
        %2056 = vdwg.mxu0
        %v2057 = vmul.f32 %v2054, %v578
        %v2058 = vadd.f32 %v1986, %v2057
        %s2059 = scalar_lea.vmem [#allocation8], 768
        %v2060 = vld [vmem:[%s2059] sm:$0xff]
        %v2061 = vld [vmem:[%s2059 + $0x8] sm:$0xff]
        %v2062 = vld [vmem:[%s2059 + $0x10] sm:$0xff]
        %v2063 = vld [vmem:[%s2059 + $0x18] sm:$0xff]
        %v2064 = vld [vmem:[%s2059 + $0x20] sm:$0xff]
        %v2065 = vld [vmem:[%s2059 + $0x28] sm:$0xff]
        %v2066 = vld [vmem:[%s2059 + $0x30] sm:$0xff]
        %v2067 = vld [vmem:[%s2059 + $0x38] sm:$0xff]
        %v2068 = vld [vmem:[%s2059 + $0x40] sm:$0xff]
        %v2069 = vld [vmem:[%s2059 + $0x48] sm:$0xff]
        %v2070 = vld [vmem:[%s2059 + $0x50] sm:$0xff]
        %v2071 = vld [vmem:[%s2059 + $0x58] sm:$0xff]
        %v2072 = vld [vmem:[%s2059 + $0x60] sm:$0xff]
        %v2073 = vld [vmem:[%s2059 + $0x68] sm:$0xff]
        %v2074 = vld [vmem:[%s2059 + $0x70] sm:$0xff]
        %v2075 = vld [vmem:[%s2059 + $0x78] sm:$0xff]
        %2076 = vmatprep.subr.mxu0 0.0
        %2077 = vmatpush1.msra.mxu0 %v2060
        %2078 = vmatprep.subr.mxu0 0.0
        %2079 = vmatpush1.msra.mxu0 %v2061
        %2080 = vmatprep.subr.mxu0 0.0
        %2081 = vmatpush1.msra.mxu0 %v2062
        %2082 = vmatprep.subr.mxu0 0.0
        %2083 = vmatpush1.msra.mxu0 %v2063
        %2084 = vmatprep.subr.mxu0 0.0
        %2085 = vmatpush1.msra.mxu0 %v2064
        %2086 = vmatprep.subr.mxu0 0.0
        %2087 = vmatpush1.msra.mxu0 %v2065
        %2088 = vmatprep.subr.mxu0 0.0
        %2089 = vmatpush1.msra.mxu0 %v2066
        %2090 = vmatprep.subr.mxu0 0.0
        %2091 = vmatpush1.msra.mxu0 %v2067
        %2092 = vmatprep.subr.mxu0 0.0
        %2093 = vmatpush1.msra.mxu0 %v2068
        %2094 = vmatprep.subr.mxu0 0.0
        %2095 = vmatpush1.msra.mxu0 %v2069
        %2096 = vmatprep.subr.mxu0 0.0
        %2097 = vmatpush1.msra.mxu0 %v2070
        %2098 = vmatprep.subr.mxu0 0.0
        %2099 = vmatpush1.msra.mxu0 %v2071
        %2100 = vmatprep.subr.mxu0 0.0
        %2101 = vmatpush1.msra.mxu0 %v2072
        %2102 = vmatprep.subr.mxu0 0.0
        %2103 = vmatpush1.msra.mxu0 %v2073
        %2104 = vmatprep.subr.mxu0 0.0
        %2105 = vmatpush1.msra.mxu0 %v2074
        %2106 = vmatprep.subr.mxu0 0.0
        %2107 = vmatpush1.msra.mxu0 %v2075
        %2108 = vmatprep.subr.mxu0 0.0
        %2109 = vmatpush1.msra.mxu0 0.0
        %2110 = vmatprep.subr.mxu0 0.0
        %2111 = vmatpush1.msra.mxu0 0.0
        %2112 = vmatprep.subr.mxu0 0.0
        %2113 = vmatpush1.msra.mxu0 0.0
        %2114 = vmatprep.subr.mxu0 0.0
        %2115 = vmatpush1.msra.mxu0 0.0
        %2116 = vmatprep.subr.mxu0 0.0
        %2117 = vmatpush1.msra.mxu0 0.0
        %2118 = vmatprep.subr.mxu0 0.0
        %2119 = vmatpush1.msra.mxu0 0.0
        %2120 = vmatprep.subr.mxu0 0.0
        %2121 = vmatpush1.msra.mxu0 0.0
        %2122 = vmatprep.subr.mxu0 0.0
        %2123 = vmatpush1.msra.mxu0 0.0
        %2124 = vmatprep.subr.mxu0 0.0
        %2125 = vmatpush1.msra.mxu0 0.0
        %2126 = vmatprep.subr.mxu0 0.0
        %2127 = vmatpush1.msra.mxu0 0.0
        %2128 = vmatprep.subr.mxu0 0.0
        %2129 = vmatpush1.msra.mxu0 0.0
        %2130 = vmatprep.subr.mxu0 0.0
        %2131 = vmatpush1.msra.mxu0 0.0
        %2132 = vmatprep.subr.mxu0 0.0
        %2133 = vmatpush1.msra.mxu0 0.0
        %2134 = vmatprep.subr.mxu0 0.0
        %2135 = vmatpush1.msra.mxu0 0.0
        %2136 = vmatprep.subr.mxu0 0.0
        %2137 = vmatpush1.msra.mxu0 0.0
        %2138 = vmatprep.subr.mxu0 0.0
        %2139 = vmatpush1.msra.mxu0 0.0
        %2140 = vmatprep.mubr.f32.mxu0 0.0
        %2141 = vmatmul.mubr.f32.gmra.mrb[0].mxu0 %v576
        %v2142 = vpop.f32.mrb[0].mxu0
        %v2143 = vadd.f32 0.0, %v2142
        %v2144 = vpop.f32.mrb[0].mxu0
        %2145 = vdwg.mxu0
        %v2146 = vmul.f32 %v2143, %v577
        %2147 = vmatprep.subr.mxu0 0.0
        %2148 = vmatpush1.msra.mxu0 %v579
        %2149 = vmatprep.subr.mxu0 0.0
        %2150 = vmatpush1.msra.mxu0 %v580
        %2151 = vmatprep.subr.mxu0 0.0
        %2152 = vmatpush1.msra.mxu0 %v581
        %2153 = vmatprep.subr.mxu0 0.0
        %2154 = vmatpush1.msra.mxu0 %v582
        %2155 = vmatprep.subr.mxu0 0.0
        %2156 = vmatpush1.msra.mxu0 %v583
        %2157 = vmatprep.subr.mxu0 0.0
        %2158 = vmatpush1.msra.mxu0 %v584
        %2159 = vmatprep.subr.mxu0 0.0
        %2160 = vmatpush1.msra.mxu0 %v585
        %2161 = vmatprep.subr.mxu0 0.0
        %2162 = vmatpush1.msra.mxu0 %v586
        %2163 = vmatprep.subr.mxu0 0.0
        %2164 = vmatpush1.msra.mxu0 %v587
        %2165 = vmatprep.subr.mxu0 0.0
        %2166 = vmatpush1.msra.mxu0 %v588
        %2167 = vmatprep.subr.mxu0 0.0
        %2168 = vmatpush1.msra.mxu0 %v589
        %2169 = vmatprep.subr.mxu0 0.0
        %2170 = vmatpush1.msra.mxu0 %v590
        %2171 = vmatprep.subr.mxu0 0.0
        %2172 = vmatpush1.msra.mxu0 %v591
        %2173 = vmatprep.subr.mxu0 0.0
        %2174 = vmatpush1.msra.mxu0 %v592
        %2175 = vmatprep.subr.mxu0 0.0
        %2176 = vmatpush1.msra.mxu0 %v593
        %2177 = vmatprep.subr.mxu0 0.0
        %2178 = vmatpush1.msra.mxu0 %v594
        %2179 = vmatprep.subr.mxu0 0.0
        %2180 = vmatpush1.msra.mxu0 0.0
        %2181 = vmatprep.subr.mxu0 0.0
        %2182 = vmatpush1.msra.mxu0 0.0
        %2183 = vmatprep.subr.mxu0 0.0
        %2184 = vmatpush1.msra.mxu0 0.0
        %2185 = vmatprep.subr.mxu0 0.0
        %2186 = vmatpush1.msra.mxu0 0.0
        %2187 = vmatprep.subr.mxu0 0.0
        %2188 = vmatpush1.msra.mxu0 0.0
        %2189 = vmatprep.subr.mxu0 0.0
        %2190 = vmatpush1.msra.mxu0 0.0
        %2191 = vmatprep.subr.mxu0 0.0
        %2192 = vmatpush1.msra.mxu0 0.0
        %2193 = vmatprep.subr.mxu0 0.0
        %2194 = vmatpush1.msra.mxu0 0.0
        %2195 = vmatprep.subr.mxu0 0.0
        %2196 = vmatpush1.msra.mxu0 0.0
        %2197 = vmatprep.subr.mxu0 0.0
        %2198 = vmatpush1.msra.mxu0 0.0
        %2199 = vmatprep.subr.mxu0 0.0
        %2200 = vmatpush1.msra.mxu0 0.0
        %2201 = vmatprep.subr.mxu0 0.0
        %2202 = vmatpush1.msra.mxu0 0.0
        %2203 = vmatprep.subr.mxu0 0.0
        %2204 = vmatpush1.msra.mxu0 0.0
        %2205 = vmatprep.subr.mxu0 0.0
        %2206 = vmatpush1.msra.mxu0 0.0
        %2207 = vmatprep.subr.mxu0 0.0
        %2208 = vmatpush1.msra.mxu0 0.0
        %2209 = vmatprep.subr.mxu0 0.0
        %2210 = vmatpush1.msra.mxu0 0.0
        %2211 = vmatprep.mubr.f32.mxu0 0.0
        %2212 = vmatmul.mubr.f32.gmra.mrb[0].mxu0 %v2143
        %v2213 = vpop.f32.mrb[0].mxu0
        %v2214 = vadd.f32 0.0, %v2213
        %v2215 = vpop.f32.mrb[0].mxu0
        %2216 = vdwg.mxu0
        %v2217 = vmul.f32 %v2214, %v578
        %v2218 = vadd.f32 %v2146, %v2217
        %s2219 = scalar_lea.vmem [#allocation8], 1280
        %v2220 = vld [vmem:[%s2219] sm:$0xff]
        %v2221 = vld [vmem:[%s2219 + $0x8] sm:$0xff]
        %v2222 = vld [vmem:[%s2219 + $0x10] sm:$0xff]
        %v2223 = vld [vmem:[%s2219 + $0x18] sm:$0xff]
        %v2224 = vld [vmem:[%s2219 + $0x20] sm:$0xff]
        %v2225 = vld [vmem:[%s2219 + $0x28] sm:$0xff]
        %v2226 = vld [vmem:[%s2219 + $0x30] sm:$0xff]
        %v2227 = vld [vmem:[%s2219 + $0x38] sm:$0xff]
        %v2228 = vld [vmem:[%s2219 + $0x40] sm:$0xff]
        %v2229 = vld [vmem:[%s2219 + $0x48] sm:$0xff]
        %v2230 = vld [vmem:[%s2219 + $0x50] sm:$0xff]
        %v2231 = vld [vmem:[%s2219 + $0x58] sm:$0xff]
        %v2232 = vld [vmem:[%s2219 + $0x60] sm:$0xff]
        %v2233 = vld [vmem:[%s2219 + $0x68] sm:$0xff]
        %v2234 = vld [vmem:[%s2219 + $0x70] sm:$0xff]
        %v2235 = vld [vmem:[%s2219 + $0x78] sm:$0xff]
        %2236 = vmatprep.subr.mxu0 0.0
        %2237 = vmatpush1.msra.mxu0 %v2220
        %2238 = vmatprep.subr.mxu0 0.0
        %2239 = vmatpush1.msra.mxu0 %v2221
        %2240 = vmatprep.subr.mxu0 0.0
        %2241 = vmatpush1.msra.mxu0 %v2222
        %2242 = vmatprep.subr.mxu0 0.0
        %2243 = vmatpush1.msra.mxu0 %v2223
        %2244 = vmatprep.subr.mxu0 0.0
        %2245 = vmatpush1.msra.mxu0 %v2224
        %2246 = vmatprep.subr.mxu0 0.0
        %2247 = vmatpush1.msra.mxu0 %v2225
        %2248 = vmatprep.subr.mxu0 0.0
        %2249 = vmatpush1.msra.mxu0 %v2226
        %2250 = vmatprep.subr.mxu0 0.0
        %2251 = vmatpush1.msra.mxu0 %v2227
        %2252 = vmatprep.subr.mxu0 0.0
        %2253 = vmatpush1.msra.mxu0 %v2228
        %2254 = vmatprep.subr.mxu0 0.0
        %2255 = vmatpush1.msra.mxu0 %v2229
        %2256 = vmatprep.subr.mxu0 0.0
        %2257 = vmatpush1.msra.mxu0 %v2230
        %2258 = vmatprep.subr.mxu0 0.0
        %2259 = vmatpush1.msra.mxu0 %v2231
        %2260 = vmatprep.subr.mxu0 0.0
        %2261 = vmatpush1.msra.mxu0 %v2232
        %2262 = vmatprep.subr.mxu0 0.0
        %2263 = vmatpush1.msra.mxu0 %v2233
        %2264 = vmatprep.subr.mxu0 0.0
        %2265 = vmatpush1.msra.mxu0 %v2234
        %2266 = vmatprep.subr.mxu0 0.0
        %2267 = vmatpush1.msra.mxu0 %v2235
        %2268 = vmatprep.subr.mxu0 0.0
        %2269 = vmatpush1.msra.mxu0 0.0
        %2270 = vmatprep.subr.mxu0 0.0
        %2271 = vmatpush1.msra.mxu0 0.0
        %2272 = vmatprep.subr.mxu0 0.0
        %2273 = vmatpush1.msra.mxu0 0.0
        %2274 = vmatprep.subr.mxu0 0.0
        %2275 = vmatpush1.msra.mxu0 0.0
        %2276 = vmatprep.subr.mxu0 0.0
        %2277 = vmatpush1.msra.mxu0 0.0
        %2278 = vmatprep.subr.mxu0 0.0
        %2279 = vmatpush1.msra.mxu0 0.0
        %2280 = vmatprep.subr.mxu0 0.0
        %2281 = vmatpush1.msra.mxu0 0.0
        %2282 = vmatprep.subr.mxu0 0.0
        %2283 = vmatpush1.msra.mxu0 0.0
        %2284 = vmatprep.subr.mxu0 0.0
        %2285 = vmatpush1.msra.mxu0 0.0
        %2286 = vmatprep.subr.mxu0 0.0
        %2287 = vmatpush1.msra.mxu0 0.0
        %2288 = vmatprep.subr.mxu0 0.0
        %2289 = vmatpush1.msra.mxu0 0.0
        %2290 = vmatprep.subr.mxu0 0.0
        %2291 = vmatpush1.msra.mxu0 0.0
        %2292 = vmatprep.subr.mxu0 0.0
        %2293 = vmatpush1.msra.mxu0 0.0
        %2294 = vmatprep.subr.mxu0 0.0
        %2295 = vmatpush1.msra.mxu0 0.0
        %2296 = vmatprep.subr.mxu0 0.0
        %2297 = vmatpush1.msra.mxu0 0.0
        %2298 = vmatprep.subr.mxu0 0.0
        %2299 = vmatpush1.msra.mxu0 0.0
        %2300 = vmatprep.mubr.f32.mxu0 0.0
        %2301 = vmatmul.mubr.f32.gmra.mrb[0].mxu0 %v576
        %v2302 = vpop.f32.mrb[0].mxu0
        %v2303 = vadd.f32 0.0, %v2302
        %v2304 = vpop.f32.mrb[0].mxu0
        %2305 = vdwg.mxu0
        %2306 = vmatprep.subr.mxu0 0.0
        %2307 = vmatpush1.xpose.msra.mxu0 %v2218
        %2308 = vmatprep.subr.mxu0 0.0
        %2309 = vmatpush1.xpose.msra.mxu0 0.0
        %2310 = vmatprep.subr.mxu0 0.0
        %2311 = vmatpush1.xpose.msra.mxu0 0.0
        %2312 = vmatprep.subr.mxu0 0.0
        %2313 = vmatpush1.xpose.msra.mxu0 0.0
        %2314 = vmatprep.subr.mxu0 0.0
        %2315 = vmatpush1.xpose.msra.mxu0 0.0
        %2316 = vmatprep.subr.mxu0 0.0
        %2317 = vmatpush1.xpose.msra.mxu0 0.0
        %2318 = vmatprep.subr.mxu0 0.0
        %2319 = vmatpush1.xpose.msra.mxu0 0.0
        %2320 = vmatprep.subr.mxu0 0.0
        %2321 = vmatpush1.xpose.msra.mxu0 0.0
        %2322 = vmatprep.subr.mxu0 0.0
        %2323 = vmatpush1.xpose.msra.mxu0 0.0
        %2324 = vmatprep.subr.mxu0 0.0
        %2325 = vmatpush1.xpose.msra.mxu0 0.0
        %2326 = vmatprep.subr.mxu0 0.0
        %2327 = vmatpush1.xpose.msra.mxu0 0.0
        %2328 = vmatprep.subr.mxu0 0.0
        %2329 = vmatpush1.xpose.msra.mxu0 0.0
        %2330 = vmatprep.subr.mxu0 0.0
        %2331 = vmatpush1.xpose.msra.mxu0 0.0
        %2332 = vmatprep.subr.mxu0 0.0
        %2333 = vmatpush1.xpose.msra.mxu0 0.0
        %2334 = vmatprep.subr.mxu0 0.0
        %2335 = vmatpush1.xpose.msra.mxu0 0.0
        %2336 = vmatprep.subr.mxu0 0.0
        %2337 = vmatpush1.xpose.msra.mxu0 0.0
        %2338 = vmatprep.subr.mxu0 0.0
        %2339 = vmatpush1.xpose.msra.mxu0 0.0
        %2340 = vmatprep.subr.mxu0 0.0
        %2341 = vmatpush1.xpose.msra.mxu0 0.0
        %2342 = vmatprep.subr.mxu0 0.0
        %2343 = vmatpush1.xpose.msra.mxu0 0.0
        %2344 = vmatprep.subr.mxu0 0.0
        %2345 = vmatpush1.xpose.msra.mxu0 0.0
        %2346 = vmatprep.subr.mxu0 0.0
        %2347 = vmatpush1.xpose.msra.mxu0 0.0
        %2348 = vmatprep.subr.mxu0 0.0
        %2349 = vmatpush1.xpose.msra.mxu0 0.0
        %2350 = vmatprep.subr.mxu0 0.0
        %2351 = vmatpush1.xpose.msra.mxu0 0.0
        %2352 = vmatprep.subr.mxu0 0.0
        %2353 = vmatpush1.xpose.msra.mxu0 0.0
        %2354 = vmatprep.subr.mxu0 0.0
        %2355 = vmatpush1.xpose.msra.mxu0 0.0
        %2356 = vmatprep.subr.mxu0 0.0
        %2357 = vmatpush1.xpose.msra.mxu0 0.0
        %2358 = vmatprep.subr.mxu0 0.0
        %2359 = vmatpush1.xpose.msra.mxu0 0.0
        %2360 = vmatprep.subr.mxu0 0.0
        %2361 = vmatpush1.xpose.msra.mxu0 0.0
        %2362 = vmatprep.subr.mxu0 0.0
        %2363 = vmatpush1.xpose.msra.mxu0 0.0
        %2364 = vmatprep.subr.mxu0 0.0
        %2365 = vmatpush1.xpose.msra.mxu0 0.0
        %2366 = vmatprep.subr.mxu0 0.0
        %2367 = vmatpush1.xpose.msra.mxu0 0.0
        %2368 = vmatprep.subr.mxu0 0.0
        %2369 = vmatpush1.xpose.msra.mxu0 0.0
        %2370 = vmatprep.mubr.f32.mxu0 0.0
        %2371 = vmatmul.mubr.f32.gmra.mrb[0].mxu0 %v2058
        %v2372 = vpop.f32.mrb[0].mxu0
        %v2373 = vadd.f32 0.0, %v2372
        %v2374 = vpop.f32.mrb[0].mxu0
        %2375 = vdwg.mxu0
        %v2376 = vmul.f32 %v2373, 0.17677669
        %v2377 = vsel %vm599, %v2376, -1e+30
        %v2378 = vsel %vm1078, %v2377, -inf
        %2379 = vmax.xlane.f32.xlu0 %v2378
        %v2380 = vpop.xlane.xlu0 %2379
        %v2381 = vsub.f32 %v2377, %v2380
        %v2382 = vmul.f32 %v2381, 1.442695
        %v2383 = vpow.pop %v2382
        %v2384 = vsel %vm1078, %v2383, 0.0
        %2385 = vadd.xlane.f32.xlu0 %v2384
        %v2386 = vpop.xlane.xlu0 %2385
        %v2387 = vrcp.pop %v2386
        %v2388 = vmul.f32 %v2383, %v2387
        %v2390 = vsel %vm1078, %v2388, 0
        %2392 = vmatprep.subr.mxu0 0.0
        %2393 = vmatpush1.msra.mxu0 %v2303
        %2394 = vmatprep.subr.mxu0 0.0
        %2395 = vmatpush1.msra.mxu0 0.0
        %2396 = vmatprep.subr.mxu0 0.0
        %2397 = vmatpush1.msra.mxu0 0.0
        %2398 = vmatprep.subr.mxu0 0.0
        %2399 = vmatpush1.msra.mxu0 0.0
        %2400 = vmatprep.subr.mxu0 0.0
        %2401 = vmatpush1.msra.mxu0 0.0
        %2402 = vmatprep.subr.mxu0 0.0
        %2403 = vmatpush1.msra.mxu0 0.0
        %2404 = vmatprep.subr.mxu0 0.0
        %2405 = vmatpush1.msra.mxu0 0.0
        %2406 = vmatprep.subr.mxu0 0.0
        %2407 = vmatpush1.msra.mxu0 0.0
        %2408 = vmatprep.subr.mxu0 0.0
        %2409 = vmatpush1.msra.mxu0 0.0
        %2410 = vmatprep.subr.mxu0 0.0
        %2411 = vmatpush1.msra.mxu0 0.0
        %2412 = vmatprep.subr.mxu0 0.0
        %2413 = vmatpush1.msra.mxu0 0.0
        %2414 = vmatprep.subr.mxu0 0.0
        %2415 = vmatpush1.msra.mxu0 0.0
        %2416 = vmatprep.subr.mxu0 0.0
        %2417 = vmatpush1.msra.mxu0 0.0
        %2418 = vmatprep.subr.mxu0 0.0
        %2419 = vmatpush1.msra.mxu0 0.0
        %2420 = vmatprep.subr.mxu0 0.0
        %2421 = vmatpush1.msra.mxu0 0.0
        %2422 = vmatprep.subr.mxu0 0.0
        %2423 = vmatpush1.msra.mxu0 0.0
        %2424 = vmatprep.subr.mxu0 0.0
        %2425 = vmatpush1.msra.mxu0 0.0
        %2426 = vmatprep.subr.mxu0 0.0
        %2427 = vmatpush1.msra.mxu0 0.0
        %2428 = vmatprep.subr.mxu0 0.0
        %2429 = vmatpush1.msra.mxu0 0.0
        %2430 = vmatprep.subr.mxu0 0.0
        %2431 = vmatpush1.msra.mxu0 0.0
        %2432 = vmatprep.subr.mxu0 0.0
        %2433 = vmatpush1.msra.mxu0 0.0
        %2434 = vmatprep.subr.mxu0 0.0
        %2435 = vmatpush1.msra.mxu0 0.0
        %2436 = vmatprep.subr.mxu0 0.0
        %2437 = vmatpush1.msra.mxu0 0.0
        %2438 = vmatprep.subr.mxu0 0.0
        %2439 = vmatpush1.msra.mxu0 0.0
        %2440 = vmatprep.subr.mxu0 0.0
        %2441 = vmatpush1.msra.mxu0 0.0
        %2442 = vmatprep.subr.mxu0 0.0
        %2443 = vmatpush1.msra.mxu0 0.0
        %2444 = vmatprep.subr.mxu0 0.0
        %2445 = vmatpush1.msra.mxu0 0.0
        %2446 = vmatprep.subr.mxu0 0.0
        %2447 = vmatpush1.msra.mxu0 0.0
        %2448 = vmatprep.subr.mxu0 0.0
        %2449 = vmatpush1.msra.mxu0 0.0
        %2450 = vmatprep.subr.mxu0 0.0
        %2451 = vmatpush1.msra.mxu0 0.0
        %2452 = vmatprep.subr.mxu0 0.0
        %2453 = vmatpush1.msra.mxu0 0.0
        %2454 = vmatprep.subr.mxu0 0.0
        %2455 = vmatpush1.msra.mxu0 0.0
        %2456 = vmatprep.mubr.f32.mxu0 0.0
        %2457 = vmatmul.mubr.f32.gmra.mrb[0].mxu0 %v2390
        %v2458 = vpop.f32.mrb[0].mxu0
        %v2459 = vadd.f32 0.0, %v2458
        %v2460 = vpop.f32.mrb[0].mxu0
        %2461 = vdwg.mxu0
        %s2462 = scalar_lea.vmem [#allocation9], 256
        %v2463 = vld [vmem:[%s2462] sm:$0xff]
        %v2464 = vld [vmem:[%s2462 + $0x8] sm:$0xff]
        %v2465 = vld [vmem:[%s2462 + $0x10] sm:$0xff]
        %v2466 = vld [vmem:[%s2462 + $0x18] sm:$0xff]
        %v2467 = vld [vmem:[%s2462 + $0x20] sm:$0xff]
        %v2468 = vld [vmem:[%s2462 + $0x28] sm:$0xff]
        %v2469 = vld [vmem:[%s2462 + $0x30] sm:$0xff]
        %v2470 = vld [vmem:[%s2462 + $0x38] sm:$0xff]
        %v2471 = vld [vmem:[%s2462 + $0x40] sm:$0xff]
        %v2472 = vld [vmem:[%s2462 + $0x48] sm:$0xff]
        %v2473 = vld [vmem:[%s2462 + $0x50] sm:$0xff]
        %v2474 = vld [vmem:[%s2462 + $0x58] sm:$0xff]
        %v2475 = vld [vmem:[%s2462 + $0x60] sm:$0xff]
        %v2476 = vld [vmem:[%s2462 + $0x68] sm:$0xff]
        %v2477 = vld [vmem:[%s2462 + $0x70] sm:$0xff]
        %v2478 = vld [vmem:[%s2462 + $0x78] sm:$0xff]
        %2479 = vmatprep.subr.mxu0 0.0
        %2480 = vmatpush1.msra.mxu0 %v2463
        %2481 = vmatprep.subr.mxu0 0.0
        %2482 = vmatpush1.msra.mxu0 %v2464
        %2483 = vmatprep.subr.mxu0 0.0
        %2484 = vmatpush1.msra.mxu0 %v2465
        %2485 = vmatprep.subr.mxu0 0.0
        %2486 = vmatpush1.msra.mxu0 %v2466
        %2487 = vmatprep.subr.mxu0 0.0
        %2488 = vmatpush1.msra.mxu0 %v2467
        %2489 = vmatprep.subr.mxu0 0.0
        %2490 = vmatpush1.msra.mxu0 %v2468
        %2491 = vmatprep.subr.mxu0 0.0
        %2492 = vmatpush1.msra.mxu0 %v2469
        %2493 = vmatprep.subr.mxu0 0.0
        %2494 = vmatpush1.msra.mxu0 %v2470
        %2495 = vmatprep.subr.mxu0 0.0
        %2496 = vmatpush1.msra.mxu0 %v2471
        %2497 = vmatprep.subr.mxu0 0.0
        %2498 = vmatpush1.msra.mxu0 %v2472
        %2499 = vmatprep.subr.mxu0 0.0
        %2500 = vmatpush1.msra.mxu0 %v2473
        %2501 = vmatprep.subr.mxu0 0.0
        %2502 = vmatpush1.msra.mxu0 %v2474
        %2503 = vmatprep.subr.mxu0 0.0
        %2504 = vmatpush1.msra.mxu0 %v2475
        %2505 = vmatprep.subr.mxu0 0.0
        %2506 = vmatpush1.msra.mxu0 %v2476
        %2507 = vmatprep.subr.mxu0 0.0
        %2508 = vmatpush1.msra.mxu0 %v2477
        %2509 = vmatprep.subr.mxu0 0.0
        %2510 = vmatpush1.msra.mxu0 %v2478
        %2511 = vmatprep.subr.mxu0 0.0
        %2512 = vmatpush1.msra.mxu0 0.0
        %2513 = vmatprep.subr.mxu0 0.0
        %2514 = vmatpush1.msra.mxu0 0.0
        %2515 = vmatprep.subr.mxu0 0.0
        %2516 = vmatpush1.msra.mxu0 0.0
        %2517 = vmatprep.subr.mxu0 0.0
        %2518 = vmatpush1.msra.mxu0 0.0
        %2519 = vmatprep.subr.mxu0 0.0
        %2520 = vmatpush1.msra.mxu0 0.0
        %2521 = vmatprep.subr.mxu0 0.0
        %2522 = vmatpush1.msra.mxu0 0.0
        %2523 = vmatprep.subr.mxu0 0.0
        %2524 = vmatpush1.msra.mxu0 0.0
        %2525 = vmatprep.subr.mxu0 0.0
        %2526 = vmatpush1.msra.mxu0 0.0
        %2527 = vmatprep.subr.mxu0 0.0
        %2528 = vmatpush1.msra.mxu0 0.0
        %2529 = vmatprep.subr.mxu0 0.0
        %2530 = vmatpush1.msra.mxu0 0.0
        %2531 = vmatprep.subr.mxu0 0.0
        %2532 = vmatpush1.msra.mxu0 0.0
        %2533 = vmatprep.subr.mxu0 0.0
        %2534 = vmatpush1.msra.mxu0 0.0
        %2535 = vmatprep.subr.mxu0 0.0
        %2536 = vmatpush1.msra.mxu0 0.0
        %2537 = vmatprep.subr.mxu0 0.0
        %2538 = vmatpush1.msra.mxu0 0.0
        %2539 = vmatprep.subr.mxu0 0.0
        %2540 = vmatpush1.msra.mxu0 0.0
        %2541 = vmatprep.subr.mxu0 0.0
        %2542 = vmatpush1.msra.mxu0 0.0
        %2543 = vmatprep.mubr.f32.mxu0 0.0
        %2544 = vmatmul.mubr.f32.gmra.mrb[0].mxu0 %v2459
        %v2545 = vpop.f32.mrb[0].mxu0
        %v2546 = vadd.f32 0.0, %v2545
        %v2547 = vpop.f32.mrb[0].mxu0
        %2548 = vdwg.mxu0
        %v2549 = vadd.f32 %v1896, %v2546
        %s2550 = scalar_lea.vmem [#allocation8], 384
        %v2551 = vld [vmem:[%s2550] sm:$0xff]
        %v2552 = vld [vmem:[%s2550 + $0x8] sm:$0xff]
        %v2553 = vld [vmem:[%s2550 + $0x10] sm:$0xff]
        %v2554 = vld [vmem:[%s2550 + $0x18] sm:$0xff]
        %v2555 = vld [vmem:[%s2550 + $0x20] sm:$0xff]
        %v2556 = vld [vmem:[%s2550 + $0x28] sm:$0xff]
        %v2557 = vld [vmem:[%s2550 + $0x30] sm:$0xff]
        %v2558 = vld [vmem:[%s2550 + $0x38] sm:$0xff]
        %v2559 = vld [vmem:[%s2550 + $0x40] sm:$0xff]
        %v2560 = vld [vmem:[%s2550 + $0x48] sm:$0xff]
        %v2561 = vld [vmem:[%s2550 + $0x50] sm:$0xff]
        %v2562 = vld [vmem:[%s2550 + $0x58] sm:$0xff]
        %v2563 = vld [vmem:[%s2550 + $0x60] sm:$0xff]
        %v2564 = vld [vmem:[%s2550 + $0x68] sm:$0xff]
        %v2565 = vld [vmem:[%s2550 + $0x70] sm:$0xff]
        %v2566 = vld [vmem:[%s2550 + $0x78] sm:$0xff]
        %2567 = vmatprep.subr.mxu0 0.0
        %2568 = vmatpush1.msra.mxu0 %v2551
        %2569 = vmatprep.subr.mxu0 0.0
        %2570 = vmatpush1.msra.mxu0 %v2552
        %2571 = vmatprep.subr.mxu0 0.0
        %2572 = vmatpush1.msra.mxu0 %v2553
        %2573 = vmatprep.subr.mxu0 0.0
        %2574 = vmatpush1.msra.mxu0 %v2554
        %2575 = vmatprep.subr.mxu0 0.0
        %2576 = vmatpush1.msra.mxu0 %v2555
        %2577 = vmatprep.subr.mxu0 0.0
        %2578 = vmatpush1.msra.mxu0 %v2556
        %2579 = vmatprep.subr.mxu0 0.0
        %2580 = vmatpush1.msra.mxu0 %v2557
        %2581 = vmatprep.subr.mxu0 0.0
        %2582 = vmatpush1.msra.mxu0 %v2558
        %2583 = vmatprep.subr.mxu0 0.0
        %2584 = vmatpush1.msra.mxu0 %v2559
        %2585 = vmatprep.subr.mxu0 0.0
        %2586 = vmatpush1.msra.mxu0 %v2560
        %2587 = vmatprep.subr.mxu0 0.0
        %2588 = vmatpush1.msra.mxu0 %v2561
        %2589 = vmatprep.subr.mxu0 0.0
        %2590 = vmatpush1.msra.mxu0 %v2562
        %2591 = vmatprep.subr.mxu0 0.0
        %2592 = vmatpush1.msra.mxu0 %v2563
        %2593 = vmatprep.subr.mxu0 0.0
        %2594 = vmatpush1.msra.mxu0 %v2564
        %2595 = vmatprep.subr.mxu0 0.0
        %2596 = vmatpush1.msra.mxu0 %v2565
        %2597 = vmatprep.subr.mxu0 0.0
        %2598 = vmatpush1.msra.mxu0 %v2566
        %2599 = vmatprep.subr.mxu0 0.0
        %2600 = vmatpush1.msra.mxu0 0.0
        %2601 = vmatprep.subr.mxu0 0.0
        %2602 = vmatpush1.msra.mxu0 0.0
        %2603 = vmatprep.subr.mxu0 0.0
        %2604 = vmatpush1.msra.mxu0 0.0
        %2605 = vmatprep.subr.mxu0 0.0
        %2606 = vmatpush1.msra.mxu0 0.0
        %2607 = vmatprep.subr.mxu0 0.0
        %2608 = vmatpush1.msra.mxu0 0.0
        %2609 = vmatprep.subr.mxu0 0.0
        %2610 = vmatpush1.msra.mxu0 0.0
        %2611 = vmatprep.subr.mxu0 0.0
        %2612 = vmatpush1.msra.mxu0 0.0
        %2613 = vmatprep.subr.mxu0 0.0
        %2614 = vmatpush1.msra.mxu0 0.0
        %2615 = vmatprep.subr.mxu0 0.0
        %2616 = vmatpush1.msra.mxu0 0.0
        %2617 = vmatprep.subr.mxu0 0.0
        %2618 = vmatpush1.msra.mxu0 0.0
        %2619 = vmatprep.subr.mxu0 0.0
        %2620 = vmatpush1.msra.mxu0 0.0
        %2621 = vmatprep.subr.mxu0 0.0
        %2622 = vmatpush1.msra.mxu0 0.0
        %2623 = vmatprep.subr.mxu0 0.0
        %2624 = vmatpush1.msra.mxu0 0.0
        %2625 = vmatprep.subr.mxu0 0.0
        %2626 = vmatpush1.msra.mxu0 0.0
        %2627 = vmatprep.subr.mxu0 0.0
        %2628 = vmatpush1.msra.mxu0 0.0
        %2629 = vmatprep.subr.mxu0 0.0
        %2630 = vmatpush1.msra.mxu0 0.0
        %2631 = vmatprep.mubr.f32.mxu0 0.0
        %2632 = vmatmul.mubr.f32.gmra.mrb[0].mxu0 %v576
        %v2633 = vpop.f32.mrb[0].mxu0
        %v2634 = vadd.f32 0.0, %v2633
        %v2635 = vpop.f32.mrb[0].mxu0
        %2636 = vdwg.mxu0
        %v2637 = vmul.f32 %v2634, %v577
        %2638 = vmatprep.subr.mxu0 0.0
        %2639 = vmatpush1.msra.mxu0 %v579
        %2640 = vmatprep.subr.mxu0 0.0
        %2641 = vmatpush1.msra.mxu0 %v580
        %2642 = vmatprep.subr.mxu0 0.0
        %2643 = vmatpush1.msra.mxu0 %v581
        %2644 = vmatprep.subr.mxu0 0.0
        %2645 = vmatpush1.msra.mxu0 %v582
        %2646 = vmatprep.subr.mxu0 0.0
        %2647 = vmatpush1.msra.mxu0 %v583
        %2648 = vmatprep.subr.mxu0 0.0
        %2649 = vmatpush1.msra.mxu0 %v584
        %2650 = vmatprep.subr.mxu0 0.0
        %2651 = vmatpush1.msra.mxu0 %v585
        %2652 = vmatprep.subr.mxu0 0.0
        %2653 = vmatpush1.msra.mxu0 %v586
        %2654 = vmatprep.subr.mxu0 0.0
        %2655 = vmatpush1.msra.mxu0 %v587
        %2656 = vmatprep.subr.mxu0 0.0
        %2657 = vmatpush1.msra.mxu0 %v588
        %2658 = vmatprep.subr.mxu0 0.0
        %2659 = vmatpush1.msra.mxu0 %v589
        %2660 = vmatprep.subr.mxu0 0.0
        %2661 = vmatpush1.msra.mxu0 %v590
        %2662 = vmatprep.subr.mxu0 0.0
        %2663 = vmatpush1.msra.mxu0 %v591
        %2664 = vmatprep.subr.mxu0 0.0
        %2665 = vmatpush1.msra.mxu0 %v592
        %2666 = vmatprep.subr.mxu0 0.0
        %2667 = vmatpush1.msra.mxu0 %v593
        %2668 = vmatprep.subr.mxu0 0.0
        %2669 = vmatpush1.msra.mxu0 %v594
        %2670 = vmatprep.subr.mxu0 0.0
        %2671 = vmatpush1.msra.mxu0 0.0
        %2672 = vmatprep.subr.mxu0 0.0
        %2673 = vmatpush1.msra.mxu0 0.0
        %2674 = vmatprep.subr.mxu0 0.0
        %2675 = vmatpush1.msra.mxu0 0.0
        %2676 = vmatprep.subr.mxu0 0.0
        %2677 = vmatpush1.msra.mxu0 0.0
        %2678 = vmatprep.subr.mxu0 0.0
        %2679 = vmatpush1.msra.mxu0 0.0
        %2680 = vmatprep.subr.mxu0 0.0
        %2681 = vmatpush1.msra.mxu0 0.0
        %2682 = vmatprep.subr.mxu0 0.0
        %2683 = vmatpush1.msra.mxu0 0.0
        %2684 = vmatprep.subr.mxu0 0.0
        %2685 = vmatpush1.msra.mxu0 0.0
        %2686 = vmatprep.subr.mxu0 0.0
        %2687 = vmatpush1.msra.mxu0 0.0
        %2688 = vmatprep.subr.mxu0 0.0
        %2689 = vmatpush1.msra.mxu0 0.0
        %2690 = vmatprep.subr.mxu0 0.0
        %2691 = vmatpush1.msra.mxu0 0.0
        %2692 = vmatprep.subr.mxu0 0.0
        %2693 = vmatpush1.msra.mxu0 0.0
        %2694 = vmatprep.subr.mxu0 0.0
        %2695 = vmatpush1.msra.mxu0 0.0
        %2696 = vmatprep.subr.mxu0 0.0
        %2697 = vmatpush1.msra.mxu0 0.0
        %2698 = vmatprep.subr.mxu0 0.0
        %2699 = vmatpush1.msra.mxu0 0.0
        %2700 = vmatprep.subr.mxu0 0.0
        %2701 = vmatpush1.msra.mxu0 0.0
        %2702 = vmatprep.mubr.f32.mxu0 0.0
        %2703 = vmatmul.mubr.f32.gmra.mrb[0].mxu0 %v2634
        %v2704 = vpop.f32.mrb[0].mxu0
        %v2705 = vadd.f32 0.0, %v2704
        %v2706 = vpop.f32.mrb[0].mxu0
        %2707 = vdwg.mxu0
        %v2708 = vmul.f32 %v2705, %v578
        %v2709 = vadd.f32 %v2637, %v2708
        %s2710 = scalar_lea.vmem [#allocation8], 896
        %v2711 = vld [vmem:[%s2710] sm:$0xff]
        %v2712 = vld [vmem:[%s2710 + $0x8] sm:$0xff]
        %v2713 = vld [vmem:[%s2710 + $0x10] sm:$0xff]
        %v2714 = vld [vmem:[%s2710 + $0x18] sm:$0xff]
        %v2715 = vld [vmem:[%s2710 + $0x20] sm:$0xff]
        %v2716 = vld [vmem:[%s2710 + $0x28] sm:$0xff]
        %v2717 = vld [vmem:[%s2710 + $0x30] sm:$0xff]
        %v2718 = vld [vmem:[%s2710 + $0x38] sm:$0xff]
        %v2719 = vld [vmem:[%s2710 + $0x40] sm:$0xff]
        %v2720 = vld [vmem:[%s2710 + $0x48] sm:$0xff]
        %v2721 = vld [vmem:[%s2710 + $0x50] sm:$0xff]
        %v2722 = vld [vmem:[%s2710 + $0x58] sm:$0xff]
        %v2723 = vld [vmem:[%s2710 + $0x60] sm:$0xff]
        %v2724 = vld [vmem:[%s2710 + $0x68] sm:$0xff]
        %v2725 = vld [vmem:[%s2710 + $0x70] sm:$0xff]
        %v2726 = vld [vmem:[%s2710 + $0x78] sm:$0xff]
        %2727 = vmatprep.subr.mxu0 0.0
        %2728 = vmatpush1.msra.mxu0 %v2711
        %2729 = vmatprep.subr.mxu0 0.0
        %2730 = vmatpush1.msra.mxu0 %v2712
        %2731 = vmatprep.subr.mxu0 0.0
        %2732 = vmatpush1.msra.mxu0 %v2713
        %2733 = vmatprep.subr.mxu0 0.0
        %2734 = vmatpush1.msra.mxu0 %v2714
        %2735 = vmatprep.subr.mxu0 0.0
        %2736 = vmatpush1.msra.mxu0 %v2715
        %2737 = vmatprep.subr.mxu0 0.0
        %2738 = vmatpush1.msra.mxu0 %v2716
        %2739 = vmatprep.subr.mxu0 0.0
        %2740 = vmatpush1.msra.mxu0 %v2717
        %2741 = vmatprep.subr.mxu0 0.0
        %2742 = vmatpush1.msra.mxu0 %v2718
        %2743 = vmatprep.subr.mxu0 0.0
        %2744 = vmatpush1.msra.mxu0 %v2719
        %2745 = vmatprep.subr.mxu0 0.0
        %2746 = vmatpush1.msra.mxu0 %v2720
        %2747 = vmatprep.subr.mxu0 0.0
        %2748 = vmatpush1.msra.mxu0 %v2721
        %2749 = vmatprep.subr.mxu0 0.0
        %2750 = vmatpush1.msra.mxu0 %v2722
        %2751 = vmatprep.subr.mxu0 0.0
        %2752 = vmatpush1.msra.mxu0 %v2723
        %2753 = vmatprep.subr.mxu0 0.0
        %2754 = vmatpush1.msra.mxu0 %v2724
        %2755 = vmatprep.subr.mxu0 0.0
        %2756 = vmatpush1.msra.mxu0 %v2725
        %2757 = vmatprep.subr.mxu0 0.0
        %2758 = vmatpush1.msra.mxu0 %v2726
        %2759 = vmatprep.subr.mxu0 0.0
        %2760 = vmatpush1.msra.mxu0 0.0
        %2761 = vmatprep.subr.mxu0 0.0
        %2762 = vmatpush1.msra.mxu0 0.0
        %2763 = vmatprep.subr.mxu0 0.0
        %2764 = vmatpush1.msra.mxu0 0.0
        %2765 = vmatprep.subr.mxu0 0.0
        %2766 = vmatpush1.msra.mxu0 0.0
        %2767 = vmatprep.subr.mxu0 0.0
        %2768 = vmatpush1.msra.mxu0 0.0
        %2769 = vmatprep.subr.mxu0 0.0
        %2770 = vmatpush1.msra.mxu0 0.0
        %2771 = vmatprep.subr.mxu0 0.0
        %2772 = vmatpush1.msra.mxu0 0.0
        %2773 = vmatprep.subr.mxu0 0.0
        %2774 = vmatpush1.msra.mxu0 0.0
        %2775 = vmatprep.subr.mxu0 0.0
        %2776 = vmatpush1.msra.mxu0 0.0
        %2777 = vmatprep.subr.mxu0 0.0
        %2778 = vmatpush1.msra.mxu0 0.0
        %2779 = vmatprep.subr.mxu0 0.0
        %2780 = vmatpush1.msra.mxu0 0.0
        %2781 = vmatprep.subr.mxu0 0.0
        %2782 = vmatpush1.msra.mxu0 0.0
        %2783 = vmatprep.subr.mxu0 0.0
        %2784 = vmatpush1.msra.mxu0 0.0
        %2785 = vmatprep.subr.mxu0 0.0
        %2786 = vmatpush1.msra.mxu0 0.0
        %2787 = vmatprep.subr.mxu0 0.0
        %2788 = vmatpush1.msra.mxu0 0.0
        %2789 = vmatprep.subr.mxu0 0.0
        %2790 = vmatpush1.msra.mxu0 0.0
        %2791 = vmatprep.mubr.f32.mxu0 0.0
        %2792 = vmatmul.mubr.f32.gmra.mrb[0].mxu0 %v576
        %v2793 = vpop.f32.mrb[0].mxu0
        %v2794 = vadd.f32 0.0, %v2793
        %v2795 = vpop.f32.mrb[0].mxu0
        %2796 = vdwg.mxu0
        %v2797 = vmul.f32 %v2794, %v577
        %2798 = vmatprep.subr.mxu0 0.0
        %2799 = vmatpush1.msra.mxu0 %v579
        %2800 = vmatprep.subr.mxu0 0.0
        %2801 = vmatpush1.msra.mxu0 %v580
        %2802 = vmatprep.subr.mxu0 0.0
        %2803 = vmatpush1.msra.mxu0 %v581
        %2804 = vmatprep.subr.mxu0 0.0
        %2805 = vmatpush1.msra.mxu0 %v582
        %2806 = vmatprep.subr.mxu0 0.0
        %2807 = vmatpush1.msra.mxu0 %v583
        %2808 = vmatprep.subr.mxu0 0.0
        %2809 = vmatpush1.msra.mxu0 %v584
        %2810 = vmatprep.subr.mxu0 0.0
        %2811 = vmatpush1.msra.mxu0 %v585
        %2812 = vmatprep.subr.mxu0 0.0
        %2813 = vmatpush1.msra.mxu0 %v586
        %2814 = vmatprep.subr.mxu0 0.0
        %2815 = vmatpush1.msra.mxu0 %v587
        %2816 = vmatprep.subr.mxu0 0.0
        %2817 = vmatpush1.msra.mxu0 %v588
        %2818 = vmatprep.subr.mxu0 0.0
        %2819 = vmatpush1.msra.mxu0 %v589
        %2820 = vmatprep.subr.mxu0 0.0
        %2821 = vmatpush1.msra.mxu0 %v590
        %2822 = vmatprep.subr.mxu0 0.0
        %2823 = vmatpush1.msra.mxu0 %v591
        %2824 = vmatprep.subr.mxu0 0.0
        %2825 = vmatpush1.msra.mxu0 %v592
        %2826 = vmatprep.subr.mxu0 0.0
        %2827 = vmatpush1.msra.mxu0 %v593
        %2828 = vmatprep.subr.mxu0 0.0
        %2829 = vmatpush1.msra.mxu0 %v594
        %2830 = vmatprep.subr.mxu0 0.0
        %2831 = vmatpush1.msra.mxu0 0.0
        %2832 = vmatprep.subr.mxu0 0.0
        %2833 = vmatpush1.msra.mxu0 0.0
        %2834 = vmatprep.subr.mxu0 0.0
        %2835 = vmatpush1.msra.mxu0 0.0
        %2836 = vmatprep.subr.mxu0 0.0
        %2837 = vmatpush1.msra.mxu0 0.0
        %2838 = vmatprep.subr.mxu0 0.0
        %2839 = vmatpush1.msra.mxu0 0.0
        %2840 = vmatprep.subr.mxu0 0.0
        %2841 = vmatpush1.msra.mxu0 0.0
        %2842 = vmatprep.subr.mxu0 0.0
        %2843 = vmatpush1.msra.mxu0 0.0
        %2844 = vmatprep.subr.mxu0 0.0
        %2845 = vmatpush1.msra.mxu0 0.0
        %2846 = vmatprep.subr.mxu0 0.0
        %2847 = vmatpush1.msra.mxu0 0.0
        %2848 = vmatprep.subr.mxu0 0.0
        %2849 = vmatpush1.msra.mxu0 0.0
        %2850 = vmatprep.subr.mxu0 0.0
        %2851 = vmatpush1.msra.mxu0 0.0
        %2852 = vmatprep.subr.mxu0 0.0
        %2853 = vmatpush1.msra.mxu0 0.0
        %2854 = vmatprep.subr.mxu0 0.0
        %2855 = vmatpush1.msra.mxu0 0.0
        %2856 = vmatprep.subr.mxu0 0.0
        %2857 = vmatpush1.msra.mxu0 0.0
        %2858 = vmatprep.subr.mxu0 0.0
        %2859 = vmatpush1.msra.mxu0 0.0
        %2860 = vmatprep.subr.mxu0 0.0
        %2861 = vmatpush1.msra.mxu0 0.0
        %2862 = vmatprep.mubr.f32.mxu0 0.0
        %2863 = vmatmul.mubr.f32.gmra.mrb[0].mxu0 %v2794
        %v2864 = vpop.f32.mrb[0].mxu0
        %v2865 = vadd.f32 0.0, %v2864
        %v2866 = vpop.f32.mrb[0].mxu0
        %2867 = vdwg.mxu0
        %v2868 = vmul.f32 %v2865, %v578
        %v2869 = vadd.f32 %v2797, %v2868
        %s2870 = scalar_lea.vmem [#allocation8], 1408
        %v2871 = vld [vmem:[%s2870] sm:$0xff]
        %v2872 = vld [vmem:[%s2870 + $0x8] sm:$0xff]
        %v2873 = vld [vmem:[%s2870 + $0x10] sm:$0xff]
        %v2874 = vld [vmem:[%s2870 + $0x18] sm:$0xff]
        %v2875 = vld [vmem:[%s2870 + $0x20] sm:$0xff]
        %v2876 = vld [vmem:[%s2870 + $0x28] sm:$0xff]
        %v2877 = vld [vmem:[%s2870 + $0x30] sm:$0xff]
        %v2878 = vld [vmem:[%s2870 + $0x38] sm:$0xff]
        %v2879 = vld [vmem:[%s2870 + $0x40] sm:$0xff]
        %v2880 = vld [vmem:[%s2870 + $0x48] sm:$0xff]
        %v2881 = vld [vmem:[%s2870 + $0x50] sm:$0xff]
        %v2882 = vld [vmem:[%s2870 + $0x58] sm:$0xff]
        %v2883 = vld [vmem:[%s2870 + $0x60] sm:$0xff]
        %v2884 = vld [vmem:[%s2870 + $0x68] sm:$0xff]
        %v2885 = vld [vmem:[%s2870 + $0x70] sm:$0xff]
        %v2886 = vld [vmem:[%s2870 + $0x78] sm:$0xff]
        %2887 = vmatprep.subr.mxu0 0.0
        %2888 = vmatpush1.msra.mxu0 %v2871
        %2889 = vmatprep.subr.mxu0 0.0
        %2890 = vmatpush1.msra.mxu0 %v2872
        %2891 = vmatprep.subr.mxu0 0.0
        %2892 = vmatpush1.msra.mxu0 %v2873
        %2893 = vmatprep.subr.mxu0 0.0
        %2894 = vmatpush1.msra.mxu0 %v2874
        %2895 = vmatprep.subr.mxu0 0.0
        %2896 = vmatpush1.msra.mxu0 %v2875
        %2897 = vmatprep.subr.mxu0 0.0
        %2898 = vmatpush1.msra.mxu0 %v2876
        %2899 = vmatprep.subr.mxu0 0.0
        %2900 = vmatpush1.msra.mxu0 %v2877
        %2901 = vmatprep.subr.mxu0 0.0
        %2902 = vmatpush1.msra.mxu0 %v2878
        %2903 = vmatprep.subr.mxu0 0.0
        %2904 = vmatpush1.msra.mxu0 %v2879
        %2905 = vmatprep.subr.mxu0 0.0
        %2906 = vmatpush1.msra.mxu0 %v2880
        %2907 = vmatprep.subr.mxu0 0.0
        %2908 = vmatpush1.msra.mxu0 %v2881
        %2909 = vmatprep.subr.mxu0 0.0
        %2910 = vmatpush1.msra.mxu0 %v2882
        %2911 = vmatprep.subr.mxu0 0.0
        %2912 = vmatpush1.msra.mxu0 %v2883
        %2913 = vmatprep.subr.mxu0 0.0
        %2914 = vmatpush1.msra.mxu0 %v2884
        %2915 = vmatprep.subr.mxu0 0.0
        %2916 = vmatpush1.msra.mxu0 %v2885
        %2917 = vmatprep.subr.mxu0 0.0
        %2918 = vmatpush1.msra.mxu0 %v2886
        %2919 = vmatprep.subr.mxu0 0.0
        %2920 = vmatpush1.msra.mxu0 0.0
        %2921 = vmatprep.subr.mxu0 0.0
        %2922 = vmatpush1.msra.mxu0 0.0
        %2923 = vmatprep.subr.mxu0 0.0
        %2924 = vmatpush1.msra.mxu0 0.0
        %2925 = vmatprep.subr.mxu0 0.0
        %2926 = vmatpush1.msra.mxu0 0.0
        %2927 = vmatprep.subr.mxu0 0.0
        %2928 = vmatpush1.msra.mxu0 0.0
        %2929 = vmatprep.subr.mxu0 0.0
        %2930 = vmatpush1.msra.mxu0 0.0
        %2931 = vmatprep.subr.mxu0 0.0
        %2932 = vmatpush1.msra.mxu0 0.0
        %2933 = vmatprep.subr.mxu0 0.0
        %2934 = vmatpush1.msra.mxu0 0.0
        %2935 = vmatprep.subr.mxu0 0.0
        %2936 = vmatpush1.msra.mxu0 0.0
        %2937 = vmatprep.subr.mxu0 0.0
        %2938 = vmatpush1.msra.mxu0 0.0
        %2939 = vmatprep.subr.mxu0 0.0
        %2940 = vmatpush1.msra.mxu0 0.0
        %2941 = vmatprep.subr.mxu0 0.0
        %2942 = vmatpush1.msra.mxu0 0.0
        %2943 = vmatprep.subr.mxu0 0.0
        %2944 = vmatpush1.msra.mxu0 0.0
        %2945 = vmatprep.subr.mxu0 0.0
        %2946 = vmatpush1.msra.mxu0 0.0
        %2947 = vmatprep.subr.mxu0 0.0
        %2948 = vmatpush1.msra.mxu0 0.0
        %2949 = vmatprep.subr.mxu0 0.0
        %2950 = vmatpush1.msra.mxu0 0.0
        %2951 = vmatprep.mubr.f32.mxu0 0.0
        %2952 = vmatmul.mubr.f32.gmra.mrb[0].mxu0 %v576
        %v2953 = vpop.f32.mrb[0].mxu0
        %v2954 = vadd.f32 0.0, %v2953
        %v2955 = vpop.f32.mrb[0].mxu0
        %2956 = vdwg.mxu0
        %2957 = vmatprep.subr.mxu0 0.0
        %2958 = vmatpush1.xpose.msra.mxu0 %v2869
        %2959 = vmatprep.subr.mxu0 0.0
        %2960 = vmatpush1.xpose.msra.mxu0 0.0
        %2961 = vmatprep.subr.mxu0 0.0
        %2962 = vmatpush1.xpose.msra.mxu0 0.0
        %2963 = vmatprep.subr.mxu0 0.0
        %2964 = vmatpush1.xpose.msra.mxu0 0.0
        %2965 = vmatprep.subr.mxu0 0.0
        %2966 = vmatpush1.xpose.msra.mxu0 0.0
        %2967 = vmatprep.subr.mxu0 0.0
        %2968 = vmatpush1.xpose.msra.mxu0 0.0
        %2969 = vmatprep.subr.mxu0 0.0
        %2970 = vmatpush1.xpose.msra.mxu0 0.0
        %2971 = vmatprep.subr.mxu0 0.0
        %2972 = vmatpush1.xpose.msra.mxu0 0.0
        %2973 = vmatprep.subr.mxu0 0.0
        %2974 = vmatpush1.xpose.msra.mxu0 0.0
        %2975 = vmatprep.subr.mxu0 0.0
        %2976 = vmatpush1.xpose.msra.mxu0 0.0
        %2977 = vmatprep.subr.mxu0 0.0
        %2978 = vmatpush1.xpose.msra.mxu0 0.0
        %2979 = vmatprep.subr.mxu0 0.0
        %2980 = vmatpush1.xpose.msra.mxu0 0.0
        %2981 = vmatprep.subr.mxu0 0.0
        %2982 = vmatpush1.xpose.msra.mxu0 0.0
        %2983 = vmatprep.subr.mxu0 0.0
        %2984 = vmatpush1.xpose.msra.mxu0 0.0
        %2985 = vmatprep.subr.mxu0 0.0
        %2986 = vmatpush1.xpose.msra.mxu0 0.0
        %2987 = vmatprep.subr.mxu0 0.0
        %2988 = vmatpush1.xpose.msra.mxu0 0.0
        %2989 = vmatprep.subr.mxu0 0.0
        %2990 = vmatpush1.xpose.msra.mxu0 0.0
        %2991 = vmatprep.subr.mxu0 0.0
        %2992 = vmatpush1.xpose.msra.mxu0 0.0
        %2993 = vmatprep.subr.mxu0 0.0
        %2994 = vmatpush1.xpose.msra.mxu0 0.0
        %2995 = vmatprep.subr.mxu0 0.0
        %2996 = vmatpush1.xpose.msra.mxu0 0.0
        %2997 = vmatprep.subr.mxu0 0.0
        %2998 = vmatpush1.xpose.msra.mxu0 0.0
        %2999 = vmatprep.subr.mxu0 0.0
        %3000 = vmatpush1.xpose.msra.mxu0 0.0
        %3001 = vmatprep.subr.mxu0 0.0
        %3002 = vmatpush1.xpose.msra.mxu0 0.0
        %3003 = vmatprep.subr.mxu0 0.0
        %3004 = vmatpush1.xpose.msra.mxu0 0.0
        %3005 = vmatprep.subr.mxu0 0.0
        %3006 = vmatpush1.xpose.msra.mxu0 0.0
        %3007 = vmatprep.subr.mxu0 0.0
        %3008 = vmatpush1.xpose.msra.mxu0 0.0
        %3009 = vmatprep.subr.mxu0 0.0
        %3010 = vmatpush1.xpose.msra.mxu0 0.0
        %3011 = vmatprep.subr.mxu0 0.0
        %3012 = vmatpush1.xpose.msra.mxu0 0.0
        %3013 = vmatprep.subr.mxu0 0.0
        %3014 = vmatpush1.xpose.msra.mxu0 0.0
        %3015 = vmatprep.subr.mxu0 0.0
        %3016 = vmatpush1.xpose.msra.mxu0 0.0
        %3017 = vmatprep.subr.mxu0 0.0
        %3018 = vmatpush1.xpose.msra.mxu0 0.0
        %3019 = vmatprep.subr.mxu0 0.0
        %3020 = vmatpush1.xpose.msra.mxu0 0.0
        %3021 = vmatprep.mubr.f32.mxu0 0.0
        %3022 = vmatmul.mubr.f32.gmra.mrb[0].mxu0 %v2709
        %v3023 = vpop.f32.mrb[0].mxu0
        %v3024 = vadd.f32 0.0, %v3023
        %v3025 = vpop.f32.mrb[0].mxu0
        %3026 = vdwg.mxu0
        %v3027 = vmul.f32 %v3024, 0.17677669
        %v3028 = vsel %vm599, %v3027, -1e+30
        %v3029 = vsel %vm1078, %v3028, -inf
        %3030 = vmax.xlane.f32.xlu0 %v3029
        %v3031 = vpop.xlane.xlu0 %3030
        %v3032 = vsub.f32 %v3028, %v3031
        %v3033 = vmul.f32 %v3032, 1.442695
        %v3034 = vpow.pop %v3033
        %v3035 = vsel %vm1078, %v3034, 0.0
        %3036 = vadd.xlane.f32.xlu0 %v3035
        %v3037 = vpop.xlane.xlu0 %3036
        %v3038 = vrcp.pop %v3037
        %v3039 = vmul.f32 %v3034, %v3038
        %v3041 = vsel %vm1078, %v3039, 0
        %3043 = vmatprep.subr.mxu0 0.0
        %3044 = vmatpush1.msra.mxu0 %v2954
        %3045 = vmatprep.subr.mxu0 0.0
        %3046 = vmatpush1.msra.mxu0 0.0
        %3047 = vmatprep.subr.mxu0 0.0
        %3048 = vmatpush1.msra.mxu0 0.0
        %3049 = vmatprep.subr.mxu0 0.0
        %3050 = vmatpush1.msra.mxu0 0.0
        %3051 = vmatprep.subr.mxu0 0.0
        %3052 = vmatpush1.msra.mxu0 0.0
        %3053 = vmatprep.subr.mxu0 0.0
        %3054 = vmatpush1.msra.mxu0 0.0
        %3055 = vmatprep.subr.mxu0 0.0
        %3056 = vmatpush1.msra.mxu0 0.0
        %3057 = vmatprep.subr.mxu0 0.0
        %3058 = vmatpush1.msra.mxu0 0.0
        %3059 = vmatprep.subr.mxu0 0.0
        %3060 = vmatpush1.msra.mxu0 0.0
        %3061 = vmatprep.subr.mxu0 0.0
        %3062 = vmatpush1.msra.mxu0 0.0
        %3063 = vmatprep.subr.mxu0 0.0
        %3064 = vmatpush1.msra.mxu0 0.0
        %3065 = vmatprep.subr.mxu0 0.0
        %3066 = vmatpush1.msra.mxu0 0.0
        %3067 = vmatprep.subr.mxu0 0.0
        %3068 = vmatpush1.msra.mxu0 0.0
        %3069 = vmatprep.subr.mxu0 0.0
        %3070 = vmatpush1.msra.mxu0 0.0
        %3071 = vmatprep.subr.mxu0 0.0
        %3072 = vmatpush1.msra.mxu0 0.0
        %3073 = vmatprep.subr.mxu0 0.0
        %3074 = vmatpush1.msra.mxu0 0.0
        %3075 = vmatprep.subr.mxu0 0.0
        %3076 = vmatpush1.msra.mxu0 0.0
        %3077 = vmatprep.subr.mxu0 0.0
        %3078 = vmatpush1.msra.mxu0 0.0
        %3079 = vmatprep.subr.mxu0 0.0
        %3080 = vmatpush1.msra.mxu0 0.0
        %3081 = vmatprep.subr.mxu0 0.0
        %3082 = vmatpush1.msra.mxu0 0.0
        %3083 = vmatprep.subr.mxu0 0.0
        %3084 = vmatpush1.msra.mxu0 0.0
        %3085 = vmatprep.subr.mxu0 0.0
        %3086 = vmatpush1.msra.mxu0 0.0
        %3087 = vmatprep.subr.mxu0 0.0
        %3088 = vmatpush1.msra.mxu0 0.0
        %3089 = vmatprep.subr.mxu0 0.0
        %3090 = vmatpush1.msra.mxu0 0.0
        %3091 = vmatprep.subr.mxu0 0.0
        %3092 = vmatpush1.msra.mxu0 0.0
        %3093 = vmatprep.subr.mxu0 0.0
        %3094 = vmatpush1.msra.mxu0 0.0
        %3095 = vmatprep.subr.mxu0 0.0
        %3096 = vmatpush1.msra.mxu0 0.0
        %3097 = vmatprep.subr.mxu0 0.0
        %3098 = vmatpush1.msra.mxu0 0.0
        %3099 = vmatprep.subr.mxu0 0.0
        %3100 = vmatpush1.msra.mxu0 0.0
        %3101 = vmatprep.subr.mxu0 0.0
        %3102 = vmatpush1.msra.mxu0 0.0
        %3103 = vmatprep.subr.mxu0 0.0
        %3104 = vmatpush1.msra.mxu0 0.0
        %3105 = vmatprep.subr.mxu0 0.0
        %3106 = vmatpush1.msra.mxu0 0.0
        %3107 = vmatprep.mubr.f32.mxu0 0.0
        %3108 = vmatmul.mubr.f32.gmra.mrb[0].mxu0 %v3041
        %v3109 = vpop.f32.mrb[0].mxu0
        %v3110 = vadd.f32 0.0, %v3109
        %v3111 = vpop.f32.mrb[0].mxu0
        %3112 = vdwg.mxu0
        %s3113 = scalar_lea.vmem [#allocation9], 384
        %v3114 = vld [vmem:[%s3113] sm:$0xff]
        %v3115 = vld [vmem:[%s3113 + $0x8] sm:$0xff]
        %v3116 = vld [vmem:[%s3113 + $0x10] sm:$0xff]
        %v3117 = vld [vmem:[%s3113 + $0x18] sm:$0xff]
        %v3118 = vld [vmem:[%s3113 + $0x20] sm:$0xff]
        %v3119 = vld [vmem:[%s3113 + $0x28] sm:$0xff]
        %v3120 = vld [vmem:[%s3113 + $0x30] sm:$0xff]
        %v3121 = vld [vmem:[%s3113 + $0x38] sm:$0xff]
        %v3122 = vld [vmem:[%s3113 + $0x40] sm:$0xff]
        %v3123 = vld [vmem:[%s3113 + $0x48] sm:$0xff]
        %v3124 = vld [vmem:[%s3113 + $0x50] sm:$0xff]
        %v3125 = vld [vmem:[%s3113 + $0x58] sm:$0xff]
        %v3126 = vld [vmem:[%s3113 + $0x60] sm:$0xff]
        %v3127 = vld [vmem:[%s3113 + $0x68] sm:$0xff]
        %v3128 = vld [vmem:[%s3113 + $0x70] sm:$0xff]
        %v3129 = vld [vmem:[%s3113 + $0x78] sm:$0xff]
        %3130 = vmatprep.subr.mxu0 0.0
        %3131 = vmatpush1.msra.mxu0 %v3114
        %3132 = vmatprep.subr.mxu0 0.0
        %3133 = vmatpush1.msra.mxu0 %v3115
        %3134 = vmatprep.subr.mxu0 0.0
        %3135 = vmatpush1.msra.mxu0 %v3116
        %3136 = vmatprep.subr.mxu0 0.0
        %3137 = vmatpush1.msra.mxu0 %v3117
        %3138 = vmatprep.subr.mxu0 0.0
        %3139 = vmatpush1.msra.mxu0 %v3118
        %3140 = vmatprep.subr.mxu0 0.0
        %3141 = vmatpush1.msra.mxu0 %v3119
        %3142 = vmatprep.subr.mxu0 0.0
        %3143 = vmatpush1.msra.mxu0 %v3120
        %3144 = vmatprep.subr.mxu0 0.0
        %3145 = vmatpush1.msra.mxu0 %v3121
        %3146 = vmatprep.subr.mxu0 0.0
        %3147 = vmatpush1.msra.mxu0 %v3122
        %3148 = vmatprep.subr.mxu0 0.0
        %3149 = vmatpush1.msra.mxu0 %v3123
        %3150 = vmatprep.subr.mxu0 0.0
        %3151 = vmatpush1.msra.mxu0 %v3124
        %3152 = vmatprep.subr.mxu0 0.0
        %3153 = vmatpush1.msra.mxu0 %v3125
        %3154 = vmatprep.subr.mxu0 0.0
        %3155 = vmatpush1.msra.mxu0 %v3126
        %3156 = vmatprep.subr.mxu0 0.0
        %3157 = vmatpush1.msra.mxu0 %v3127
        %3158 = vmatprep.subr.mxu0 0.0
        %3159 = vmatpush1.msra.mxu0 %v3128
        %3160 = vmatprep.subr.mxu0 0.0
        %3161 = vmatpush1.msra.mxu0 %v3129
        %3162 = vmatprep.subr.mxu0 0.0
        %3163 = vmatpush1.msra.mxu0 0.0
        %3164 = vmatprep.subr.mxu0 0.0
        %3165 = vmatpush1.msra.mxu0 0.0
        %3166 = vmatprep.subr.mxu0 0.0
        %3167 = vmatpush1.msra.mxu0 0.0
        %3168 = vmatprep.subr.mxu0 0.0
        %3169 = vmatpush1.msra.mxu0 0.0
        %3170 = vmatprep.subr.mxu0 0.0
        %3171 = vmatpush1.msra.mxu0 0.0
        %3172 = vmatprep.subr.mxu0 0.0
        %3173 = vmatpush1.msra.mxu0 0.0
        %3174 = vmatprep.subr.mxu0 0.0
        %3175 = vmatpush1.msra.mxu0 0.0
        %3176 = vmatprep.subr.mxu0 0.0
        %3177 = vmatpush1.msra.mxu0 0.0
        %3178 = vmatprep.subr.mxu0 0.0
        %3179 = vmatpush1.msra.mxu0 0.0
        %3180 = vmatprep.subr.mxu0 0.0
        %3181 = vmatpush1.msra.mxu0 0.0
        %3182 = vmatprep.subr.mxu0 0.0
        %3183 = vmatpush1.msra.mxu0 0.0
        %3184 = vmatprep.subr.mxu0 0.0
        %3185 = vmatpush1.msra.mxu0 0.0
        %3186 = vmatprep.subr.mxu0 0.0
        %3187 = vmatpush1.msra.mxu0 0.0
        %3188 = vmatprep.subr.mxu0 0.0
        %3189 = vmatpush1.msra.mxu0 0.0
        %3190 = vmatprep.subr.mxu0 0.0
        %3191 = vmatpush1.msra.mxu0 0.0
        %3192 = vmatprep.subr.mxu0 0.0
        %3193 = vmatpush1.msra.mxu0 0.0
        %3194 = vmatprep.mubr.f32.mxu0 0.0
        %3195 = vmatmul.mubr.f32.gmra.mrb[0].mxu0 %v3110
        %v3196 = vpop.f32.mrb[0].mxu0
        %v3197 = vadd.f32 0.0, %v3196
        %v3198 = vpop.f32.mrb[0].mxu0
        %3199 = vdwg.mxu0
        %v3200 = vadd.f32 %v2549, %v3197
        %v3201 = vld [vmem:[#allocation11] sm:$0x1]
        %v3203 = vlaneseq
        %v3204 = vshrl.u32 %v3203, 7
        %v3205 = vsub.s32 0, %v3204
        %v3206 = vrot.slane %v3201, %v3205
        %v3208 = vadd.f32 %v3200, %v3206
        %v3209 = vsel %vm559, 1, 0
        %vm3210 = vcmp.eq.s32.totalorder %v3209, 1
        %v3211 = vsel %vm3210, %v3208, 0.0
        %v3212 = vadd.f32 %v576, %v3211
        %v3213 = vmul.f32 %v3212, %v3212
        %3214 = vadd.xlane.f32.xlu0 %v3213
        %v3215 = vpop.xlane.xlu0 %3214
        %v3216 = vrot.slane %v3215, 4
        %v3217 = vadd.f32 %v3215, %v3216
        %v3218 = vrot.slane %v3217, 2
        %v3219 = vadd.f32 %v3217, %v3218
        %v3220 = vrot.slane %v3219, 1
        %v3221 = vadd.f32 %v3219, %v3220
        %s3222 = vtos %v3221
        %s3223 = smul.f32 %s3222, 0.00390625
        %v3224 = vstv %s3223
        %v3225 = vrsqrt.pop %v3224
        %s3226 = vtos %v3225
        %v3227 = vstv %s3226
        %v3228 = vmul.f32 %v3212, %v3227
        %v3229 = vmul.f32 %v556, %v3228
        %v3230 = vld [vmem:[#allocation14] sm:$0xff]
        %v3231 = vld [vmem:[#allocation14 + $0x8] sm:$0xff]
        %v3232 = vld [vmem:[#allocation14 + $0x10] sm:$0xff]
        %v3233 = vld [vmem:[#allocation14 + $0x18] sm:$0xff]
        %v3234 = vld [vmem:[#allocation14 + $0x20] sm:$0xff]
        %v3235 = vld [vmem:[#allocation14 + $0x28] sm:$0xff]
        %v3236 = vld [vmem:[#allocation14 + $0x30] sm:$0xff]
        %v3237 = vld [vmem:[#allocation14 + $0x38] sm:$0xff]
        %v3238 = vld [vmem:[#allocation14 + $0x40] sm:$0xff]
        %v3239 = vld [vmem:[#allocation14 + $0x48] sm:$0xff]
        %v3240 = vld [vmem:[#allocation14 + $0x50] sm:$0xff]
        %v3241 = vld [vmem:[#allocation14 + $0x58] sm:$0xff]
        %v3242 = vld [vmem:[#allocation14 + $0x60] sm:$0xff]
        %v3243 = vld [vmem:[#allocation14 + $0x68] sm:$0xff]
        %v3244 = vld [vmem:[#allocation14 + $0x70] sm:$0xff]
        %v3245 = vld [vmem:[#allocation14 + $0x78] sm:$0xff]
        %v3246 = vld [vmem:[%s9] sm:$0x1]
        %v3248 = vlaneseq
        %v3249 = vshrl.u32 %v3248, 7
        %v3250 = vsub.s32 0, %v3249
        %v3251 = vrot.slane %v3246, %v3250
        %3253 = vmatprep.subr.mxu0 0.0
        %3254 = vmatpush1.msra.mxu0 %v3230
        %3255 = vmatprep.subr.mxu0 0.0
        %3256 = vmatpush1.msra.mxu0 %v3231
        %3257 = vmatprep.subr.mxu0 0.0
        %3258 = vmatpush1.msra.mxu0 %v3232
        %3259 = vmatprep.subr.mxu0 0.0
        %3260 = vmatpush1.msra.mxu0 %v3233
        %3261 = vmatprep.subr.mxu0 0.0
        %3262 = vmatpush1.msra.mxu0 %v3234
        %3263 = vmatprep.subr.mxu0 0.0
        %3264 = vmatpush1.msra.mxu0 %v3235
        %3265 = vmatprep.subr.mxu0 0.0
        %3266 = vmatpush1.msra.mxu0 %v3236
        %3267 = vmatprep.subr.mxu0 0.0
        %3268 = vmatpush1.msra.mxu0 %v3237
        %3269 = vmatprep.subr.mxu0 0.0
        %3270 = vmatpush1.msra.mxu0 %v3238
        %3271 = vmatprep.subr.mxu0 0.0
        %3272 = vmatpush1.msra.mxu0 %v3239
        %3273 = vmatprep.subr.mxu0 0.0
        %3274 = vmatpush1.msra.mxu0 %v3240
        %3275 = vmatprep.subr.mxu0 0.0
        %3276 = vmatpush1.msra.mxu0 %v3241
        %3277 = vmatprep.subr.mxu0 0.0
        %3278 = vmatpush1.msra.mxu0 %v3242
        %3279 = vmatprep.subr.mxu0 0.0
        %3280 = vmatpush1.msra.mxu0 %v3243
        %3281 = vmatprep.subr.mxu0 0.0
        %3282 = vmatpush1.msra.mxu0 %v3244
        %3283 = vmatprep.subr.mxu0 0.0
        %3284 = vmatpush1.msra.mxu0 %v3245
        %3285 = vmatprep.subr.mxu0 0.0
        %3286 = vmatpush1.msra.mxu0 0.0
        %3287 = vmatprep.subr.mxu0 0.0
        %3288 = vmatpush1.msra.mxu0 0.0
        %3289 = vmatprep.subr.mxu0 0.0
        %3290 = vmatpush1.msra.mxu0 0.0
        %3291 = vmatprep.subr.mxu0 0.0
        %3292 = vmatpush1.msra.mxu0 0.0
        %3293 = vmatprep.subr.mxu0 0.0
        %3294 = vmatpush1.msra.mxu0 0.0
        %3295 = vmatprep.subr.mxu0 0.0
        %3296 = vmatpush1.msra.mxu0 0.0
        %3297 = vmatprep.subr.mxu0 0.0
        %3298 = vmatpush1.msra.mxu0 0.0
        %3299 = vmatprep.subr.mxu0 0.0
        %3300 = vmatpush1.msra.mxu0 0.0
        %3301 = vmatprep.subr.mxu0 0.0
        %3302 = vmatpush1.msra.mxu0 0.0
        %3303 = vmatprep.subr.mxu0 0.0
        %3304 = vmatpush1.msra.mxu0 0.0
        %3305 = vmatprep.subr.mxu0 0.0
        %3306 = vmatpush1.msra.mxu0 0.0
        %3307 = vmatprep.subr.mxu0 0.0
        %3308 = vmatpush1.msra.mxu0 0.0
        %3309 = vmatprep.subr.mxu0 0.0
        %3310 = vmatpush1.msra.mxu0 0.0
        %3311 = vmatprep.subr.mxu0 0.0
        %3312 = vmatpush1.msra.mxu0 0.0
        %3313 = vmatprep.subr.mxu0 0.0
        %3314 = vmatpush1.msra.mxu0 0.0
        %3315 = vmatprep.subr.mxu0 0.0
        %3316 = vmatpush1.msra.mxu0 0.0
        %3317 = vmatprep.mubr.f32.mxu0 0.0
        %3318 = vmatmul.mubr.f32.gmra.mrb[0].mxu0 %v3229
        %v3319 = vpop.f32.mrb[0].mxu0
        %v3320 = vadd.f32 %v3251, %v3319
        %v3321 = vpop.f32.mrb[0].mxu0
        %3322 = vdwg.mxu0
        %v3323 = vsel %vm3210, %v3320, 0.0
        %v3324 = vld [vmem:[#allocation15] sm:$0xff]
        %v3325 = vld [vmem:[#allocation15 + $0x8] sm:$0xff]
        %v3326 = vld [vmem:[#allocation15 + $0x10] sm:$0xff]
        %v3327 = vld [vmem:[#allocation15 + $0x18] sm:$0xff]
        %v3328 = vld [vmem:[#allocation15 + $0x20] sm:$0xff]
        %v3329 = vld [vmem:[#allocation15 + $0x28] sm:$0xff]
        %v3330 = vld [vmem:[#allocation15 + $0x30] sm:$0xff]
        %v3331 = vld [vmem:[#allocation15 + $0x38] sm:$0xff]
        %v3332 = vld [vmem:[#allocation15 + $0x40] sm:$0xff]
        %v3333 = vld [vmem:[#allocation15 + $0x48] sm:$0xff]
        %v3334 = vld [vmem:[#allocation15 + $0x50] sm:$0xff]
        %v3335 = vld [vmem:[#allocation15 + $0x58] sm:$0xff]
        %v3336 = vld [vmem:[#allocation15 + $0x60] sm:$0xff]
        %v3337 = vld [vmem:[#allocation15 + $0x68] sm:$0xff]
        %v3338 = vld [vmem:[#allocation15 + $0x70] sm:$0xff]
        %v3339 = vld [vmem:[#allocation15 + $0x78] sm:$0xff]
        %v3340 = vld [vmem:[#allocation15 + $0x80] sm:$0xff]
        %v3341 = vld [vmem:[#allocation15 + $0x88] sm:$0xff]
        %v3342 = vld [vmem:[#allocation15 + $0x90] sm:$0xff]
        %v3343 = vld [vmem:[#allocation15 + $0x98] sm:$0xff]
        %v3344 = vld [vmem:[#allocation15 + $0xa0] sm:$0xff]
        %v3345 = vld [vmem:[#allocation15 + $0xa8] sm:$0xff]
        %v3346 = vld [vmem:[#allocation15 + $0xb0] sm:$0xff]
        %v3347 = vld [vmem:[#allocation15 + $0xb8] sm:$0xff]
        %v3348 = vld [vmem:[#allocation15 + $0xc0] sm:$0xff]
        %v3349 = vld [vmem:[#allocation15 + $0xc8] sm:$0xff]
        %v3350 = vld [vmem:[#allocation15 + $0xd0] sm:$0xff]
        %v3351 = vld [vmem:[#allocation15 + $0xd8] sm:$0xff]
        %v3352 = vld [vmem:[#allocation15 + $0xe0] sm:$0xff]
        %v3353 = vld [vmem:[#allocation15 + $0xe8] sm:$0xff]
        %v3354 = vld [vmem:[#allocation15 + $0xf0] sm:$0xff]
        %v3355 = vld [vmem:[#allocation15 + $0xf8] sm:$0xff]
        %v3356 = vld [vmem:[%s11] sm:$0x3]
        %v3358 = vlaneseq
        %v3359 = vshrl.u32 %v3358, 7
        %v3360 = vsub.s32 0, %v3359
        %v3361 = vrot.slane %v3356, %v3360
        %v3362 = vlaneseq
        %v3363 = vshrl.u32 %v3362, 7
        %v3364 = vsub.s32 1, %v3363
        %v3365 = vrot.slane %v3356, %v3364
        %3368 = vmatprep.subr.mxu0 %v3325
        %3369 = vmatpush1.msra.mxu0 %v3324
        %3370 = vmatprep.subr.mxu0 %v3327
        %3371 = vmatpush1.msra.mxu0 %v3326
        %3372 = vmatprep.subr.mxu0 %v3329
        %3373 = vmatpush1.msra.mxu0 %v3328
        %3374 = vmatprep.subr.mxu0 %v3331
        %3375 = vmatpush1.msra.mxu0 %v3330
        %3376 = vmatprep.subr.mxu0 %v3333
        %3377 = vmatpush1.msra.mxu0 %v3332
        %3378 = vmatprep.subr.mxu0 %v3335
        %3379 = vmatpush1.msra.mxu0 %v3334
        %3380 = vmatprep.subr.mxu0 %v3337
        %3381 = vmatpush1.msra.mxu0 %v3336
        %3382 = vmatprep.subr.mxu0 %v3339
        %3383 = vmatpush1.msra.mxu0 %v3338
        %3384 = vmatprep.subr.mxu0 %v3341
        %3385 = vmatpush1.msra.mxu0 %v3340
        %3386 = vmatprep.subr.mxu0 %v3343
        %3387 = vmatpush1.msra.mxu0 %v3342
        %3388 = vmatprep.subr.mxu0 %v3345
        %3389 = vmatpush1.msra.mxu0 %v3344
        %3390 = vmatprep.subr.mxu0 %v3347
        %3391 = vmatpush1.msra.mxu0 %v3346
        %3392 = vmatprep.subr.mxu0 %v3349
        %3393 = vmatpush1.msra.mxu0 %v3348
        %3394 = vmatprep.subr.mxu0 %v3351
        %3395 = vmatpush1.msra.mxu0 %v3350
        %3396 = vmatprep.subr.mxu0 %v3353
        %3397 = vmatpush1.msra.mxu0 %v3352
        %3398 = vmatprep.subr.mxu0 %v3355
        %3399 = vmatpush1.msra.mxu0 %v3354
        %3400 = vmatprep.subr.mxu0 0.0
        %3401 = vmatpush1.msra.mxu0 0.0
        %3402 = vmatprep.subr.mxu0 0.0
        %3403 = vmatpush1.msra.mxu0 0.0
        %3404 = vmatprep.subr.mxu0 0.0
        %3405 = vmatpush1.msra.mxu0 0.0
        %3406 = vmatprep.subr.mxu0 0.0
        %3407 = vmatpush1.msra.mxu0 0.0
        %3408 = vmatprep.subr.mxu0 0.0
        %3409 = vmatpush1.msra.mxu0 0.0
        %3410 = vmatprep.subr.mxu0 0.0
        %3411 = vmatpush1.msra.mxu0 0.0
        %3412 = vmatprep.subr.mxu0 0.0
        %3413 = vmatpush1.msra.mxu0 0.0
        %3414 = vmatprep.subr.mxu0 0.0
        %3415 = vmatpush1.msra.mxu0 0.0
        %3416 = vmatprep.subr.mxu0 0.0
        %3417 = vmatpush1.msra.mxu0 0.0
        %3418 = vmatprep.subr.mxu0 0.0
        %3419 = vmatpush1.msra.mxu0 0.0
        %3420 = vmatprep.subr.mxu0 0.0
        %3421 = vmatpush1.msra.mxu0 0.0
        %3422 = vmatprep.subr.mxu0 0.0
        %3423 = vmatpush1.msra.mxu0 0.0
        %3424 = vmatprep.subr.mxu0 0.0
        %3425 = vmatpush1.msra.mxu0 0.0
        %3426 = vmatprep.subr.mxu0 0.0
        %3427 = vmatpush1.msra.mxu0 0.0
        %3428 = vmatprep.subr.mxu0 0.0
        %3429 = vmatpush1.msra.mxu0 0.0
        %3430 = vmatprep.subr.mxu0 0.0
        %3431 = vmatpush1.msra.mxu0 0.0
        %3432 = vmatprep.mubr.f32.mxu0 0.0
        %3433 = vmatmul.mubr.f32.gmra.mrb[0].mxu0 %v3323
        %v3434 = vpop.f32.mrb[0].mxu0
        %v3435 = vadd.f32 %v3361, %v3434
        %v3436 = vpop.f32.mrb[0].mxu0
        %v3437 = vadd.f32 %v3365, %v3436
        %3438 = vdwg.mxu0
        %s3439 = sld [smem:[#allocation2]]
        %v3440 = vstv %s3439
        %v3441 = vmul.f32 %v3440, %v3435
        %v3442 = vxor.u32 %v3441, 2147483648
        %v3443 = vmul.f32 %v3442, 1.442695
        %v3444 = vpow.pop %v3443
        %v3445 = vadd.f32 %v3444, 1.0
        %v3446 = vrcp.pop %v3445
        %v3447 = vmul.f32 1.0, %v3446
        %v3448 = vmul.f32 %v3435, %v3447
        %v3449 = vmul.f32 %v3448, %v3437
        %v3450 = vsel %vm3210, %v3449, 0.0
        %v3451 = vadd.f32 %v3212, %v3450
        %3452 = vst [vmem:[%s554] sm:$0xff] %v3451
        %s3453 = sand.u32 %s321, 1
        %s3454 = scalar_lea.sflag [#allocation5], %s3453
        %s3455 = sand.u32 %s321, 1
        %s3456 = smul.addr %s3455, 8
        %s3457 = scalar_lea.vmem [#allocation17], %s3456
        // Predicated region
        $region105: #{tpu_custom_call.1} parent=71 // pred_check
          %p3458 = pneg %p331
        $region106: #{tpu_custom_call.1} parent=71 // pred_check_branch
          %3460 = sbr.rel (%p3458) target = $region108
        $region107: #{tpu_custom_call.1} parent=71 // pred_region
          %s3462 = ssub.s32 128, 128
          %3463 = vsyncadd %s3454, %s3462
          %s3464 = smul.addr %s35, 128
          %s3465 = scalar_lea.hbm %s13, %s3464
          %s3467 = sshll.u32 %s3457, 4
          %s3468 = int_to_ptr.vmem [resolvable:$true] %s3467
          %3470 = dma.vmem_to_hbm [thread:$0]  %s3468, 128, %s3465, %s3454
        $region108: #{tpu_custom_call.1} parent=71 // pred_fallthru
          _
      $region72: #{tpu_custom_call.1} parent=5 // pred_fallthru
        _
      %p3471 = scmp.le.s32.totalorder 2, %s30
      // Predicated region
      $region109: #{tpu_custom_call.1} parent=5 // pred_check
        %p3472 = pneg %p3471
      $region110: #{tpu_custom_call.1} parent=5 // pred_check_branch
        %3474 = sbr.rel (%p3472) target = $region112
      $region111: #{tpu_custom_call.1} parent=5 // pred_region
        %s3475 = ssub.s32 %s30, 2
        // Predicated region
        $region113: #{tpu_custom_call.1} parent=111 // pred_check
          %p3476 = pneg %p337
        $region114: #{tpu_custom_call.1} parent=111 // pred_check_branch
          %3478 = sbr.rel (%p3476) target = $region116
        $region115: #{tpu_custom_call.1} parent=111 // pred_region
          %s3479 = sand.u32 %s322, 1
          %s3480 = scalar_lea.sflag [#allocation5], %s3479
          %s3481 = sand.u32 %s322, 1
          %s3482 = smul.addr %s3481, 8
          %s3483 = scalar_lea.vmem [#allocation17], %s3482
          %3484 = dma.done %s3480, 128
        $region116: #{tpu_custom_call.1} parent=111 // pred_fallthru
          _
      $region112: #{tpu_custom_call.1} parent=5 // pred_fallthru
        _
    $region6: #{tpu_custom_call.1} parent=1 // loop_footer
      %s34 = sadd.s32 1, %s30
    $region7: #{tpu_custom_call.1} parent=1 // loop_footer_branch
      %29 = sbr.rel target = $region3
    $region8: #{tpu_custom_call.1} parent=1 // loop_exit
      _
    %3485 = vsyncpa [#allocation4], 1
    %s3486 = scalar_lea.sflag [#allocation4], 1
    %3487 = vsyncpa %s3486, 1
    %3488 = vsyncpa [#allocation7], 1
    %3489 = vsyncpa [#allocation10], 1
    %3490 = vsyncpa [#allocation13], 1
    %3491 = vsyncpa [#allocation16], 1
    %3492 = vsyncpa [#allocation5], 1
    %s3493 = scalar_lea.sflag [#allocation5], 1
    %3494 = vsyncpa %s3493, 1

</llo_original>
